<compile_context>
chip_gen: v7x
topology: tpu7x:2x2x1
jax: 0.10.0
libtpu: 0.0.40
codegen_flags: <defaults>
</compile_context>

<pallas_src>
import jax
import jax.numpy as jnp
from jax.experimental import pallas as pl
from jax.experimental.pallas import tpu as pltpu

NEG_SLOPE = 0.01                       # nn.LeakyReLU default
L_IN, C_IN = 40, 11
C1, C2 = 64, 256
L1, L2 = L_IN // 2, L_IN // 4          # 20, 10
FC_IN, FC_H = C2 * L2, 128             # 2560, 128


def _leaky(x):
    return jnp.where(x > 0, x, NEG_SLOPE * x)


def discriminator_kernel(cols1_ref, w1_ref, b1_ref, w2_ref, b2_ref,
                         wf1_ref, bf1_ref, wf2_ref, bf2_ref, out_ref):
    f32, bf16 = jnp.float32, jnp.bfloat16
    TB = cols1_ref.shape[1]

    # ---------- cnn1: Conv1d(11->64, k3, p1) -> LeakyReLU -> MaxPool1d(2) ----------
    # im2col hoisted to the wrapper; conv1 is one (40*TB, 33) @ (33, 64) MXU matmul.
    cols1 = cols1_ref[...]                                              # (40, TB, 33) bf16
    y1 = jnp.dot(cols1.reshape(L_IN * TB, 3 * C_IN), w1_ref[...],
                 preferred_element_type=f32).reshape(L_IN, TB, C1)      # (40, TB, 64) f32
    # MaxPool commutes with bias + LeakyReLU (both monotone) -> pool first (exact).
    y1 = y1.reshape(L1, 2, TB, C1)
    y1 = jnp.maximum(y1[:, 0], y1[:, 1])                                # (20, TB, 64) f32
    x1 = _leaky(y1 + b1_ref[...]).astype(bf16)                          # (20, TB, 64) bf16

    # ---------- cnn2: Conv1d(64->256, k3, p1) -> LeakyReLU -> MaxPool1d(2) ----------
    # L is the leading (slab) axis: the +-1 shifts are slab re-indexing (no lane/sublane
    # relayout) and the conv is 3 accumulating K=64 matmuls (no 192-lane im2col concat).
    zero = jnp.zeros((1, TB, C1), bf16)
    xm1 = jnp.concatenate([zero, x1[:-1]], axis=0)                      # x1[l-1]
    xp1 = jnp.concatenate([x1[1:], zero], axis=0)                       # x1[l+1]

    def cdot(a, w):                                                     # (20,TB,64)@(64,256)
        return jnp.dot(a.reshape(L1 * TB, C1), w,
                       preferred_element_type=f32).reshape(L1, TB, C2)

    y2 = cdot(xm1, w2_ref[0]) + cdot(x1, w2_ref[1]) + cdot(xp1, w2_ref[2])   # (20,TB,256) f32
    y2 = y2.reshape(L2, 2, TB, C2)
    y2 = jnp.maximum(y2[:, 0], y2[:, 1])                                # (10, TB, 256) f32
    y2 = _leaky(y2 + b2_ref[...]).astype(bf16)                          # (10, TB, 256) bf16

    # ---------- fc1: Linear(2560 -> 128) without the sublane->lane flatten ----------
    # Contract (l, c) directly against wf1 laid out as (10, 256, 128): ten accumulating
    # (TB, 256) @ (256, 128) matmuls on leading-dim slices of y2 (no relayout).
    acc = jnp.zeros((TB, FC_H), f32)
    for l in range(L2):
        acc = acc + jnp.dot(y2[l], wf1_ref[l], preferred_element_type=f32)
    h = _leaky(acc + bf1_ref[...])                                      # (TB, 128) f32

    # Dropout(0.5): identity (eval / inference semantics).
    # ---------- fc2: Linear(128 -> 1) + Sigmoid as a VPU mul + lane reduce ----------
    logits = jnp.sum(h * wf2_ref[...], axis=-1, keepdims=True) + bf2_ref[...]   # (TB, 1)
    out_ref[...] = jax.nn.sigmoid(logits)


def prepare_params(params):
    """One-time weight re-layout (hoisted out of the per-call path)."""
    bf = jnp.bfloat16
    f32 = jnp.float32
    # Conv1 weights: torch (Co, Ci, k) -> im2col layout (3*Ci, Co), row = k*Ci + c.
    w1 = jnp.transpose(params["w1"], (2, 1, 0)).reshape(3 * C_IN, C1).astype(bf)
    b1 = params["b1"].reshape(1, 1, C1).astype(f32)
    # Conv2 weights: torch (Co, Ci, k) -> per-tap (3, Ci, Co) for 3 accumulating matmuls.
    w2 = jnp.transpose(params["w2"], (2, 1, 0)).astype(bf)              # (3, 64, 256)
    b2 = params["b2"].reshape(1, 1, C2).astype(f32)
    # FC1: torch (128, 2560) with in-feature c*10+l  ->  (10, 256, 128) indexed [l, c, h].
    wf1 = params["wf1"].reshape(FC_H, C2, L2).transpose(2, 1, 0).astype(bf)
    bf1 = params["bf1"].reshape(1, FC_H).astype(f32)
    # FC2 as an f32 row for the VPU reduction (no MXU pass).
    wf2 = params["wf2"].reshape(1, FC_H).astype(f32)
    bf2 = params["bf2"].reshape(1, 1).astype(f32)
    return dict(w1=w1, b1=b1, w2=w2, b2=b2, wf1=wf1, bf1=bf1, wf2=wf2, bf2=bf2)


def _round8(n):
    return -(-n // 8) * 8


def _pick_tb(B, tb):
    """Batch tile: multiple of 8, <= 256, and >= 2 grid tiles when the batch allows
    (v7x has 2 TensorCores sharing the 'parallel' grid axis)."""
    t = min(int(tb), 256, _round8(B))
    t = max(8, _round8(t))
    if B > 8 and -(-B // t) < 2:
        t = max(8, _round8(-(-B // 2)))
    return t


def discriminator_forward(x_ncl, prep, *, tb=128):
    """x_ncl: (B, 11, 40) float32 (PyTorch NCL). prep: output of prepare_params."""
    B = x_ncl.shape[0]

    # Hoisted conv1 im2col (plain XLA), sequence-leading bf16 layout: (40, B, 3*11).
    x_lbc = jnp.transpose(x_ncl, (2, 0, 1)).astype(jnp.bfloat16)        # (40, B, 11)
    zero = jnp.zeros((1, B, C_IN), jnp.bfloat16)
    cols1 = jnp.concatenate(
        [jnp.concatenate([zero, x_lbc[:-1]], axis=0),                   # x[l-1]
         x_lbc,                                                         # x[l]
         jnp.concatenate([x_lbc[1:], zero], axis=0)],                   # x[l+1]
        axis=-1)                                                        # (40, B, 33)

    TB = _pick_tb(B, tb)
    B_pad = -(-B // TB) * TB
    if B_pad != B:
        cols1 = jnp.pad(cols1, ((0, 0), (0, B_pad - B), (0, 0)))

    out = pl.pallas_call(
        discriminator_kernel,
        out_shape=jax.ShapeDtypeStruct((B_pad, 1), jnp.float32),
        grid=(B_pad // TB,),
        in_specs=[
            pl.BlockSpec((L_IN, TB, 3 * C_IN), lambda i: (0, i, 0)),    # cols1: batch-tiled
            pl.BlockSpec((3 * C_IN, C1),       lambda i: (0, 0)),       # weights: resident
            pl.BlockSpec((1, 1, C1),           lambda i: (0, 0, 0)),
            pl.BlockSpec((3, C1, C2),          lambda i: (0, 0, 0)),
            pl.BlockSpec((1, 1, C2),           lambda i: (0, 0, 0)),
            pl.BlockSpec((L2, C2, FC_H),       lambda i: (0, 0, 0)),
            pl.BlockSpec((1, FC_H),            lambda i: (0, 0)),
            pl.BlockSpec((1, FC_H),            lambda i: (0, 0)),
            pl.BlockSpec((1, 1),               lambda i: (0, 0)),
        ],
        out_specs=pl.BlockSpec((TB, 1), lambda i: (i, 0)),
        compiler_params=pltpu.CompilerParams(
            dimension_semantics=("parallel",),      # v7x: 2 TCs split batch tiles
            vmem_limit_bytes=32 * 1024 * 1024,
        ),
    )(cols1, prep["w1"], prep["b1"], prep["w2"], prep["b2"],
      prep["wf1"], prep["bf1"], prep["wf2"], prep["bf2"])
    return out[:B]


def discriminator_reference(x_ncl, params):
    """Pure-JAX f32 reference mirroring the PyTorch module (eval mode)."""
    x = jnp.transpose(x_ncl, (0, 2, 1)).astype(jnp.float32)             # (B, 40, 11)

    def conv_block(x, w, b):
        B, L, _ = x.shape
        Co = w.shape[0]
        wk = jnp.transpose(w, (2, 1, 0))                                # (3, Ci, Co)
        xp = jnp.pad(x, ((0, 0), (1, 1), (0, 0)))
        y = xp[:, :-2] @ wk[0] + xp[:, 1:-1] @ wk[1] + xp[:, 2:] @ wk[2]
        y = _leaky(y + b.reshape(1, 1, Co))
        return jnp.max(y.reshape(B, L // 2, 2, Co), axis=2)

    y = conv_block(x, params["w1"], params["b1"])                       # (B, 20, 64)
    y = conv_block(y, params["w2"], params["b2"])                       # (B, 10, 256)
    feat = jnp.transpose(y, (0, 2, 1)).reshape(y.shape[0], FC_IN)       # torch c*10+l flatten
    h = _leaky(feat @ params["wf1"].T + params["bf1"])
    logits = h @ params["wf2"].T + params["bf2"]
    return jax.nn.sigmoid(logits)


if __name__ == "__main__":
    key = jax.random.PRNGKey(0)
    ks = jax.random.split(key, 10)
    params = {
        "w1":  jax.random.normal(ks[0], (64, 11, 3),  jnp.float32) * 0.10,
        "b1":  jax.random.normal(ks[1], (64,),        jnp.float32) * 0.10,
        "w2":  jax.random.normal(ks[2], (256, 64, 3), jnp.float32) * 0.05,
        "b2":  jax.random.normal(ks[3], (256,),       jnp.float32) * 0.05,
        "wf1": jax.random.normal(ks[4], (128, 2560),  jnp.float32) * 0.02,
        "bf1": jax.random.normal(ks[5], (128,),       jnp.float32) * 0.02,
        "wf2": jax.random.normal(ks[6], (1, 128),     jnp.float32) * 0.05,
        "bf2": jax.random.normal(ks[7], (1,),         jnp.float32) * 0.05,
    }
    prep = prepare_params(params)           # one-time weight re-layout

    # Input: batch=2, channels=11, seq_len=40 (only length compatible with view(-1, 256*10)).
    x = jax.random.normal(ks[8], (2, 11, 40), jnp.float32)
    out = jax.block_until_ready(discriminator_forward(x, prep))
    ref = discriminator_reference(x, params)
    assert out.shape == (2, 1)
    assert bool(jnp.all((out >= 0.0) & (out <= 1.0)))
    assert bool(jnp.all(jnp.abs(out - ref) < 5e-2)), (out, ref)         # bf16-matmul tolerance

    # Second check: batch that exercises >=2 grid tiles plus batch padding.
    x2 = jax.random.normal(ks[9], (20, 11, 40), jnp.float32)
    out2 = jax.block_until_ready(discriminator_forward(x2, prep))
    ref2 = discriminator_reference(x2, params)
    assert out2.shape == (20, 1)
    assert bool(jnp.all(jnp.abs(out2 - ref2) < 5e-2)), (out2, ref2)

    print("KERNEL_OK")
</pallas_src>

<mosaic_0001>
module attributes {stable_mosaic.version = 11 : i64} {
  func.func @discriminator_kernel(%arg0: i32, %arg1: memref<40x8x33xbf16, #tpu.memory_space<vmem>>, %arg2: memref<33x64xbf16, #tpu.memory_space<vmem>>, %arg3: memref<1x1x64xf32, #tpu.memory_space<vmem>>, %arg4: memref<3x64x256xbf16, #tpu.memory_space<vmem>>, %arg5: memref<1x1x256xf32, #tpu.memory_space<vmem>>, %arg6: memref<10x256x128xbf16, #tpu.memory_space<vmem>>, %arg7: memref<1x128xf32, #tpu.memory_space<vmem>>, %arg8: memref<1x128xf32, #tpu.memory_space<vmem>>, %arg9: memref<1x1xf32, #tpu.memory_space<vmem>>, %arg10: memref<8x1xf32, #tpu.memory_space<vmem>>) attributes {dimension_semantics = [#tpu.dimension_semantics<parallel>], iteration_bounds = array<i64: 1>, scalar_prefetch = 0 : i64, scratch_operands = 0 : i64, tpu.core_type = #tpu.core_type<tc>, window_params = [{transform_indices = @transform_0, window_bounds = array<i64: 40, 8, 33>}, {pipeline_mode = #tpu.pipeline_mode<synchronous>, transform_indices = @transform_1, window_bounds = array<i64: 33, 64>}, {pipeline_mode = #tpu.pipeline_mode<synchronous>, transform_indices = @transform_2, window_bounds = array<i64: 1, 1, 64>}, {pipeline_mode = #tpu.pipeline_mode<synchronous>, transform_indices = @transform_3, window_bounds = array<i64: 3, 64, 256>}, {pipeline_mode = #tpu.pipeline_mode<synchronous>, transform_indices = @transform_4, window_bounds = array<i64: 1, 1, 256>}, {pipeline_mode = #tpu.pipeline_mode<synchronous>, transform_indices = @transform_5, window_bounds = array<i64: 10, 256, 128>}, {pipeline_mode = #tpu.pipeline_mode<synchronous>, transform_indices = @transform_6, window_bounds = array<i64: 1, 128>}, {pipeline_mode = #tpu.pipeline_mode<synchronous>, transform_indices = @transform_7, window_bounds = array<i64: 1, 128>}, {pipeline_mode = #tpu.pipeline_mode<synchronous>, transform_indices = @transform_8, window_bounds = array<i64: 1, 1>}, {transform_indices = @transform_9, window_bounds = array<i64: 8, 1>}]} {
    %c0 = arith.constant 0 : index
    %c0_0 = arith.constant 0 : index
    %c0_1 = arith.constant 0 : index
    %0 = vector.load %arg1[%c0, %c0_0, %c0_1] : memref<40x8x33xbf16, #tpu.memory_space<vmem>>, vector<40x8x33xbf16>
    %1 = vector.shape_cast %0 : vector<40x8x33xbf16> to vector<320x33xbf16>
    %c0_2 = arith.constant 0 : index
    %c0_3 = arith.constant 0 : index
    %2 = vector.load %arg2[%c0_2, %c0_3] : memref<33x64xbf16, #tpu.memory_space<vmem>>, vector<33x64xbf16>
    %cst = arith.constant dense<0.000000e+00> : vector<320x64xf32>
    %3 = tpu.matmul %1, %2, %cst {dimension_numbers = #tpu.dot_dimension_numbers<[1], [0], [0], [1], [0, 0, 1, 1], [], []>} : vector<320x33xbf16>, vector<33x64xbf16>, vector<320x64xf32> -> vector<320x64xf32>
    %4 = vector.shape_cast %3 : vector<320x64xf32> to vector<40x8x64xf32>
    %5 = vector.shape_cast %4 : vector<40x8x64xf32> to vector<20x2x8x64xf32>
    %6 = vector.extract_strided_slice %5 {offsets = [0, 0, 0, 0], sizes = [20, 1, 8, 64], strides = [1, 1, 1, 1]} : vector<20x2x8x64xf32> to vector<20x1x8x64xf32>
    %7 = vector.shape_cast %6 : vector<20x1x8x64xf32> to vector<20x8x64xf32>
    %8 = vector.extract_strided_slice %5 {offsets = [0, 1, 0, 0], sizes = [20, 1, 8, 64], strides = [1, 1, 1, 1]} : vector<20x2x8x64xf32> to vector<20x1x8x64xf32>
    %9 = vector.shape_cast %8 : vector<20x1x8x64xf32> to vector<20x8x64xf32>
    %10 = arith.maximumf %7, %9 : vector<20x8x64xf32>
    %c0_4 = arith.constant 0 : index
    %c0_5 = arith.constant 0 : index
    %c0_6 = arith.constant 0 : index
    %11 = vector.load %arg3[%c0_4, %c0_5, %c0_6] : memref<1x1x64xf32, #tpu.memory_space<vmem>>, vector<1x1x64xf32>
    %12 = vector.broadcast %11 : vector<1x1x64xf32> to vector<20x8x64xf32>
    %13 = arith.addf %10, %12 : vector<20x8x64xf32>
    %cst_7 = arith.constant 0.000000e+00 : f32
    %14 = vector.broadcast %cst_7 : f32 to vector<20x8x64xf32>
    %15 = arith.cmpf ogt, %13, %14 : vector<20x8x64xf32>
    %cst_8 = arith.constant 0.00999999977 : f32
    %16 = vector.broadcast %cst_8 : f32 to vector<20x8x64xf32>
    %17 = arith.mulf %16, %13 : vector<20x8x64xf32>
    %18 = arith.select %15, %13, %17 : vector<20x8x64xi1>, vector<20x8x64xf32>
    %19 = arith.truncf %18 : vector<20x8x64xf32> to vector<20x8x64xbf16>
    %cst_9 = arith.constant 0.000000e+00 : bf16
    %20 = vector.broadcast %cst_9 : bf16 to vector<1x8x64xbf16>
    %21 = vector.extract_strided_slice %19 {offsets = [0, 0, 0], sizes = [19, 8, 64], strides = [1, 1, 1]} : vector<20x8x64xbf16> to vector<19x8x64xbf16>
    %22 = tpu.concatenate %20, %21 in 0 : vector<1x8x64xbf16>, vector<19x8x64xbf16> -> vector<20x8x64xbf16>
    %23 = vector.extract_strided_slice %19 {offsets = [1, 0, 0], sizes = [19, 8, 64], strides = [1, 1, 1]} : vector<20x8x64xbf16> to vector<19x8x64xbf16>
    %24 = tpu.concatenate %23, %20 in 0 : vector<19x8x64xbf16>, vector<1x8x64xbf16> -> vector<20x8x64xbf16>
    %c0_10 = arith.constant 0 : index
    %c0_11 = arith.constant 0 : index
    %c0_12 = arith.constant 0 : index
    %25 = vector.load %arg4[%c0_10, %c0_11, %c0_12] : memref<3x64x256xbf16, #tpu.memory_space<vmem>>, vector<1x64x256xbf16>
    %26 = vector.shape_cast %25 : vector<1x64x256xbf16> to vector<64x256xbf16>
    %27 = vector.shape_cast %22 : vector<20x8x64xbf16> to vector<160x64xbf16>
    %cst_13 = arith.constant dense<0.000000e+00> : vector<160x256xf32>
    %28 = tpu.matmul %27, %26, %cst_13 {dimension_numbers = #tpu.dot_dimension_numbers<[1], [0], [0], [1], [0, 0, 1, 1], [], []>} : vector<160x64xbf16>, vector<64x256xbf16>, vector<160x256xf32> -> vector<160x256xf32>
    %29 = vector.shape_cast %28 : vector<160x256xf32> to vector<20x8x256xf32>
    %c1 = arith.constant 1 : index
    %c0_14 = arith.constant 0 : index
    %c0_15 = arith.constant 0 : index
    %30 = vector.load %arg4[%c1, %c0_14, %c0_15] : memref<3x64x256xbf16, #tpu.memory_space<vmem>>, vector<1x64x256xbf16>
    %31 = vector.shape_cast %30 : vector<1x64x256xbf16> to vector<64x256xbf16>
    %32 = vector.shape_cast %19 : vector<20x8x64xbf16> to vector<160x64xbf16>
    %cst_16 = arith.constant dense<0.000000e+00> : vector<160x256xf32>
    %33 = tpu.matmul %32, %31, %cst_16 {dimension_numbers = #tpu.dot_dimension_numbers<[1], [0], [0], [1], [0, 0, 1, 1], [], []>} : vector<160x64xbf16>, vector<64x256xbf16>, vector<160x256xf32> -> vector<160x256xf32>
    %34 = vector.shape_cast %33 : vector<160x256xf32> to vector<20x8x256xf32>
    %35 = arith.addf %29, %34 : vector<20x8x256xf32>
    %c2 = arith.constant 2 : index
    %c0_17 = arith.constant 0 : index
    %c0_18 = arith.constant 0 : index
    %36 = vector.load %arg4[%c2, %c0_17, %c0_18] : memref<3x64x256xbf16, #tpu.memory_space<vmem>>, vector<1x64x256xbf16>
    %37 = vector.shape_cast %36 : vector<1x64x256xbf16> to vector<64x256xbf16>
    %38 = vector.shape_cast %24 : vector<20x8x64xbf16> to vector<160x64xbf16>
    %cst_19 = arith.constant dense<0.000000e+00> : vector<160x256xf32>
    %39 = tpu.matmul %38, %37, %cst_19 {dimension_numbers = #tpu.dot_dimension_numbers<[1], [0], [0], [1], [0, 0, 1, 1], [], []>} : vector<160x64xbf16>, vector<64x256xbf16>, vector<160x256xf32> -> vector<160x256xf32>
    %40 = vector.shape_cast %39 : vector<160x256xf32> to vector<20x8x256xf32>
    %41 = arith.addf %35, %40 : vector<20x8x256xf32>
    %42 = vector.shape_cast %41 : vector<20x8x256xf32> to vector<10x2x8x256xf32>
    %43 = vector.extract_strided_slice %42 {offsets = [0, 0, 0, 0], sizes = [10, 1, 8, 256], strides = [1, 1, 1, 1]} : vector<10x2x8x256xf32> to vector<10x1x8x256xf32>
    %44 = vector.shape_cast %43 : vector<10x1x8x256xf32> to vector<10x8x256xf32>
    %45 = vector.extract_strided_slice %42 {offsets = [0, 1, 0, 0], sizes = [10, 1, 8, 256], strides = [1, 1, 1, 1]} : vector<10x2x8x256xf32> to vector<10x1x8x256xf32>
    %46 = vector.shape_cast %45 : vector<10x1x8x256xf32> to vector<10x8x256xf32>
    %47 = arith.maximumf %44, %46 : vector<10x8x256xf32>
    %c0_20 = arith.constant 0 : index
    %c0_21 = arith.constant 0 : index
    %c0_22 = arith.constant 0 : index
    %48 = vector.load %arg5[%c0_20, %c0_21, %c0_22] : memref<1x1x256xf32, #tpu.memory_space<vmem>>, vector<1x1x256xf32>
    %49 = vector.broadcast %48 : vector<1x1x256xf32> to vector<10x8x256xf32>
    %50 = arith.addf %47, %49 : vector<10x8x256xf32>
    %cst_23 = arith.constant 0.000000e+00 : f32
    %51 = vector.broadcast %cst_23 : f32 to vector<10x8x256xf32>
    %52 = arith.cmpf ogt, %50, %51 : vector<10x8x256xf32>
    %cst_24 = arith.constant 0.00999999977 : f32
    %53 = vector.broadcast %cst_24 : f32 to vector<10x8x256xf32>
    %54 = arith.mulf %53, %50 : vector<10x8x256xf32>
    %55 = arith.select %52, %50, %54 : vector<10x8x256xi1>, vector<10x8x256xf32>
    %56 = arith.truncf %55 : vector<10x8x256xf32> to vector<10x8x256xbf16>
    %cst_25 = arith.constant 0.000000e+00 : f32
    %57 = vector.broadcast %cst_25 : f32 to vector<8x128xf32>
    %58 = vector.extract_strided_slice %56 {offsets = [0, 0, 0], sizes = [1, 8, 256], strides = [1, 1, 1]} : vector<10x8x256xbf16> to vector<1x8x256xbf16>
    %59 = vector.shape_cast %58 : vector<1x8x256xbf16> to vector<8x256xbf16>
    %c0_26 = arith.constant 0 : index
    %c0_27 = arith.constant 0 : index
    %c0_28 = arith.constant 0 : index
    %60 = vector.load %arg6[%c0_26, %c0_27, %c0_28] : memref<10x256x128xbf16, #tpu.memory_space<vmem>>, vector<1x256x128xbf16>
    %61 = vector.shape_cast %60 : vector<1x256x128xbf16> to vector<256x128xbf16>
    %cst_29 = arith.constant dense<0.000000e+00> : vector<8x128xf32>
    %62 = tpu.matmul %59, %61, %cst_29 {dimension_numbers = #tpu.dot_dimension_numbers<[1], [0], [0], [1], [0, 0, 1, 1], [], []>} : vector<8x256xbf16>, vector<256x128xbf16>, vector<8x128xf32> -> vector<8x128xf32>
    %63 = arith.addf %57, %62 : vector<8x128xf32>
    %64 = vector.extract_strided_slice %56 {offsets = [1, 0, 0], sizes = [1, 8, 256], strides = [1, 1, 1]} : vector<10x8x256xbf16> to vector<1x8x256xbf16>
    %65 = vector.shape_cast %64 : vector<1x8x256xbf16> to vector<8x256xbf16>
    %c1_30 = arith.constant 1 : index
    %c0_31 = arith.constant 0 : index
    %c0_32 = arith.constant 0 : index
    %66 = vector.load %arg6[%c1_30, %c0_31, %c0_32] : memref<10x256x128xbf16, #tpu.memory_space<vmem>>, vector<1x256x128xbf16>
    %67 = vector.shape_cast %66 : vector<1x256x128xbf16> to vector<256x128xbf16>
    %cst_33 = arith.constant dense<0.000000e+00> : vector<8x128xf32>
    %68 = tpu.matmul %65, %67, %cst_33 {dimension_numbers = #tpu.dot_dimension_numbers<[1], [0], [0], [1], [0, 0, 1, 1], [], []>} : vector<8x256xbf16>, vector<256x128xbf16>, vector<8x128xf32> -> vector<8x128xf32>
    %69 = arith.addf %63, %68 : vector<8x128xf32>
    %70 = vector.extract_strided_slice %56 {offsets = [2, 0, 0], sizes = [1, 8, 256], strides = [1, 1, 1]} : vector<10x8x256xbf16> to vector<1x8x256xbf16>
    %71 = vector.shape_cast %70 : vector<1x8x256xbf16> to vector<8x256xbf16>
    %c2_34 = arith.constant 2 : index
    %c0_35 = arith.constant 0 : index
    %c0_36 = arith.constant 0 : index
    %72 = vector.load %arg6[%c2_34, %c0_35, %c0_36] : memref<10x256x128xbf16, #tpu.memory_space<vmem>>, vector<1x256x128xbf16>
    %73 = vector.shape_cast %72 : vector<1x256x128xbf16> to vector<256x128xbf16>
    %cst_37 = arith.constant dense<0.000000e+00> : vector<8x128xf32>
    %74 = tpu.matmul %71, %73, %cst_37 {dimension_numbers = #tpu.dot_dimension_numbers<[1], [0], [0], [1], [0, 0, 1, 1], [], []>} : vector<8x256xbf16>, vector<256x128xbf16>, vector<8x128xf32> -> vector<8x128xf32>
    %75 = arith.addf %69, %74 : vector<8x128xf32>
    %76 = vector.extract_strided_slice %56 {offsets = [3, 0, 0], sizes = [1, 8, 256], strides = [1, 1, 1]} : vector<10x8x256xbf16> to vector<1x8x256xbf16>
    %77 = vector.shape_cast %76 : vector<1x8x256xbf16> to vector<8x256xbf16>
    %c3 = arith.constant 3 : index
    %c0_38 = arith.constant 0 : index
    %c0_39 = arith.constant 0 : index
    %78 = vector.load %arg6[%c3, %c0_38, %c0_39] : memref<10x256x128xbf16, #tpu.memory_space<vmem>>, vector<1x256x128xbf16>
    %79 = vector.shape_cast %78 : vector<1x256x128xbf16> to vector<256x128xbf16>
    %cst_40 = arith.constant dense<0.000000e+00> : vector<8x128xf32>
    %80 = tpu.matmul %77, %79, %cst_40 {dimension_numbers = #tpu.dot_dimension_numbers<[1], [0], [0], [1], [0, 0, 1, 1], [], []>} : vector<8x256xbf16>, vector<256x128xbf16>, vector<8x128xf32> -> vector<8x128xf32>
    %81 = arith.addf %75, %80 : vector<8x128xf32>
    %82 = vector.extract_strided_slice %56 {offsets = [4, 0, 0], sizes = [1, 8, 256], strides = [1, 1, 1]} : vector<10x8x256xbf16> to vector<1x8x256xbf16>
    %83 = vector.shape_cast %82 : vector<1x8x256xbf16> to vector<8x256xbf16>
    %c4 = arith.constant 4 : index
    %c0_41 = arith.constant 0 : index
    %c0_42 = arith.constant 0 : index
    %84 = vector.load %arg6[%c4, %c0_41, %c0_42] : memref<10x256x128xbf16, #tpu.memory_space<vmem>>, vector<1x256x128xbf16>
    %85 = vector.shape_cast %84 : vector<1x256x128xbf16> to vector<256x128xbf16>
    %cst_43 = arith.constant dense<0.000000e+00> : vector<8x128xf32>
    %86 = tpu.matmul %83, %85, %cst_43 {dimension_numbers = #tpu.dot_dimension_numbers<[1], [0], [0], [1], [0, 0, 1, 1], [], []>} : vector<8x256xbf16>, vector<256x128xbf16>, vector<8x128xf32> -> vector<8x128xf32>
    %87 = arith.addf %81, %86 : vector<8x128xf32>
    %88 = vector.extract_strided_slice %56 {offsets = [5, 0, 0], sizes = [1, 8, 256], strides = [1, 1, 1]} : vector<10x8x256xbf16> to vector<1x8x256xbf16>
    %89 = vector.shape_cast %88 : vector<1x8x256xbf16> to vector<8x256xbf16>
    %c5 = arith.constant 5 : index
    %c0_44 = arith.constant 0 : index
    %c0_45 = arith.constant 0 : index
    %90 = vector.load %arg6[%c5, %c0_44, %c0_45] : memref<10x256x128xbf16, #tpu.memory_space<vmem>>, vector<1x256x128xbf16>
    %91 = vector.shape_cast %90 : vector<1x256x128xbf16> to vector<256x128xbf16>
    %cst_46 = arith.constant dense<0.000000e+00> : vector<8x128xf32>
    %92 = tpu.matmul %89, %91, %cst_46 {dimension_numbers = #tpu.dot_dimension_numbers<[1], [0], [0], [1], [0, 0, 1, 1], [], []>} : vector<8x256xbf16>, vector<256x128xbf16>, vector<8x128xf32> -> vector<8x128xf32>
    %93 = arith.addf %87, %92 : vector<8x128xf32>
    %94 = vector.extract_strided_slice %56 {offsets = [6, 0, 0], sizes = [1, 8, 256], strides = [1, 1, 1]} : vector<10x8x256xbf16> to vector<1x8x256xbf16>
    %95 = vector.shape_cast %94 : vector<1x8x256xbf16> to vector<8x256xbf16>
    %c6 = arith.constant 6 : index
    %c0_47 = arith.constant 0 : index
    %c0_48 = arith.constant 0 : index
    %96 = vector.load %arg6[%c6, %c0_47, %c0_48] : memref<10x256x128xbf16, #tpu.memory_space<vmem>>, vector<1x256x128xbf16>
    %97 = vector.shape_cast %96 : vector<1x256x128xbf16> to vector<256x128xbf16>
    %cst_49 = arith.constant dense<0.000000e+00> : vector<8x128xf32>
    %98 = tpu.matmul %95, %97, %cst_49 {dimension_numbers = #tpu.dot_dimension_numbers<[1], [0], [0], [1], [0, 0, 1, 1], [], []>} : vector<8x256xbf16>, vector<256x128xbf16>, vector<8x128xf32> -> vector<8x128xf32>
    %99 = arith.addf %93, %98 : vector<8x128xf32>
    %100 = vector.extract_strided_slice %56 {offsets = [7, 0, 0], sizes = [1, 8, 256], strides = [1, 1, 1]} : vector<10x8x256xbf16> to vector<1x8x256xbf16>
    %101 = vector.shape_cast %100 : vector<1x8x256xbf16> to vector<8x256xbf16>
    %c7 = arith.constant 7 : index
    %c0_50 = arith.constant 0 : index
    %c0_51 = arith.constant 0 : index
    %102 = vector.load %arg6[%c7, %c0_50, %c0_51] : memref<10x256x128xbf16, #tpu.memory_space<vmem>>, vector<1x256x128xbf16>
    %103 = vector.shape_cast %102 : vector<1x256x128xbf16> to vector<256x128xbf16>
    %cst_52 = arith.constant dense<0.000000e+00> : vector<8x128xf32>
    %104 = tpu.matmul %101, %103, %cst_52 {dimension_numbers = #tpu.dot_dimension_numbers<[1], [0], [0], [1], [0, 0, 1, 1], [], []>} : vector<8x256xbf16>, vector<256x128xbf16>, vector<8x128xf32> -> vector<8x128xf32>
    %105 = arith.addf %99, %104 : vector<8x128xf32>
    %106 = vector.extract_strided_slice %56 {offsets = [8, 0, 0], sizes = [1, 8, 256], strides = [1, 1, 1]} : vector<10x8x256xbf16> to vector<1x8x256xbf16>
    %107 = vector.shape_cast %106 : vector<1x8x256xbf16> to vector<8x256xbf16>
    %c8 = arith.constant 8 : index
    %c0_53 = arith.constant 0 : index
    %c0_54 = arith.constant 0 : index
    %108 = vector.load %arg6[%c8, %c0_53, %c0_54] : memref<10x256x128xbf16, #tpu.memory_space<vmem>>, vector<1x256x128xbf16>
    %109 = vector.shape_cast %108 : vector<1x256x128xbf16> to vector<256x128xbf16>
    %cst_55 = arith.constant dense<0.000000e+00> : vector<8x128xf32>
    %110 = tpu.matmul %107, %109, %cst_55 {dimension_numbers = #tpu.dot_dimension_numbers<[1], [0], [0], [1], [0, 0, 1, 1], [], []>} : vector<8x256xbf16>, vector<256x128xbf16>, vector<8x128xf32> -> vector<8x128xf32>
    %111 = arith.addf %105, %110 : vector<8x128xf32>
    %112 = vector.extract_strided_slice %56 {offsets = [9, 0, 0], sizes = [1, 8, 256], strides = [1, 1, 1]} : vector<10x8x256xbf16> to vector<1x8x256xbf16>
    %113 = vector.shape_cast %112 : vector<1x8x256xbf16> to vector<8x256xbf16>
    %c9 = arith.constant 9 : index
    %c0_56 = arith.constant 0 : index
    %c0_57 = arith.constant 0 : index
    %114 = vector.load %arg6[%c9, %c0_56, %c0_57] : memref<10x256x128xbf16, #tpu.memory_space<vmem>>, vector<1x256x128xbf16>
    %115 = vector.shape_cast %114 : vector<1x256x128xbf16> to vector<256x128xbf16>
    %cst_58 = arith.constant dense<0.000000e+00> : vector<8x128xf32>
    %116 = tpu.matmul %113, %115, %cst_58 {dimension_numbers = #tpu.dot_dimension_numbers<[1], [0], [0], [1], [0, 0, 1, 1], [], []>} : vector<8x256xbf16>, vector<256x128xbf16>, vector<8x128xf32> -> vector<8x128xf32>
    %117 = arith.addf %111, %116 : vector<8x128xf32>
    %c0_59 = arith.constant 0 : index
    %c0_60 = arith.constant 0 : index
    %118 = vector.load %arg7[%c0_59, %c0_60] : memref<1x128xf32, #tpu.memory_space<vmem>>, vector<1x128xf32>
    %119 = vector.broadcast %118 : vector<1x128xf32> to vector<8x128xf32>
    %120 = arith.addf %117, %119 : vector<8x128xf32>
    %cst_61 = arith.constant 0.000000e+00 : f32
    %121 = vector.broadcast %cst_61 : f32 to vector<8x128xf32>
    %122 = arith.cmpf ogt, %120, %121 : vector<8x128xf32>
    %cst_62 = arith.constant 0.00999999977 : f32
    %123 = vector.broadcast %cst_62 : f32 to vector<8x128xf32>
    %124 = arith.mulf %123, %120 : vector<8x128xf32>
    %125 = arith.select %122, %120, %124 : vector<8x128xi1>, vector<8x128xf32>
    %c0_63 = arith.constant 0 : index
    %c0_64 = arith.constant 0 : index
    %126 = vector.load %arg8[%c0_63, %c0_64] : memref<1x128xf32, #tpu.memory_space<vmem>>, vector<1x128xf32>
    %127 = vector.broadcast %126 : vector<1x128xf32> to vector<8x128xf32>
    %128 = arith.mulf %125, %127 : vector<8x128xf32>
    %cst_65 = arith.constant dense<0.000000e+00> : vector<8xf32>
    %129 = vector.multi_reduction <add>, %128, %cst_65 [1] : vector<8x128xf32> to vector<8xf32>
    %130 = vector.shape_cast %129 : vector<8xf32> to vector<8x1xf32>
    %c0_66 = arith.constant 0 : index
    %c0_67 = arith.constant 0 : index
    %131 = vector.load %arg9[%c0_66, %c0_67] : memref<1x1xf32, #tpu.memory_space<vmem>>, vector<1x1xf32>
    %132 = vector.broadcast %131 : vector<1x1xf32> to vector<8x1xf32>
    %133 = arith.addf %130, %132 : vector<8x1xf32>
    %134 = arith.negf %133 : vector<8x1xf32>
    %135 = math.exp %134 : vector<8x1xf32>
    %cst_68 = arith.constant 1.000000e+00 : f32
    %136 = vector.broadcast %cst_68 : f32 to vector<8x1xf32>
    %137 = arith.addf %136, %135 : vector<8x1xf32>
    %138 = arith.divf %136, %137 : vector<8x1xf32>
    %c0_69 = arith.constant 0 : index
    %c0_70 = arith.constant 0 : index
    %139 = vector.load %arg10[%c0_69, %c0_70] : memref<8x1xf32, #tpu.memory_space<vmem>>, vector<8x1xf32>
    tpu.vector_store %arg10[%c0_69, %c0_70], %138 {strides = array<i32>} : memref<8x1xf32, #tpu.memory_space<vmem>>, vector<8x1xf32>,
    return
  }
  func.func @transform_0(%arg0: i32) -> (i32, i32, i32) {
    %c0_i32 = arith.constant 0 : i32
    %c0_i32_0 = arith.constant 0 : i32
    %c0_i32_1 = arith.constant 0 : i32
    return %c0_i32, %arg0, %c0_i32_0 : i32, i32, i32
  }
  func.func @transform_1(%arg0: i32) -> (i32, i32) {
    %c0_i32 = arith.constant 0 : i32
    %c0_i32_0 = arith.constant 0 : i32
    %c0_i32_1 = arith.constant 0 : i32
    return %c0_i32, %c0_i32_0 : i32, i32
  }
  func.func @transform_2(%arg0: i32) -> (i32, i32, i32) {
    %c0_i32 = arith.constant 0 : i32
    %c0_i32_0 = arith.constant 0 : i32
    %c0_i32_1 = arith.constant 0 : i32
    %c0_i32_2 = arith.constant 0 : i32
    return %c0_i32, %c0_i32_0, %c0_i32_1 : i32, i32, i32
  }
  func.func @transform_3(%arg0: i32) -> (i32, i32, i32) {
    %c0_i32 = arith.constant 0 : i32
    %c0_i32_0 = arith.constant 0 : i32
    %c0_i32_1 = arith.constant 0 : i32
    %c0_i32_2 = arith.constant 0 : i32
    return %c0_i32, %c0_i32_0, %c0_i32_1 : i32, i32, i32
  }
  func.func @transform_4(%arg0: i32) -> (i32, i32, i32) {
    %c0_i32 = arith.constant 0 : i32
    %c0_i32_0 = arith.constant 0 : i32
    %c0_i32_1 = arith.constant 0 : i32
    %c0_i32_2 = arith.constant 0 : i32
    return %c0_i32, %c0_i32_0, %c0_i32_1 : i32, i32, i32
  }
  func.func @transform_5(%arg0: i32) -> (i32, i32, i32) {
    %c0_i32 = arith.constant 0 : i32
    %c0_i32_0 = arith.constant 0 : i32
    %c0_i32_1 = arith.constant 0 : i32
    %c0_i32_2 = arith.constant 0 : i32
    return %c0_i32, %c0_i32_0, %c0_i32_1 : i32, i32, i32
  }
  func.func @transform_6(%arg0: i32) -> (i32, i32) {
    %c0_i32 = arith.constant 0 : i32
    %c0_i32_0 = arith.constant 0 : i32
    %c0_i32_1 = arith.constant 0 : i32
    return %c0_i32, %c0_i32_0 : i32, i32
  }
  func.func @transform_7(%arg0: i32) -> (i32, i32) {
    %c0_i32 = arith.constant 0 : i32
    %c0_i32_0 = arith.constant 0 : i32
    %c0_i32_1 = arith.constant 0 : i32
    return %c0_i32, %c0_i32_0 : i32, i32
  }
  func.func @transform_8(%arg0: i32) -> (i32, i32) {
    %c0_i32 = arith.constant 0 : i32
    %c0_i32_0 = arith.constant 0 : i32
    %c0_i32_1 = arith.constant 0 : i32
    return %c0_i32, %c0_i32_0 : i32, i32
  }
  func.func @transform_9(%arg0: i32) -> (i32, i32) {
    %c0_i32 = arith.constant 0 : i32
    %c0_i32_0 = arith.constant 0 : i32
    return %arg0, %c0_i32 : i32, i32
  }
}

</mosaic_0001>

<llo_original>
// kernel: tpu_custom_call.1
$region0: #{tpu_custom_call.1}
  #allocation0 [shape = 'u32[]', space=smem, size = 0x4, offset = 0x4, fixed_abs, tag = 'smem constant byte address 0x4 - core index']
  #allocation1 [shape = 'u32[144,128]{1,0:T(1,128)}', space=vmem, size = 0x12000, scoped, tag = 'internal scratch']
  #allocation2 [shape = 'f32[1,1]{1,0:T(1,128)S(1)}', space=vmem, size = 0x200, scoped, tag = 'scoped memory for tpu_custom_call.1']
  %s0 = inlined_call_operand.vmem [shape: bf16[40,8,33], index: 0, kind: input, shape index: {}]
  %s1 = inlined_call_operand.vmem [shape: bf16[33,64], index: 1, kind: input, shape index: {}]
  %s2 = inlined_call_operand.vmem [shape: f32[1,1,64], index: 2, kind: input, shape index: {}]
  %s3 = inlined_call_operand.vmem [shape: bf16[3,64,256], index: 3, kind: input, shape index: {}]
  %s4 = inlined_call_operand.vmem [shape: f32[1,1,256], index: 4, kind: input, shape index: {}]
  %s5 = inlined_call_operand.hbm [shape: bf16[10,256,128], index: 5, kind: input, shape index: {}]
  %s6 = inlined_call_operand.vmem [shape: f32[1,128], index: 6, kind: input, shape index: {}]
  %s7 = inlined_call_operand.vmem [shape: f32[1,128], index: 7, kind: input, shape index: {}]
  %s8 = inlined_call_operand.<no memory space> [shape: f32[1,1], index: 8, kind: input, shape index: {}]
  %s9 = inlined_call_operand.vmem [shape: f32[8,1], index: 9, kind: output, shape index: {}]
  %s10 = sld [smem:[#allocation0]]
  $region50: #{tpu_custom_call.1} parent=0
    _
  %s12 = ssub.s32 1, %s10
  %s13 = scalar_select 0, %s12, %s10
  %v14 = vstv %s8
  %15 = vst [vmem:[#allocation2] sm:$0x1] %v14
  $region1: #{tpu_custom_call.1} parent=0
    #allocation3 [shape = 'u8[655360]{0}', space=vmem, size = 0xa0000, scoped, tag = 'input window, operand 5, single buffered']
    #allocation4 [shape = 's32[1]{0}', space=sflag, size = 0x4, scoped, tag = 'scoped memory for tpu_custom_call.1']
    %16 = vsyncpa [#allocation4], 0
    // Predicated region
    $region2: #{tpu_custom_call.1} parent=1 // pred_check
      _
    $region3: #{tpu_custom_call.1} parent=1 // pred_check_branch
      %18 = sbr.rel (0) target = $region5
    $region4: #{tpu_custom_call.1} parent=1 // pred_region
      _
    $region5: #{tpu_custom_call.1} parent=1 // pred_fallthru
      _
    // Predicated region
    $region6: #{tpu_custom_call.1} parent=1 // pred_check
      _
    $region7: #{tpu_custom_call.1} parent=1 // pred_check_branch
      %20 = sbr.rel (0) target = $region9
    $region8: #{tpu_custom_call.1} parent=1 // pred_region
      _
    $region9: #{tpu_custom_call.1} parent=1 // pred_fallthru
      _
    // Predicated region
    $region10: #{tpu_custom_call.1} parent=1 // pred_check
      _
    $region11: #{tpu_custom_call.1} parent=1 // pred_check_branch
      %22 = sbr.rel (0) target = $region13
    $region12: #{tpu_custom_call.1} parent=1 // pred_region
      _
    $region13: #{tpu_custom_call.1} parent=1 // pred_fallthru
      _
    // Predicated region
    $region14: #{tpu_custom_call.1} parent=1 // pred_check
      _
    $region15: #{tpu_custom_call.1} parent=1 // pred_check_branch
      %24 = sbr.rel (0) target = $region17
    $region16: #{tpu_custom_call.1} parent=1 // pred_region
      _
    $region17: #{tpu_custom_call.1} parent=1 // pred_fallthru
      _
    // Predicated region
    $region18: #{tpu_custom_call.1} parent=1 // pred_check
      _
    $region19: #{tpu_custom_call.1} parent=1 // pred_check_branch
      %26 = sbr.rel (0) target = $region21
    $region20: #{tpu_custom_call.1} parent=1 // pred_region
      _
    $region21: #{tpu_custom_call.1} parent=1 // pred_fallthru
      _
    // Predicated region
    $region22: #{tpu_custom_call.1} parent=1 // pred_check
      _
    $region23: #{tpu_custom_call.1} parent=1 // pred_check_branch
      %28 = sbr.rel (0) target = $region25
    $region24: #{tpu_custom_call.1} parent=1 // pred_region
      %s30 = ssub.s32 20480, 20480
      %31 = vsyncadd [#allocation4], %s30
      %s32 = sshll.u32 [#allocation3], 4
      %s33 = int_to_ptr.vmem [resolvable:$true] %s32
      %38 = dma.hbm_to_vmem [thread:$0]  %s5, 20480, %s33, [#allocation4], 64, 64, 4
    $region25: #{tpu_custom_call.1} parent=1 // pred_fallthru
      _
    // Predicated region
    $region26: #{tpu_custom_call.1} parent=1 // pred_check
      _
    $region27: #{tpu_custom_call.1} parent=1 // pred_check_branch
      %40 = sbr.rel (0) target = $region29
    $region28: #{tpu_custom_call.1} parent=1 // pred_region
      _
    $region29: #{tpu_custom_call.1} parent=1 // pred_fallthru
      _
    // Predicated region
    $region30: #{tpu_custom_call.1} parent=1 // pred_check
      _
    $region31: #{tpu_custom_call.1} parent=1 // pred_check_branch
      %42 = sbr.rel (0) target = $region33
    $region32: #{tpu_custom_call.1} parent=1 // pred_region
      _
    $region33: #{tpu_custom_call.1} parent=1 // pred_fallthru
      _
    // Predicated region
    $region34: #{tpu_custom_call.1} parent=1 // pred_check
      _
    $region35: #{tpu_custom_call.1} parent=1 // pred_check_branch
      %44 = sbr.rel (0) target = $region37
    $region36: #{tpu_custom_call.1} parent=1 // pred_region
      _
    $region37: #{tpu_custom_call.1} parent=1 // pred_fallthru
      _
    // Predicated region
    $region38: #{tpu_custom_call.1} parent=1 // pred_check
      _
    $region39: #{tpu_custom_call.1} parent=1 // pred_check_branch
      %46 = sbr.rel (0) target = $region41
    $region40: #{tpu_custom_call.1} parent=1 // pred_region
      %47 = dma.done [#allocation4], 20480
    $region41: #{tpu_custom_call.1} parent=1 // pred_fallthru
      _
    %v49 = vld [vmem:[%s0] sm:$0xf]
    %v50 = vld [vmem:[%s0 + $0x4] sm:$0xf]
    %v51 = vld [vmem:[%s0 + $0x8] sm:$0xf]
    %v52 = vld [vmem:[%s0 + $0xc] sm:$0xf]
    %v53 = vld [vmem:[%s0 + $0x10] sm:$0xf]
    %v54 = vld [vmem:[%s0 + $0x14] sm:$0xf]
    %v55 = vld [vmem:[%s0 + $0x18] sm:$0xf]
    %v56 = vld [vmem:[%s0 + $0x1c] sm:$0xf]
    %v57 = vld [vmem:[%s0 + $0x20] sm:$0xf]
    %v58 = vld [vmem:[%s0 + $0x24] sm:$0xf]
    %v59 = vld [vmem:[%s0 + $0x28] sm:$0xf]
    %v60 = vld [vmem:[%s0 + $0x2c] sm:$0xf]
    %v61 = vld [vmem:[%s0 + $0x30] sm:$0xf]
    %v62 = vld [vmem:[%s0 + $0x34] sm:$0xf]
    %v63 = vld [vmem:[%s0 + $0x38] sm:$0xf]
    %v64 = vld [vmem:[%s0 + $0x3c] sm:$0xf]
    %v65 = vld [vmem:[%s0 + $0x40] sm:$0xf]
    %v66 = vld [vmem:[%s0 + $0x44] sm:$0xf]
    %v67 = vld [vmem:[%s0 + $0x48] sm:$0xf]
    %v68 = vld [vmem:[%s0 + $0x4c] sm:$0xf]
    %v69 = vld [vmem:[%s0 + $0x50] sm:$0xf]
    %v70 = vld [vmem:[%s0 + $0x54] sm:$0xf]
    %v71 = vld [vmem:[%s0 + $0x58] sm:$0xf]
    %v72 = vld [vmem:[%s0 + $0x5c] sm:$0xf]
    %v73 = vld [vmem:[%s0 + $0x60] sm:$0xf]
    %v74 = vld [vmem:[%s0 + $0x64] sm:$0xf]
    %v75 = vld [vmem:[%s0 + $0x68] sm:$0xf]
    %v76 = vld [vmem:[%s0 + $0x6c] sm:$0xf]
    %v77 = vld [vmem:[%s0 + $0x70] sm:$0xf]
    %v78 = vld [vmem:[%s0 + $0x74] sm:$0xf]
    %v79 = vld [vmem:[%s0 + $0x78] sm:$0xf]
    %v80 = vld [vmem:[%s0 + $0x7c] sm:$0xf]
    %v81 = vld [vmem:[%s0 + $0x80] sm:$0xf]
    %v82 = vld [vmem:[%s0 + $0x84] sm:$0xf]
    %v83 = vld [vmem:[%s0 + $0x88] sm:$0xf]
    %v84 = vld [vmem:[%s0 + $0x8c] sm:$0xf]
    %v85 = vld [vmem:[%s0 + $0x90] sm:$0xf]
    %v86 = vld [vmem:[%s0 + $0x94] sm:$0xf]
    %v87 = vld [vmem:[%s0 + $0x98] sm:$0xf]
    %v88 = vld [vmem:[%s0 + $0x9c] sm:$0xf]
    %v89 = vld [vmem:[%s1] sm:$0xf]
    %v90 = vld [vmem:[%s1 + $0x4] sm:$0xf]
    %v91 = vld [vmem:[%s1 + $0x8] sm:$0xf]
    %v92 = vld [vmem:[%s1 + $0xc] sm:$0xf]
    %v93 = vld [vmem:[%s1 + $0x10] sm:$0x1]
    %v134 = vunpack.c.l.b16 %v49
    %v135 = vunpack.c.l.b16 %v50
    %v136 = vunpack.c.l.b16 %v51
    %v137 = vunpack.c.l.b16 %v52
    %v138 = vunpack.c.l.b16 %v53
    %v139 = vunpack.c.l.b16 %v54
    %v140 = vunpack.c.l.b16 %v55
    %v141 = vunpack.c.l.b16 %v56
    %v142 = vunpack.c.l.b16 %v57
    %v143 = vunpack.c.l.b16 %v58
    %v144 = vunpack.c.l.b16 %v59
    %v145 = vunpack.c.l.b16 %v60
    %v146 = vunpack.c.l.b16 %v61
    %v147 = vunpack.c.l.b16 %v62
    %v148 = vunpack.c.l.b16 %v63
    %v149 = vunpack.c.l.b16 %v64
    %v150 = vunpack.c.l.b16 %v65
    %v151 = vunpack.c.l.b16 %v66
    %v152 = vunpack.c.l.b16 %v67
    %v153 = vunpack.c.l.b16 %v68
    %v154 = vunpack.c.l.b16 %v69
    %v155 = vunpack.c.l.b16 %v70
    %v156 = vunpack.c.l.b16 %v71
    %v157 = vunpack.c.l.b16 %v72
    %v158 = vunpack.c.l.b16 %v73
    %v159 = vunpack.c.l.b16 %v74
    %v160 = vunpack.c.l.b16 %v75
    %v161 = vunpack.c.l.b16 %v76
    %v162 = vunpack.c.l.b16 %v77
    %v163 = vunpack.c.l.b16 %v78
    %v164 = vunpack.c.l.b16 %v79
    %v165 = vunpack.c.l.b16 %v80
    %v166 = vunpack.c.l.b16 %v81
    %v167 = vunpack.c.l.b16 %v82
    %v168 = vunpack.c.l.b16 %v83
    %v169 = vunpack.c.l.b16 %v84
    %v170 = vunpack.c.l.b16 %v85
    %v171 = vunpack.c.l.b16 %v86
    %v172 = vunpack.c.l.b16 %v87
    %v173 = vunpack.c.l.b16 %v88
    %v174 = vpack.c.b16 %v135, %v134
    %v175 = vpack.c.b16 %v137, %v136
    %v176 = vpack.c.b16 %v139, %v138
    %v177 = vpack.c.b16 %v141, %v140
    %v178 = vpack.c.b16 %v143, %v142
    %v179 = vpack.c.b16 %v145, %v144
    %v180 = vpack.c.b16 %v147, %v146
    %v181 = vpack.c.b16 %v149, %v148
    %v182 = vpack.c.b16 %v151, %v150
    %v183 = vpack.c.b16 %v153, %v152
    %v184 = vpack.c.b16 %v155, %v154
    %v185 = vpack.c.b16 %v157, %v156
    %v186 = vpack.c.b16 %v159, %v158
    %v187 = vpack.c.b16 %v161, %v160
    %v188 = vpack.c.b16 %v163, %v162
    %v189 = vpack.c.b16 %v165, %v164
    %v190 = vpack.c.b16 %v167, %v166
    %v191 = vpack.c.b16 %v169, %v168
    %v192 = vpack.c.b16 %v171, %v170
    %v193 = vpack.c.b16 %v173, %v172
    %v199 = vunpack.c.l.b16 %v89
    %v200 = vunpack.c.l.b16 %v90
    %v201 = vunpack.c.l.b16 %v91
    %v202 = vunpack.c.l.b16 %v92
    %v203 = vunpack.c.l.b16 %v93
    %v204 = vpack.c.b16 %v200, %v199
    %v205 = vpack.c.b16 %v202, %v201
    %v206 = vpack.c.b16 %v203, %v203
    %vm209 = vcmask 269312
    %v211 = vsel %vm209, %v174, 0
    %v214 = vsel %vm209, %v175, 0
    %v217 = vsel %vm209, %v176, 0
    %v220 = vsel %vm209, %v177, 0
    %v223 = vsel %vm209, %v178, 0
    %v226 = vsel %vm209, %v179, 0
    %v229 = vsel %vm209, %v180, 0
    %v232 = vsel %vm209, %v181, 0
    %v235 = vsel %vm209, %v182, 0
    %v238 = vsel %vm209, %v183, 0
    %v241 = vsel %vm209, %v184, 0
    %v244 = vsel %vm209, %v185, 0
    %v247 = vsel %vm209, %v186, 0
    %v250 = vsel %vm209, %v187, 0
    %v253 = vsel %vm209, %v188, 0
    %v256 = vsel %vm209, %v189, 0
    %v259 = vsel %vm209, %v190, 0
    %v262 = vsel %vm209, %v191, 0
    %v265 = vsel %vm209, %v192, 0
    %v268 = vsel %vm209, %v193, 0
    %vm270 = vcmask 1040384
    %v271 = vsel 0, 4294967295, 65535
    %v272 = vsel %vm270, %v271, 0
    %v274 = vand.u32 %v206, %v272
    %276 = vmatprep.subr.bf16.mxu0 0
    %277 = vmatpush1.bf16.msra.mxu0 %v204
    %278 = vmatprep.subr.bf16.mxu0 0
    %279 = vmatpush1.bf16.msra.mxu0 %v205
    %280 = vmatprep.subr.bf16.mxu0 0
    %281 = vmatpush1.bf16.msra.mxu0 %v274
    %282 = vmatprep.subr.bf16.mxu0 0
    %283 = vmatpush1.bf16.msra.mxu0 0
    %284 = vmatprep.subr.bf16.mxu0 0
    %285 = vmatpush1.bf16.msra.mxu0 0
    %286 = vmatprep.subr.bf16.mxu0 0
    %287 = vmatpush1.bf16.msra.mxu0 0
    %288 = vmatprep.subr.bf16.mxu0 0
    %289 = vmatpush1.bf16.msra.mxu0 0
    %290 = vmatprep.subr.bf16.mxu0 0
    %291 = vmatpush1.bf16.msra.mxu0 0
    %292 = vmatprep.subr.bf16.mxu0 0
    %293 = vmatpush1.bf16.msra.mxu0 0
    %294 = vmatprep.subr.bf16.mxu0 0
    %295 = vmatpush1.bf16.msra.mxu0 0
    %296 = vmatprep.subr.bf16.mxu0 0
    %297 = vmatpush1.bf16.msra.mxu0 0
    %298 = vmatprep.subr.bf16.mxu0 0
    %299 = vmatpush1.bf16.msra.mxu0 0
    %300 = vmatprep.subr.bf16.mxu0 0
    %301 = vmatpush1.bf16.msra.mxu0 0
    %302 = vmatprep.subr.bf16.mxu0 0
    %303 = vmatpush1.bf16.msra.mxu0 0
    %304 = vmatprep.subr.bf16.mxu0 0
    %305 = vmatpush1.bf16.msra.mxu0 0
    %306 = vmatprep.subr.bf16.mxu0 0
    %307 = vmatpush1.bf16.msra.mxu0 0
    %308 = vmatprep.mubr.bf16.mxu0 0
    %309 = vmatmul.mubr.bf16.gmra.mrb[0].mxu0 %v211
    %v310 = vpop.f32.mrb[0].mxu0
    %v311 = vadd.f32 0.0, %v310
    %v312 = vpop.f32.mrb[0].mxu0
    %v313 = vpop.f32.mrb[0].mxu0
    %v314 = vadd.f32 0.0, %v313
    %v315 = vpop.f32.mrb[0].mxu0
    %316 = vmatprep.mubr.bf16.mxu0 0
    %317 = vmatmul.mubr.bf16.gmra.mrb[0].mxu0 %v214
    %v318 = vpop.f32.mrb[0].mxu0
    %v319 = vadd.f32 0.0, %v318
    %v320 = vpop.f32.mrb[0].mxu0
    %v321 = vpop.f32.mrb[0].mxu0
    %v322 = vadd.f32 0.0, %v321
    %v323 = vpop.f32.mrb[0].mxu0
    %324 = vmatprep.mubr.bf16.mxu0 0
    %325 = vmatmul.mubr.bf16.gmra.mrb[0].mxu0 %v217
    %v326 = vpop.f32.mrb[0].mxu0
    %v327 = vadd.f32 0.0, %v326
    %v328 = vpop.f32.mrb[0].mxu0
    %v329 = vpop.f32.mrb[0].mxu0
    %v330 = vadd.f32 0.0, %v329
    %v331 = vpop.f32.mrb[0].mxu0
    %332 = vmatprep.mubr.bf16.mxu0 0
    %333 = vmatmul.mubr.bf16.gmra.mrb[0].mxu0 %v220
    %v334 = vpop.f32.mrb[0].mxu0
    %v335 = vadd.f32 0.0, %v334
    %v336 = vpop.f32.mrb[0].mxu0
    %v337 = vpop.f32.mrb[0].mxu0
    %v338 = vadd.f32 0.0, %v337
    %v339 = vpop.f32.mrb[0].mxu0
    %340 = vmatprep.mubr.bf16.mxu0 0
    %341 = vmatmul.mubr.bf16.gmra.mrb[0].mxu0 %v223
    %v342 = vpop.f32.mrb[0].mxu0
    %v343 = vadd.f32 0.0, %v342
    %v344 = vpop.f32.mrb[0].mxu0
    %v345 = vpop.f32.mrb[0].mxu0
    %v346 = vadd.f32 0.0, %v345
    %v347 = vpop.f32.mrb[0].mxu0
    %348 = vmatprep.mubr.bf16.mxu0 0
    %349 = vmatmul.mubr.bf16.gmra.mrb[0].mxu0 %v226
    %v350 = vpop.f32.mrb[0].mxu0
    %v351 = vadd.f32 0.0, %v350
    %v352 = vpop.f32.mrb[0].mxu0
    %v353 = vpop.f32.mrb[0].mxu0
    %v354 = vadd.f32 0.0, %v353
    %v355 = vpop.f32.mrb[0].mxu0
    %356 = vmatprep.mubr.bf16.mxu0 0
    %357 = vmatmul.mubr.bf16.gmra.mrb[0].mxu0 %v229
    %v358 = vpop.f32.mrb[0].mxu0
    %v359 = vadd.f32 0.0, %v358
    %v360 = vpop.f32.mrb[0].mxu0
    %v361 = vpop.f32.mrb[0].mxu0
    %v362 = vadd.f32 0.0, %v361
    %v363 = vpop.f32.mrb[0].mxu0
    %364 = vmatprep.mubr.bf16.mxu0 0
    %365 = vmatmul.mubr.bf16.gmra.mrb[0].mxu0 %v232
    %v366 = vpop.f32.mrb[0].mxu0
    %v367 = vadd.f32 0.0, %v366
    %v368 = vpop.f32.mrb[0].mxu0
    %v369 = vpop.f32.mrb[0].mxu0
    %v370 = vadd.f32 0.0, %v369
    %v371 = vpop.f32.mrb[0].mxu0
    %372 = vmatprep.mubr.bf16.mxu0 0
    %373 = vmatmul.mubr.bf16.gmra.mrb[0].mxu0 %v235
    %v374 = vpop.f32.mrb[0].mxu0
    %v375 = vadd.f32 0.0, %v374
    %v376 = vpop.f32.mrb[0].mxu0
    %v377 = vpop.f32.mrb[0].mxu0
    %v378 = vadd.f32 0.0, %v377
    %v379 = vpop.f32.mrb[0].mxu0
    %380 = vmatprep.mubr.bf16.mxu0 0
    %381 = vmatmul.mubr.bf16.gmra.mrb[0].mxu0 %v238
    %v382 = vpop.f32.mrb[0].mxu0
    %v383 = vadd.f32 0.0, %v382
    %v384 = vpop.f32.mrb[0].mxu0
    %v385 = vpop.f32.mrb[0].mxu0
    %v386 = vadd.f32 0.0, %v385
    %v387 = vpop.f32.mrb[0].mxu0
    %388 = vmatprep.mubr.bf16.mxu0 0
    %389 = vmatmul.mubr.bf16.gmra.mrb[0].mxu0 %v241
    %v390 = vpop.f32.mrb[0].mxu0
    %v391 = vadd.f32 0.0, %v390
    %v392 = vpop.f32.mrb[0].mxu0
    %v393 = vpop.f32.mrb[0].mxu0
    %v394 = vadd.f32 0.0, %v393
    %v395 = vpop.f32.mrb[0].mxu0
    %396 = vmatprep.mubr.bf16.mxu0 0
    %397 = vmatmul.mubr.bf16.gmra.mrb[0].mxu0 %v244
    %v398 = vpop.f32.mrb[0].mxu0
    %v399 = vadd.f32 0.0, %v398
    %v400 = vpop.f32.mrb[0].mxu0
    %v401 = vpop.f32.mrb[0].mxu0
    %v402 = vadd.f32 0.0, %v401
    %v403 = vpop.f32.mrb[0].mxu0
    %404 = vmatprep.mubr.bf16.mxu0 0
    %405 = vmatmul.mubr.bf16.gmra.mrb[0].mxu0 %v247
    %v406 = vpop.f32.mrb[0].mxu0
    %v407 = vadd.f32 0.0, %v406
    %v408 = vpop.f32.mrb[0].mxu0
    %v409 = vpop.f32.mrb[0].mxu0
    %v410 = vadd.f32 0.0, %v409
    %v411 = vpop.f32.mrb[0].mxu0
    %412 = vmatprep.mubr.bf16.mxu0 0
    %413 = vmatmul.mubr.bf16.gmra.mrb[0].mxu0 %v250
    %v414 = vpop.f32.mrb[0].mxu0
    %v415 = vadd.f32 0.0, %v414
    %v416 = vpop.f32.mrb[0].mxu0
    %v417 = vpop.f32.mrb[0].mxu0
    %v418 = vadd.f32 0.0, %v417
    %v419 = vpop.f32.mrb[0].mxu0
    %420 = vmatprep.mubr.bf16.mxu0 0
    %421 = vmatmul.mubr.bf16.gmra.mrb[0].mxu0 %v253
    %v422 = vpop.f32.mrb[0].mxu0
    %v423 = vadd.f32 0.0, %v422
    %v424 = vpop.f32.mrb[0].mxu0
    %v425 = vpop.f32.mrb[0].mxu0
    %v426 = vadd.f32 0.0, %v425
    %v427 = vpop.f32.mrb[0].mxu0
    %428 = vmatprep.mubr.bf16.mxu0 0
    %429 = vmatmul.mubr.bf16.gmra.mrb[0].mxu0 %v256
    %v430 = vpop.f32.mrb[0].mxu0
    %v431 = vadd.f32 0.0, %v430
    %v432 = vpop.f32.mrb[0].mxu0
    %v433 = vpop.f32.mrb[0].mxu0
    %v434 = vadd.f32 0.0, %v433
    %v435 = vpop.f32.mrb[0].mxu0
    %436 = vmatprep.mubr.bf16.mxu0 0
    %437 = vmatmul.mubr.bf16.gmra.mrb[0].mxu0 %v259
    %v438 = vpop.f32.mrb[0].mxu0
    %v439 = vadd.f32 0.0, %v438
    %v440 = vpop.f32.mrb[0].mxu0
    %v441 = vpop.f32.mrb[0].mxu0
    %v442 = vadd.f32 0.0, %v441
    %v443 = vpop.f32.mrb[0].mxu0
    %444 = vmatprep.mubr.bf16.mxu0 0
    %445 = vmatmul.mubr.bf16.gmra.mrb[0].mxu0 %v262
    %v446 = vpop.f32.mrb[0].mxu0
    %v447 = vadd.f32 0.0, %v446
    %v448 = vpop.f32.mrb[0].mxu0
    %v449 = vpop.f32.mrb[0].mxu0
    %v450 = vadd.f32 0.0, %v449
    %v451 = vpop.f32.mrb[0].mxu0
    %452 = vmatprep.mubr.bf16.mxu0 0
    %453 = vmatmul.mubr.bf16.gmra.mrb[0].mxu0 %v265
    %v454 = vpop.f32.mrb[0].mxu0
    %v455 = vadd.f32 0.0, %v454
    %v456 = vpop.f32.mrb[0].mxu0
    %v457 = vpop.f32.mrb[0].mxu0
    %v458 = vadd.f32 0.0, %v457
    %v459 = vpop.f32.mrb[0].mxu0
    %460 = vmatprep.mubr.bf16.mxu0 0
    %461 = vmatmul.mubr.bf16.gmra.mrb[0].mxu0 %v268
    %v462 = vpop.f32.mrb[0].mxu0
    %v463 = vadd.f32 0.0, %v462
    %v464 = vpop.f32.mrb[0].mxu0
    %v465 = vpop.f32.mrb[0].mxu0
    %v466 = vadd.f32 0.0, %v465
    %v467 = vpop.f32.mrb[0].mxu0
    %468 = vdwg.mxu0
    %v469 = vmax.f32 %v311, %v314
    %v470 = vmax.f32 %v319, %v322
    %v471 = vmax.f32 %v327, %v330
    %v472 = vmax.f32 %v335, %v338
    %v473 = vmax.f32 %v343, %v346
    %v474 = vmax.f32 %v351, %v354
    %v475 = vmax.f32 %v359, %v362
    %v476 = vmax.f32 %v367, %v370
    %v477 = vmax.f32 %v375, %v378
    %v478 = vmax.f32 %v383, %v386
    %v479 = vmax.f32 %v391, %v394
    %v480 = vmax.f32 %v399, %v402
    %v481 = vmax.f32 %v407, %v410
    %v482 = vmax.f32 %v415, %v418
    %v483 = vmax.f32 %v423, %v426
    %v484 = vmax.f32 %v431, %v434
    %v485 = vmax.f32 %v439, %v442
    %v486 = vmax.f32 %v447, %v450
    %v487 = vmax.f32 %v455, %v458
    %v488 = vmax.f32 %v463, %v466
    %v489 = vld [vmem:[%s2] sm:$0x1]
    %v491 = vlaneseq
    %v492 = vshrl.u32 %v491, 7
    %v493 = vsub.s32 0, %v492
    %v494 = vrot.slane %v489, %v493
    %v496 = vadd.f32 %v469, %v494
    %v497 = vadd.f32 %v470, %v494
    %v498 = vadd.f32 %v471, %v494
    %v499 = vadd.f32 %v472, %v494
    %v500 = vadd.f32 %v473, %v494
    %v501 = vadd.f32 %v474, %v494
    %v502 = vadd.f32 %v475, %v494
    %v503 = vadd.f32 %v476, %v494
    %v504 = vadd.f32 %v477, %v494
    %v505 = vadd.f32 %v478, %v494
    %v506 = vadd.f32 %v479, %v494
    %v507 = vadd.f32 %v480, %v494
    %v508 = vadd.f32 %v481, %v494
    %v509 = vadd.f32 %v482, %v494
    %v510 = vadd.f32 %v483, %v494
    %v511 = vadd.f32 %v484, %v494
    %v512 = vadd.f32 %v485, %v494
    %v513 = vadd.f32 %v486, %v494
    %v514 = vadd.f32 %v487, %v494
    %v515 = vadd.f32 %v488, %v494
    %vm516 = vcmp.gt.f32.partialorder %v496, 0.0
    %vm517 = vcmp.gt.f32.partialorder %v497, 0.0
    %vm518 = vcmp.gt.f32.partialorder %v498, 0.0
    %vm519 = vcmp.gt.f32.partialorder %v499, 0.0
    %vm520 = vcmp.gt.f32.partialorder %v500, 0.0
    %vm521 = vcmp.gt.f32.partialorder %v501, 0.0
    %vm522 = vcmp.gt.f32.partialorder %v502, 0.0
    %vm523 = vcmp.gt.f32.partialorder %v503, 0.0
    %vm524 = vcmp.gt.f32.partialorder %v504, 0.0
    %vm525 = vcmp.gt.f32.partialorder %v505, 0.0
    %vm526 = vcmp.gt.f32.partialorder %v506, 0.0
    %vm527 = vcmp.gt.f32.partialorder %v507, 0.0
    %vm528 = vcmp.gt.f32.partialorder %v508, 0.0
    %vm529 = vcmp.gt.f32.partialorder %v509, 0.0
    %vm530 = vcmp.gt.f32.partialorder %v510, 0.0
    %vm531 = vcmp.gt.f32.partialorder %v511, 0.0
    %vm532 = vcmp.gt.f32.partialorder %v512, 0.0
    %vm533 = vcmp.gt.f32.partialorder %v513, 0.0
    %vm534 = vcmp.gt.f32.partialorder %v514, 0.0
    %vm535 = vcmp.gt.f32.partialorder %v515, 0.0
    %v536 = vmul.f32 %v496, 0.01
    %v537 = vmul.f32 %v497, 0.01
    %v538 = vmul.f32 %v498, 0.01
    %v539 = vmul.f32 %v499, 0.01
    %v540 = vmul.f32 %v500, 0.01
    %v541 = vmul.f32 %v501, 0.01
    %v542 = vmul.f32 %v502, 0.01
    %v543 = vmul.f32 %v503, 0.01
    %v544 = vmul.f32 %v504, 0.01
    %v545 = vmul.f32 %v505, 0.01
    %v546 = vmul.f32 %v506, 0.01
    %v547 = vmul.f32 %v507, 0.01
    %v548 = vmul.f32 %v508, 0.01
    %v549 = vmul.f32 %v509, 0.01
    %v550 = vmul.f32 %v510, 0.01
    %v551 = vmul.f32 %v511, 0.01
    %v552 = vmul.f32 %v512, 0.01
    %v553 = vmul.f32 %v513, 0.01
    %v554 = vmul.f32 %v514, 0.01
    %v555 = vmul.f32 %v515, 0.01
    %v556 = vsel %vm516, %v496, %v536
    %v557 = vsel %vm517, %v497, %v537
    %v558 = vsel %vm518, %v498, %v538
    %v559 = vsel %vm519, %v499, %v539
    %v560 = vsel %vm520, %v500, %v540
    %v561 = vsel %vm521, %v501, %v541
    %v562 = vsel %vm522, %v502, %v542
    %v563 = vsel %vm523, %v503, %v543
    %v564 = vsel %vm524, %v504, %v544
    %v565 = vsel %vm525, %v505, %v545
    %v566 = vsel %vm526, %v506, %v546
    %v567 = vsel %vm527, %v507, %v547
    %v568 = vsel %vm528, %v508, %v548
    %v569 = vsel %vm529, %v509, %v549
    %v570 = vsel %vm530, %v510, %v550
    %v571 = vsel %vm531, %v511, %v551
    %v572 = vsel %vm532, %v512, %v552
    %v573 = vsel %vm533, %v513, %v553
    %v574 = vsel %vm534, %v514, %v554
    %v575 = vsel %vm535, %v515, %v555
    %v576 = vpack.c.bf16 %v556, %v556
    %v577 = vpack.c.bf16 %v557, %v557
    %v578 = vpack.c.bf16 %v558, %v558
    %v579 = vpack.c.bf16 %v559, %v559
    %v580 = vpack.c.bf16 %v560, %v560
    %v581 = vpack.c.bf16 %v561, %v561
    %v582 = vpack.c.bf16 %v562, %v562
    %v583 = vpack.c.bf16 %v563, %v563
    %v584 = vpack.c.bf16 %v564, %v564
    %v585 = vpack.c.bf16 %v565, %v565
    %v586 = vpack.c.bf16 %v566, %v566
    %v587 = vpack.c.bf16 %v567, %v567
    %v588 = vpack.c.bf16 %v568, %v568
    %v589 = vpack.c.bf16 %v569, %v569
    %v590 = vpack.c.bf16 %v570, %v570
    %v591 = vpack.c.bf16 %v571, %v571
    %v592 = vpack.c.bf16 %v572, %v572
    %v593 = vpack.c.bf16 %v573, %v573
    %v594 = vpack.c.bf16 %v574, %v574
    %v595 = vpack.c.bf16 %v575, %v575
    %v596 = vld [vmem:[%s3] sm:$0xff]
    %v597 = vld [vmem:[%s3 + $0x8] sm:$0xff]
    %v598 = vld [vmem:[%s3 + $0x10] sm:$0xff]
    %v599 = vld [vmem:[%s3 + $0x18] sm:$0xff]
    %v600 = vld [vmem:[%s3 + $0x20] sm:$0xff]
    %v601 = vld [vmem:[%s3 + $0x28] sm:$0xff]
    %v602 = vld [vmem:[%s3 + $0x30] sm:$0xff]
    %v603 = vld [vmem:[%s3 + $0x38] sm:$0xff]
    %v624 = vunpack.c.l.b16 0
    %v625 = vunpack.c.l.b16 %v576
    %v626 = vunpack.c.l.b16 %v577
    %v627 = vunpack.c.l.b16 %v578
    %v628 = vunpack.c.l.b16 %v579
    %v629 = vunpack.c.l.b16 %v580
    %v630 = vunpack.c.l.b16 %v581
    %v631 = vunpack.c.l.b16 %v582
    %v632 = vunpack.c.l.b16 %v583
    %v633 = vunpack.c.l.b16 %v584
    %v634 = vunpack.c.l.b16 %v585
    %v635 = vunpack.c.l.b16 %v586
    %v636 = vunpack.c.l.b16 %v587
    %v637 = vunpack.c.l.b16 %v588
    %v638 = vunpack.c.l.b16 %v589
    %v639 = vunpack.c.l.b16 %v590
    %v640 = vunpack.c.l.b16 %v591
    %v641 = vunpack.c.l.b16 %v592
    %v642 = vunpack.c.l.b16 %v593
    %v643 = vunpack.c.l.b16 %v594
    %v644 = vpack.c.b16 %v625, %v624
    %v645 = vpack.c.b16 %v627, %v626
    %v646 = vpack.c.b16 %v629, %v628
    %v647 = vpack.c.b16 %v631, %v630
    %v648 = vpack.c.b16 %v633, %v632
    %v649 = vpack.c.b16 %v635, %v634
    %v650 = vpack.c.b16 %v637, %v636
    %v651 = vpack.c.b16 %v639, %v638
    %v652 = vpack.c.b16 %v641, %v640
    %v653 = vpack.c.b16 %v643, %v642
    %v662 = vunpack.c.l.b16 %v596
    %v663 = vunpack.c.h.b16 %v596
    %v664 = vunpack.c.l.b16 %v597
    %v665 = vunpack.c.h.b16 %v597
    %v666 = vunpack.c.l.b16 %v598
    %v667 = vunpack.c.h.b16 %v598
    %v668 = vunpack.c.l.b16 %v599
    %v669 = vunpack.c.h.b16 %v599
    %v670 = vunpack.c.l.b16 %v600
    %v671 = vunpack.c.h.b16 %v600
    %v672 = vunpack.c.l.b16 %v601
    %v673 = vunpack.c.h.b16 %v601
    %v674 = vunpack.c.l.b16 %v602
    %v675 = vunpack.c.h.b16 %v602
    %v676 = vunpack.c.l.b16 %v603
    %v677 = vunpack.c.h.b16 %v603
    %v678 = vpack.c.b16 %v664, %v662
    %v679 = vpack.c.b16 %v665, %v663
    %v680 = vpack.c.b16 %v668, %v666
    %v681 = vpack.c.b16 %v669, %v667
    %v682 = vpack.c.b16 %v672, %v670
    %v683 = vpack.c.b16 %v673, %v671
    %v684 = vpack.c.b16 %v676, %v674
    %v685 = vpack.c.b16 %v677, %v675
    %vm694 = vcmask 523264
    %v696 = vsel %vm694, %v644, 0
    %v699 = vsel %vm694, %v645, 0
    %v702 = vsel %vm694, %v646, 0
    %v705 = vsel %vm694, %v647, 0
    %v708 = vsel %vm694, %v648, 0
    %v711 = vsel %vm694, %v649, 0
    %v714 = vsel %vm694, %v650, 0
    %v717 = vsel %vm694, %v651, 0
    %v720 = vsel %vm694, %v652, 0
    %v723 = vsel %vm694, %v653, 0
    %725 = vmatprep.subr.bf16.mxu0 %v679
    %726 = vmatpush1.bf16.msra.mxu0 %v678
    %727 = vmatprep.subr.bf16.mxu0 %v681
    %728 = vmatpush1.bf16.msra.mxu0 %v680
    %729 = vmatprep.subr.bf16.mxu0 %v683
    %730 = vmatpush1.bf16.msra.mxu0 %v682
    %731 = vmatprep.subr.bf16.mxu0 %v685
    %732 = vmatpush1.bf16.msra.mxu0 %v684
    %733 = vmatprep.subr.bf16.mxu0 0
    %734 = vmatpush1.bf16.msra.mxu0 0
    %735 = vmatprep.subr.bf16.mxu0 0
    %736 = vmatpush1.bf16.msra.mxu0 0
    %737 = vmatprep.subr.bf16.mxu0 0
    %738 = vmatpush1.bf16.msra.mxu0 0
    %739 = vmatprep.subr.bf16.mxu0 0
    %740 = vmatpush1.bf16.msra.mxu0 0
    %741 = vmatprep.subr.bf16.mxu0 0
    %742 = vmatpush1.bf16.msra.mxu0 0
    %743 = vmatprep.subr.bf16.mxu0 0
    %744 = vmatpush1.bf16.msra.mxu0 0
    %745 = vmatprep.subr.bf16.mxu0 0
    %746 = vmatpush1.bf16.msra.mxu0 0
    %747 = vmatprep.subr.bf16.mxu0 0
    %748 = vmatpush1.bf16.msra.mxu0 0
    %749 = vmatprep.subr.bf16.mxu0 0
    %750 = vmatpush1.bf16.msra.mxu0 0
    %751 = vmatprep.subr.bf16.mxu0 0
    %752 = vmatpush1.bf16.msra.mxu0 0
    %753 = vmatprep.subr.bf16.mxu0 0
    %754 = vmatpush1.bf16.msra.mxu0 0
    %755 = vmatprep.subr.bf16.mxu0 0
    %756 = vmatpush1.bf16.msra.mxu0 0
    %757 = vmatprep.mubr.bf16.mxu0 0
    %758 = vmatmul.mubr.bf16.gmra.mrb[0].mxu0 %v696
    %v759 = vpop.f32.mrb[0].mxu0
    %v760 = vadd.f32 0.0, %v759
    %v761 = vpop.f32.mrb[0].mxu0
    %v762 = vadd.f32 0.0, %v761
    %v763 = vpop.f32.mrb[0].mxu0
    %v764 = vadd.f32 0.0, %v763
    %v765 = vpop.f32.mrb[0].mxu0
    %v766 = vadd.f32 0.0, %v765
    %767 = vmatprep.mubr.bf16.mxu0 0
    %768 = vmatmul.mubr.bf16.gmra.mrb[0].mxu0 %v699
    %v769 = vpop.f32.mrb[0].mxu0
    %v770 = vadd.f32 0.0, %v769
    %v771 = vpop.f32.mrb[0].mxu0
    %v772 = vadd.f32 0.0, %v771
    %v773 = vpop.f32.mrb[0].mxu0
    %v774 = vadd.f32 0.0, %v773
    %v775 = vpop.f32.mrb[0].mxu0
    %v776 = vadd.f32 0.0, %v775
    %777 = vmatprep.mubr.bf16.mxu0 0
    %778 = vmatmul.mubr.bf16.gmra.mrb[0].mxu0 %v702
    %v779 = vpop.f32.mrb[0].mxu0
    %v780 = vadd.f32 0.0, %v779
    %v781 = vpop.f32.mrb[0].mxu0
    %v782 = vadd.f32 0.0, %v781
    %v783 = vpop.f32.mrb[0].mxu0
    %v784 = vadd.f32 0.0, %v783
    %v785 = vpop.f32.mrb[0].mxu0
    %v786 = vadd.f32 0.0, %v785
    %787 = vmatprep.mubr.bf16.mxu0 0
    %788 = vmatmul.mubr.bf16.gmra.mrb[0].mxu0 %v705
    %v789 = vpop.f32.mrb[0].mxu0
    %v790 = vadd.f32 0.0, %v789
    %v791 = vpop.f32.mrb[0].mxu0
    %v792 = vadd.f32 0.0, %v791
    %v793 = vpop.f32.mrb[0].mxu0
    %v794 = vadd.f32 0.0, %v793
    %v795 = vpop.f32.mrb[0].mxu0
    %v796 = vadd.f32 0.0, %v795
    %797 = vmatprep.mubr.bf16.mxu0 0
    %798 = vmatmul.mubr.bf16.gmra.mrb[0].mxu0 %v708
    %v799 = vpop.f32.mrb[0].mxu0
    %v800 = vadd.f32 0.0, %v799
    %v801 = vpop.f32.mrb[0].mxu0
    %v802 = vadd.f32 0.0, %v801
    %v803 = vpop.f32.mrb[0].mxu0
    %v804 = vadd.f32 0.0, %v803
    %v805 = vpop.f32.mrb[0].mxu0
    %v806 = vadd.f32 0.0, %v805
    %807 = vmatprep.mubr.bf16.mxu0 0
    %808 = vmatmul.mubr.bf16.gmra.mrb[0].mxu0 %v711
    %v809 = vpop.f32.mrb[0].mxu0
    %v810 = vadd.f32 0.0, %v809
    %v811 = vpop.f32.mrb[0].mxu0
    %v812 = vadd.f32 0.0, %v811
    %v813 = vpop.f32.mrb[0].mxu0
    %v814 = vadd.f32 0.0, %v813
    %v815 = vpop.f32.mrb[0].mxu0
    %v816 = vadd.f32 0.0, %v815
    %817 = vmatprep.mubr.bf16.mxu0 0
    %818 = vmatmul.mubr.bf16.gmra.mrb[0].mxu0 %v714
    %v819 = vpop.f32.mrb[0].mxu0
    %v820 = vadd.f32 0.0, %v819
    %v821 = vpop.f32.mrb[0].mxu0
    %v822 = vadd.f32 0.0, %v821
    %v823 = vpop.f32.mrb[0].mxu0
    %v824 = vadd.f32 0.0, %v823
    %v825 = vpop.f32.mrb[0].mxu0
    %v826 = vadd.f32 0.0, %v825
    %827 = vmatprep.mubr.bf16.mxu0 0
    %828 = vmatmul.mubr.bf16.gmra.mrb[0].mxu0 %v717
    %v829 = vpop.f32.mrb[0].mxu0
    %v830 = vadd.f32 0.0, %v829
    %v831 = vpop.f32.mrb[0].mxu0
    %v832 = vadd.f32 0.0, %v831
    %v833 = vpop.f32.mrb[0].mxu0
    %v834 = vadd.f32 0.0, %v833
    %v835 = vpop.f32.mrb[0].mxu0
    %v836 = vadd.f32 0.0, %v835
    %837 = vmatprep.mubr.bf16.mxu0 0
    %838 = vmatmul.mubr.bf16.gmra.mrb[0].mxu0 %v720
    %v839 = vpop.f32.mrb[0].mxu0
    %v840 = vadd.f32 0.0, %v839
    %v841 = vpop.f32.mrb[0].mxu0
    %v842 = vadd.f32 0.0, %v841
    %v843 = vpop.f32.mrb[0].mxu0
    %v844 = vadd.f32 0.0, %v843
    %v845 = vpop.f32.mrb[0].mxu0
    %v846 = vadd.f32 0.0, %v845
    %847 = vmatprep.mubr.bf16.mxu0 0
    %848 = vmatmul.mubr.bf16.gmra.mrb[0].mxu0 %v723
    %v849 = vpop.f32.mrb[0].mxu0
    %v850 = vadd.f32 0.0, %v849
    %v851 = vpop.f32.mrb[0].mxu0
    %v852 = vadd.f32 0.0, %v851
    %v853 = vpop.f32.mrb[0].mxu0
    %v854 = vadd.f32 0.0, %v853
    %v855 = vpop.f32.mrb[0].mxu0
    %v856 = vadd.f32 0.0, %v855
    %857 = vdwg.mxu0
    %s858 = scalar_lea.vmem %s3, 64
    %v859 = vld [vmem:[%s858] sm:$0xff]
    %v860 = vld [vmem:[%s858 + $0x8] sm:$0xff]
    %v861 = vld [vmem:[%s858 + $0x10] sm:$0xff]
    %v862 = vld [vmem:[%s858 + $0x18] sm:$0xff]
    %v863 = vld [vmem:[%s858 + $0x20] sm:$0xff]
    %v864 = vld [vmem:[%s858 + $0x28] sm:$0xff]
    %v865 = vld [vmem:[%s858 + $0x30] sm:$0xff]
    %v866 = vld [vmem:[%s858 + $0x38] sm:$0xff]
    %v868 = vunpack.c.l.b16 %v595
    %v869 = vpack.c.b16 %v626, %v625
    %v870 = vpack.c.b16 %v628, %v627
    %v871 = vpack.c.b16 %v630, %v629
    %v872 = vpack.c.b16 %v632, %v631
    %v873 = vpack.c.b16 %v634, %v633
    %v874 = vpack.c.b16 %v636, %v635
    %v875 = vpack.c.b16 %v638, %v637
    %v876 = vpack.c.b16 %v640, %v639
    %v877 = vpack.c.b16 %v642, %v641
    %v878 = vpack.c.b16 %v868, %v643
    %v887 = vunpack.c.l.b16 %v859
    %v888 = vunpack.c.h.b16 %v859
    %v889 = vunpack.c.l.b16 %v860
    %v890 = vunpack.c.h.b16 %v860
    %v891 = vunpack.c.l.b16 %v861
    %v892 = vunpack.c.h.b16 %v861
    %v893 = vunpack.c.l.b16 %v862
    %v894 = vunpack.c.h.b16 %v862
    %v895 = vunpack.c.l.b16 %v863
    %v896 = vunpack.c.h.b16 %v863
    %v897 = vunpack.c.l.b16 %v864
    %v898 = vunpack.c.h.b16 %v864
    %v899 = vunpack.c.l.b16 %v865
    %v900 = vunpack.c.h.b16 %v865
    %v901 = vunpack.c.l.b16 %v866
    %v902 = vunpack.c.h.b16 %v866
    %v903 = vpack.c.b16 %v889, %v887
    %v904 = vpack.c.b16 %v890, %v888
    %v905 = vpack.c.b16 %v893, %v891
    %v906 = vpack.c.b16 %v894, %v892
    %v907 = vpack.c.b16 %v897, %v895
    %v908 = vpack.c.b16 %v898, %v896
    %v909 = vpack.c.b16 %v901, %v899
    %v910 = vpack.c.b16 %v902, %v900
    %v920 = vsel %vm694, %v869, 0
    %v923 = vsel %vm694, %v870, 0
    %v926 = vsel %vm694, %v871, 0
    %v929 = vsel %vm694, %v872, 0
    %v932 = vsel %vm694, %v873, 0
    %v935 = vsel %vm694, %v874, 0
    %v938 = vsel %vm694, %v875, 0
    %v941 = vsel %vm694, %v876, 0
    %v944 = vsel %vm694, %v877, 0
    %v947 = vsel %vm694, %v878, 0
    %949 = vmatprep.subr.bf16.mxu0 %v904
    %950 = vmatpush1.bf16.msra.mxu0 %v903
    %951 = vmatprep.subr.bf16.mxu0 %v906
    %952 = vmatpush1.bf16.msra.mxu0 %v905
    %953 = vmatprep.subr.bf16.mxu0 %v908
    %954 = vmatpush1.bf16.msra.mxu0 %v907
    %955 = vmatprep.subr.bf16.mxu0 %v910
    %956 = vmatpush1.bf16.msra.mxu0 %v909
    %957 = vmatprep.subr.bf16.mxu0 0
    %958 = vmatpush1.bf16.msra.mxu0 0
    %959 = vmatprep.subr.bf16.mxu0 0
    %960 = vmatpush1.bf16.msra.mxu0 0
    %961 = vmatprep.subr.bf16.mxu0 0
    %962 = vmatpush1.bf16.msra.mxu0 0
    %963 = vmatprep.subr.bf16.mxu0 0
    %964 = vmatpush1.bf16.msra.mxu0 0
    %965 = vmatprep.subr.bf16.mxu0 0
    %966 = vmatpush1.bf16.msra.mxu0 0
    %967 = vmatprep.subr.bf16.mxu0 0
    %968 = vmatpush1.bf16.msra.mxu0 0
    %969 = vmatprep.subr.bf16.mxu0 0
    %970 = vmatpush1.bf16.msra.mxu0 0
    %971 = vmatprep.subr.bf16.mxu0 0
    %972 = vmatpush1.bf16.msra.mxu0 0
    %973 = vmatprep.subr.bf16.mxu0 0
    %974 = vmatpush1.bf16.msra.mxu0 0
    %975 = vmatprep.subr.bf16.mxu0 0
    %976 = vmatpush1.bf16.msra.mxu0 0
    %977 = vmatprep.subr.bf16.mxu0 0
    %978 = vmatpush1.bf16.msra.mxu0 0
    %979 = vmatprep.subr.bf16.mxu0 0
    %980 = vmatpush1.bf16.msra.mxu0 0
    %981 = vmatprep.mubr.bf16.mxu0 0
    %982 = vmatmul.mubr.bf16.gmra.mrb[0].mxu0 %v920
    %v983 = vpop.f32.mrb[0].mxu0
    %v984 = vadd.f32 0.0, %v983
    %v985 = vpop.f32.mrb[0].mxu0
    %v986 = vadd.f32 0.0, %v985
    %v987 = vpop.f32.mrb[0].mxu0
    %v988 = vadd.f32 0.0, %v987
    %v989 = vpop.f32.mrb[0].mxu0
    %v990 = vadd.f32 0.0, %v989
    %991 = vmatprep.mubr.bf16.mxu0 0
    %992 = vmatmul.mubr.bf16.gmra.mrb[0].mxu0 %v923
    %v993 = vpop.f32.mrb[0].mxu0
    %v994 = vadd.f32 0.0, %v993
    %v995 = vpop.f32.mrb[0].mxu0
    %v996 = vadd.f32 0.0, %v995
    %v997 = vpop.f32.mrb[0].mxu0
    %v998 = vadd.f32 0.0, %v997
    %v999 = vpop.f32.mrb[0].mxu0
    %v1000 = vadd.f32 0.0, %v999
    %1001 = vmatprep.mubr.bf16.mxu0 0
    %1002 = vmatmul.mubr.bf16.gmra.mrb[0].mxu0 %v926
    %v1003 = vpop.f32.mrb[0].mxu0
    %v1004 = vadd.f32 0.0, %v1003
    %v1005 = vpop.f32.mrb[0].mxu0
    %v1006 = vadd.f32 0.0, %v1005
    %v1007 = vpop.f32.mrb[0].mxu0
    %v1008 = vadd.f32 0.0, %v1007
    %v1009 = vpop.f32.mrb[0].mxu0
    %v1010 = vadd.f32 0.0, %v1009
    %1011 = vmatprep.mubr.bf16.mxu0 0
    %1012 = vmatmul.mubr.bf16.gmra.mrb[0].mxu0 %v929
    %v1013 = vpop.f32.mrb[0].mxu0
    %v1014 = vadd.f32 0.0, %v1013
    %v1015 = vpop.f32.mrb[0].mxu0
    %v1016 = vadd.f32 0.0, %v1015
    %v1017 = vpop.f32.mrb[0].mxu0
    %v1018 = vadd.f32 0.0, %v1017
    %v1019 = vpop.f32.mrb[0].mxu0
    %v1020 = vadd.f32 0.0, %v1019
    %1021 = vmatprep.mubr.bf16.mxu0 0
    %1022 = vmatmul.mubr.bf16.gmra.mrb[0].mxu0 %v932
    %v1023 = vpop.f32.mrb[0].mxu0
    %v1024 = vadd.f32 0.0, %v1023
    %v1025 = vpop.f32.mrb[0].mxu0
    %v1026 = vadd.f32 0.0, %v1025
    %v1027 = vpop.f32.mrb[0].mxu0
    %v1028 = vadd.f32 0.0, %v1027
    %v1029 = vpop.f32.mrb[0].mxu0
    %v1030 = vadd.f32 0.0, %v1029
    %1031 = vmatprep.mubr.bf16.mxu0 0
    %1032 = vmatmul.mubr.bf16.gmra.mrb[0].mxu0 %v935
    %v1033 = vpop.f32.mrb[0].mxu0
    %v1034 = vadd.f32 0.0, %v1033
    %v1035 = vpop.f32.mrb[0].mxu0
    %v1036 = vadd.f32 0.0, %v1035
    %v1037 = vpop.f32.mrb[0].mxu0
    %v1038 = vadd.f32 0.0, %v1037
    %v1039 = vpop.f32.mrb[0].mxu0
    %v1040 = vadd.f32 0.0, %v1039
    %1041 = vmatprep.mubr.bf16.mxu0 0
    %1042 = vmatmul.mubr.bf16.gmra.mrb[0].mxu0 %v938
    %v1043 = vpop.f32.mrb[0].mxu0
    %v1044 = vadd.f32 0.0, %v1043
    %v1045 = vpop.f32.mrb[0].mxu0
    %v1046 = vadd.f32 0.0, %v1045
    %v1047 = vpop.f32.mrb[0].mxu0
    %v1048 = vadd.f32 0.0, %v1047
    %v1049 = vpop.f32.mrb[0].mxu0
    %v1050 = vadd.f32 0.0, %v1049
    %1051 = vmatprep.mubr.bf16.mxu0 0
    %1052 = vmatmul.mubr.bf16.gmra.mrb[0].mxu0 %v941
    %v1053 = vpop.f32.mrb[0].mxu0
    %v1054 = vadd.f32 0.0, %v1053
    %v1055 = vpop.f32.mrb[0].mxu0
    %v1056 = vadd.f32 0.0, %v1055
    %v1057 = vpop.f32.mrb[0].mxu0
    %v1058 = vadd.f32 0.0, %v1057
    %v1059 = vpop.f32.mrb[0].mxu0
    %v1060 = vadd.f32 0.0, %v1059
    %1061 = vmatprep.mubr.bf16.mxu0 0
    %1062 = vmatmul.mubr.bf16.gmra.mrb[0].mxu0 %v944
    %v1063 = vpop.f32.mrb[0].mxu0
    %v1064 = vadd.f32 0.0, %v1063
    %v1065 = vpop.f32.mrb[0].mxu0
    %v1066 = vadd.f32 0.0, %v1065
    %v1067 = vpop.f32.mrb[0].mxu0
    %v1068 = vadd.f32 0.0, %v1067
    %v1069 = vpop.f32.mrb[0].mxu0
    %v1070 = vadd.f32 0.0, %v1069
    %1071 = vmatprep.mubr.bf16.mxu0 0
    %1072 = vmatmul.mubr.bf16.gmra.mrb[0].mxu0 %v947
    %v1073 = vpop.f32.mrb[0].mxu0
    %v1074 = vadd.f32 0.0, %v1073
    %v1075 = vpop.f32.mrb[0].mxu0
    %v1076 = vadd.f32 0.0, %v1075
    %v1077 = vpop.f32.mrb[0].mxu0
    %v1078 = vadd.f32 0.0, %v1077
    %v1079 = vpop.f32.mrb[0].mxu0
    %v1080 = vadd.f32 0.0, %v1079
    %1081 = vdwg.mxu0
    %v1082 = vadd.f32 %v760, %v984
    %v1083 = vadd.f32 %v762, %v986
    %v1084 = vadd.f32 %v764, %v988
    %v1085 = vadd.f32 %v766, %v990
    %v1086 = vadd.f32 %v770, %v994
    %v1087 = vadd.f32 %v772, %v996
    %v1088 = vadd.f32 %v774, %v998
    %v1089 = vadd.f32 %v776, %v1000
    %v1090 = vadd.f32 %v780, %v1004
    %v1091 = vadd.f32 %v782, %v1006
    %v1092 = vadd.f32 %v784, %v1008
    %v1093 = vadd.f32 %v786, %v1010
    %v1094 = vadd.f32 %v790, %v1014
    %v1095 = vadd.f32 %v792, %v1016
    %v1096 = vadd.f32 %v794, %v1018
    %v1097 = vadd.f32 %v796, %v1020
    %v1098 = vadd.f32 %v800, %v1024
    %v1099 = vadd.f32 %v802, %v1026
    %v1100 = vadd.f32 %v804, %v1028
    %v1101 = vadd.f32 %v806, %v1030
    %v1102 = vadd.f32 %v810, %v1034
    %v1103 = vadd.f32 %v812, %v1036
    %v1104 = vadd.f32 %v814, %v1038
    %v1105 = vadd.f32 %v816, %v1040
    %v1106 = vadd.f32 %v820, %v1044
    %v1107 = vadd.f32 %v822, %v1046
    %v1108 = vadd.f32 %v824, %v1048
    %v1109 = vadd.f32 %v826, %v1050
    %v1110 = vadd.f32 %v830, %v1054
    %v1111 = vadd.f32 %v832, %v1056
    %v1112 = vadd.f32 %v834, %v1058
    %v1113 = vadd.f32 %v836, %v1060
    %v1114 = vadd.f32 %v840, %v1064
    %v1115 = vadd.f32 %v842, %v1066
    %v1116 = vadd.f32 %v844, %v1068
    %v1117 = vadd.f32 %v846, %v1070
    %v1118 = vadd.f32 %v850, %v1074
    %v1119 = vadd.f32 %v852, %v1076
    %v1120 = vadd.f32 %v854, %v1078
    %v1121 = vadd.f32 %v856, %v1080
    %s1122 = scalar_lea.vmem %s3, 128
    %v1123 = vld [vmem:[%s1122] sm:$0xff]
    %v1124 = vld [vmem:[%s1122 + $0x8] sm:$0xff]
    %v1125 = vld [vmem:[%s1122 + $0x10] sm:$0xff]
    %v1126 = vld [vmem:[%s1122 + $0x18] sm:$0xff]
    %v1127 = vld [vmem:[%s1122 + $0x20] sm:$0xff]
    %v1128 = vld [vmem:[%s1122 + $0x28] sm:$0xff]
    %v1129 = vld [vmem:[%s1122 + $0x30] sm:$0xff]
    %v1130 = vld [vmem:[%s1122 + $0x38] sm:$0xff]
    %v1131 = vpack.c.b16 %v624, %v868
    %v1140 = vunpack.c.l.b16 %v1123
    %v1141 = vunpack.c.h.b16 %v1123
    %v1142 = vunpack.c.l.b16 %v1124
    %v1143 = vunpack.c.h.b16 %v1124
    %v1144 = vunpack.c.l.b16 %v1125
    %v1145 = vunpack.c.h.b16 %v1125
    %v1146 = vunpack.c.l.b16 %v1126
    %v1147 = vunpack.c.h.b16 %v1126
    %v1148 = vunpack.c.l.b16 %v1127
    %v1149 = vunpack.c.h.b16 %v1127
    %v1150 = vunpack.c.l.b16 %v1128
    %v1151 = vunpack.c.h.b16 %v1128
    %v1152 = vunpack.c.l.b16 %v1129
    %v1153 = vunpack.c.h.b16 %v1129
    %v1154 = vunpack.c.l.b16 %v1130
    %v1155 = vunpack.c.h.b16 %v1130
    %v1156 = vpack.c.b16 %v1142, %v1140
    %v1157 = vpack.c.b16 %v1143, %v1141
    %v1158 = vpack.c.b16 %v1146, %v1144
    %v1159 = vpack.c.b16 %v1147, %v1145
    %v1160 = vpack.c.b16 %v1150, %v1148
    %v1161 = vpack.c.b16 %v1151, %v1149
    %v1162 = vpack.c.b16 %v1154, %v1152
    %v1163 = vpack.c.b16 %v1155, %v1153
    %v1173 = vsel %vm694, %v1131, 0
    %1175 = vmatprep.subr.bf16.mxu0 %v1157
    %1176 = vmatpush1.bf16.msra.mxu0 %v1156
    %1177 = vmatprep.subr.bf16.mxu0 %v1159
    %1178 = vmatpush1.bf16.msra.mxu0 %v1158
    %1179 = vmatprep.subr.bf16.mxu0 %v1161
    %1180 = vmatpush1.bf16.msra.mxu0 %v1160
    %1181 = vmatprep.subr.bf16.mxu0 %v1163
    %1182 = vmatpush1.bf16.msra.mxu0 %v1162
    %1183 = vmatprep.subr.bf16.mxu0 0
    %1184 = vmatpush1.bf16.msra.mxu0 0
    %1185 = vmatprep.subr.bf16.mxu0 0
    %1186 = vmatpush1.bf16.msra.mxu0 0
    %1187 = vmatprep.subr.bf16.mxu0 0
    %1188 = vmatpush1.bf16.msra.mxu0 0
    %1189 = vmatprep.subr.bf16.mxu0 0
    %1190 = vmatpush1.bf16.msra.mxu0 0
    %1191 = vmatprep.subr.bf16.mxu0 0
    %1192 = vmatpush1.bf16.msra.mxu0 0
    %1193 = vmatprep.subr.bf16.mxu0 0
    %1194 = vmatpush1.bf16.msra.mxu0 0
    %1195 = vmatprep.subr.bf16.mxu0 0
    %1196 = vmatpush1.bf16.msra.mxu0 0
    %1197 = vmatprep.subr.bf16.mxu0 0
    %1198 = vmatpush1.bf16.msra.mxu0 0
    %1199 = vmatprep.subr.bf16.mxu0 0
    %1200 = vmatpush1.bf16.msra.mxu0 0
    %1201 = vmatprep.subr.bf16.mxu0 0
    %1202 = vmatpush1.bf16.msra.mxu0 0
    %1203 = vmatprep.subr.bf16.mxu0 0
    %1204 = vmatpush1.bf16.msra.mxu0 0
    %1205 = vmatprep.subr.bf16.mxu0 0
    %1206 = vmatpush1.bf16.msra.mxu0 0
    %1207 = vmatprep.mubr.bf16.mxu0 0
    %1208 = vmatmul.mubr.bf16.gmra.mrb[0].mxu0 %v699
    %v1209 = vpop.f32.mrb[0].mxu0
    %v1210 = vadd.f32 0.0, %v1209
    %v1211 = vpop.f32.mrb[0].mxu0
    %v1212 = vadd.f32 0.0, %v1211
    %v1213 = vpop.f32.mrb[0].mxu0
    %v1214 = vadd.f32 0.0, %v1213
    %v1215 = vpop.f32.mrb[0].mxu0
    %v1216 = vadd.f32 0.0, %v1215
    %1217 = vmatprep.mubr.bf16.mxu0 0
    %1218 = vmatmul.mubr.bf16.gmra.mrb[0].mxu0 %v702
    %v1219 = vpop.f32.mrb[0].mxu0
    %v1220 = vadd.f32 0.0, %v1219
    %v1221 = vpop.f32.mrb[0].mxu0
    %v1222 = vadd.f32 0.0, %v1221
    %v1223 = vpop.f32.mrb[0].mxu0
    %v1224 = vadd.f32 0.0, %v1223
    %v1225 = vpop.f32.mrb[0].mxu0
    %v1226 = vadd.f32 0.0, %v1225
    %1227 = vmatprep.mubr.bf16.mxu0 0
    %1228 = vmatmul.mubr.bf16.gmra.mrb[0].mxu0 %v705
    %v1229 = vpop.f32.mrb[0].mxu0
    %v1230 = vadd.f32 0.0, %v1229
    %v1231 = vpop.f32.mrb[0].mxu0
    %v1232 = vadd.f32 0.0, %v1231
    %v1233 = vpop.f32.mrb[0].mxu0
    %v1234 = vadd.f32 0.0, %v1233
    %v1235 = vpop.f32.mrb[0].mxu0
    %v1236 = vadd.f32 0.0, %v1235
    %1237 = vmatprep.mubr.bf16.mxu0 0
    %1238 = vmatmul.mubr.bf16.gmra.mrb[0].mxu0 %v708
    %v1239 = vpop.f32.mrb[0].mxu0
    %v1240 = vadd.f32 0.0, %v1239
    %v1241 = vpop.f32.mrb[0].mxu0
    %v1242 = vadd.f32 0.0, %v1241
    %v1243 = vpop.f32.mrb[0].mxu0
    %v1244 = vadd.f32 0.0, %v1243
    %v1245 = vpop.f32.mrb[0].mxu0
    %v1246 = vadd.f32 0.0, %v1245
    %1247 = vmatprep.mubr.bf16.mxu0 0
    %1248 = vmatmul.mubr.bf16.gmra.mrb[0].mxu0 %v711
    %v1249 = vpop.f32.mrb[0].mxu0
    %v1250 = vadd.f32 0.0, %v1249
    %v1251 = vpop.f32.mrb[0].mxu0
    %v1252 = vadd.f32 0.0, %v1251
    %v1253 = vpop.f32.mrb[0].mxu0
    %v1254 = vadd.f32 0.0, %v1253
    %v1255 = vpop.f32.mrb[0].mxu0
    %v1256 = vadd.f32 0.0, %v1255
    %1257 = vmatprep.mubr.bf16.mxu0 0
    %1258 = vmatmul.mubr.bf16.gmra.mrb[0].mxu0 %v714
    %v1259 = vpop.f32.mrb[0].mxu0
    %v1260 = vadd.f32 0.0, %v1259
    %v1261 = vpop.f32.mrb[0].mxu0
    %v1262 = vadd.f32 0.0, %v1261
    %v1263 = vpop.f32.mrb[0].mxu0
    %v1264 = vadd.f32 0.0, %v1263
    %v1265 = vpop.f32.mrb[0].mxu0
    %v1266 = vadd.f32 0.0, %v1265
    %1267 = vmatprep.mubr.bf16.mxu0 0
    %1268 = vmatmul.mubr.bf16.gmra.mrb[0].mxu0 %v717
    %v1269 = vpop.f32.mrb[0].mxu0
    %v1270 = vadd.f32 0.0, %v1269
    %v1271 = vpop.f32.mrb[0].mxu0
    %v1272 = vadd.f32 0.0, %v1271
    %v1273 = vpop.f32.mrb[0].mxu0
    %v1274 = vadd.f32 0.0, %v1273
    %v1275 = vpop.f32.mrb[0].mxu0
    %v1276 = vadd.f32 0.0, %v1275
    %1277 = vmatprep.mubr.bf16.mxu0 0
    %1278 = vmatmul.mubr.bf16.gmra.mrb[0].mxu0 %v720
    %v1279 = vpop.f32.mrb[0].mxu0
    %v1280 = vadd.f32 0.0, %v1279
    %v1281 = vpop.f32.mrb[0].mxu0
    %v1282 = vadd.f32 0.0, %v1281
    %v1283 = vpop.f32.mrb[0].mxu0
    %v1284 = vadd.f32 0.0, %v1283
    %v1285 = vpop.f32.mrb[0].mxu0
    %v1286 = vadd.f32 0.0, %v1285
    %1287 = vmatprep.mubr.bf16.mxu0 0
    %1288 = vmatmul.mubr.bf16.gmra.mrb[0].mxu0 %v723
    %v1289 = vpop.f32.mrb[0].mxu0
    %v1290 = vadd.f32 0.0, %v1289
    %v1291 = vpop.f32.mrb[0].mxu0
    %v1292 = vadd.f32 0.0, %v1291
    %v1293 = vpop.f32.mrb[0].mxu0
    %v1294 = vadd.f32 0.0, %v1293
    %v1295 = vpop.f32.mrb[0].mxu0
    %v1296 = vadd.f32 0.0, %v1295
    %1297 = vmatprep.mubr.bf16.mxu0 0
    %1298 = vmatmul.mubr.bf16.gmra.mrb[0].mxu0 %v1173
    %v1299 = vpop.f32.mrb[0].mxu0
    %v1300 = vadd.f32 0.0, %v1299
    %v1301 = vpop.f32.mrb[0].mxu0
    %v1302 = vadd.f32 0.0, %v1301
    %v1303 = vpop.f32.mrb[0].mxu0
    %v1304 = vadd.f32 0.0, %v1303
    %v1305 = vpop.f32.mrb[0].mxu0
    %v1306 = vadd.f32 0.0, %v1305
    %1307 = vdwg.mxu0
    %v1308 = vadd.f32 %v1082, %v1210
    %v1309 = vadd.f32 %v1083, %v1212
    %v1310 = vadd.f32 %v1084, %v1214
    %v1311 = vadd.f32 %v1085, %v1216
    %v1312 = vadd.f32 %v1086, %v1220
    %v1313 = vadd.f32 %v1087, %v1222
    %v1314 = vadd.f32 %v1088, %v1224
    %v1315 = vadd.f32 %v1089, %v1226
    %v1316 = vadd.f32 %v1090, %v1230
    %v1317 = vadd.f32 %v1091, %v1232
    %v1318 = vadd.f32 %v1092, %v1234
    %v1319 = vadd.f32 %v1093, %v1236
    %v1320 = vadd.f32 %v1094, %v1240
    %v1321 = vadd.f32 %v1095, %v1242
    %v1322 = vadd.f32 %v1096, %v1244
    %v1323 = vadd.f32 %v1097, %v1246
    %v1324 = vadd.f32 %v1098, %v1250
    %v1325 = vadd.f32 %v1099, %v1252
    %v1326 = vadd.f32 %v1100, %v1254
    %v1327 = vadd.f32 %v1101, %v1256
    %v1328 = vadd.f32 %v1102, %v1260
    %v1329 = vadd.f32 %v1103, %v1262
    %v1330 = vadd.f32 %v1104, %v1264
    %v1331 = vadd.f32 %v1105, %v1266
    %v1332 = vadd.f32 %v1106, %v1270
    %v1333 = vadd.f32 %v1107, %v1272
    %v1334 = vadd.f32 %v1108, %v1274
    %v1335 = vadd.f32 %v1109, %v1276
    %v1336 = vadd.f32 %v1110, %v1280
    %v1337 = vadd.f32 %v1111, %v1282
    %v1338 = vadd.f32 %v1112, %v1284
    %v1339 = vadd.f32 %v1113, %v1286
    %v1340 = vadd.f32 %v1114, %v1290
    %v1341 = vadd.f32 %v1115, %v1292
    %v1342 = vadd.f32 %v1116, %v1294
    %v1343 = vadd.f32 %v1117, %v1296
    %v1344 = vadd.f32 %v1118, %v1300
    %v1345 = vadd.f32 %v1119, %v1302
    %v1346 = vadd.f32 %v1120, %v1304
    %v1347 = vadd.f32 %v1121, %v1306
    %v1348 = vmax.f32 %v1308, %v1310
    %v1349 = vmax.f32 %v1309, %v1311
    %v1350 = vmax.f32 %v1312, %v1314
    %v1351 = vmax.f32 %v1313, %v1315
    %v1352 = vmax.f32 %v1316, %v1318
    %v1353 = vmax.f32 %v1317, %v1319
    %v1354 = vmax.f32 %v1320, %v1322
    %v1355 = vmax.f32 %v1321, %v1323
    %v1356 = vmax.f32 %v1324, %v1326
    %v1357 = vmax.f32 %v1325, %v1327
    %v1358 = vmax.f32 %v1328, %v1330
    %v1359 = vmax.f32 %v1329, %v1331
    %v1360 = vmax.f32 %v1332, %v1334
    %v1361 = vmax.f32 %v1333, %v1335
    %v1362 = vmax.f32 %v1336, %v1338
    %v1363 = vmax.f32 %v1337, %v1339
    %v1364 = vmax.f32 %v1340, %v1342
    %v1365 = vmax.f32 %v1341, %v1343
    %v1366 = vmax.f32 %v1344, %v1346
    %v1367 = vmax.f32 %v1345, %v1347
    %v1368 = vld [vmem:[%s4] sm:$0x3]
    %v1370 = vlaneseq
    %v1371 = vshrl.u32 %v1370, 7
    %v1372 = vsub.s32 0, %v1371
    %v1373 = vrot.slane %v1368, %v1372
    %v1374 = vlaneseq
    %v1375 = vshrl.u32 %v1374, 7
    %v1376 = vsub.s32 1, %v1375
    %v1377 = vrot.slane %v1368, %v1376
    %v1380 = vadd.f32 %v1348, %v1373
    %v1381 = vadd.f32 %v1349, %v1377
    %v1382 = vadd.f32 %v1350, %v1373
    %v1383 = vadd.f32 %v1351, %v1377
    %v1384 = vadd.f32 %v1352, %v1373
    %v1385 = vadd.f32 %v1353, %v1377
    %v1386 = vadd.f32 %v1354, %v1373
    %v1387 = vadd.f32 %v1355, %v1377
    %v1388 = vadd.f32 %v1356, %v1373
    %v1389 = vadd.f32 %v1357, %v1377
    %v1390 = vadd.f32 %v1358, %v1373
    %v1391 = vadd.f32 %v1359, %v1377
    %v1392 = vadd.f32 %v1360, %v1373
    %v1393 = vadd.f32 %v1361, %v1377
    %v1394 = vadd.f32 %v1362, %v1373
    %v1395 = vadd.f32 %v1363, %v1377
    %v1396 = vadd.f32 %v1364, %v1373
    %v1397 = vadd.f32 %v1365, %v1377
    %v1398 = vadd.f32 %v1366, %v1373
    %v1399 = vadd.f32 %v1367, %v1377
    %vm1400 = vcmp.gt.f32.partialorder %v1380, 0.0
    %vm1401 = vcmp.gt.f32.partialorder %v1381, 0.0
    %vm1402 = vcmp.gt.f32.partialorder %v1382, 0.0
    %vm1403 = vcmp.gt.f32.partialorder %v1383, 0.0
    %vm1404 = vcmp.gt.f32.partialorder %v1384, 0.0
    %vm1405 = vcmp.gt.f32.partialorder %v1385, 0.0
    %vm1406 = vcmp.gt.f32.partialorder %v1386, 0.0
    %vm1407 = vcmp.gt.f32.partialorder %v1387, 0.0
    %vm1408 = vcmp.gt.f32.partialorder %v1388, 0.0
    %vm1409 = vcmp.gt.f32.partialorder %v1389, 0.0
    %vm1410 = vcmp.gt.f32.partialorder %v1390, 0.0
    %vm1411 = vcmp.gt.f32.partialorder %v1391, 0.0
    %vm1412 = vcmp.gt.f32.partialorder %v1392, 0.0
    %vm1413 = vcmp.gt.f32.partialorder %v1393, 0.0
    %vm1414 = vcmp.gt.f32.partialorder %v1394, 0.0
    %vm1415 = vcmp.gt.f32.partialorder %v1395, 0.0
    %vm1416 = vcmp.gt.f32.partialorder %v1396, 0.0
    %vm1417 = vcmp.gt.f32.partialorder %v1397, 0.0
    %vm1418 = vcmp.gt.f32.partialorder %v1398, 0.0
    %vm1419 = vcmp.gt.f32.partialorder %v1399, 0.0
    %v1420 = vmul.f32 %v1380, 0.01
    %v1421 = vmul.f32 %v1381, 0.01
    %v1422 = vmul.f32 %v1382, 0.01
    %v1423 = vmul.f32 %v1383, 0.01
    %v1424 = vmul.f32 %v1384, 0.01
    %v1425 = vmul.f32 %v1385, 0.01
    %v1426 = vmul.f32 %v1386, 0.01
    %v1427 = vmul.f32 %v1387, 0.01
    %v1428 = vmul.f32 %v1388, 0.01
    %v1429 = vmul.f32 %v1389, 0.01
    %v1430 = vmul.f32 %v1390, 0.01
    %v1431 = vmul.f32 %v1391, 0.01
    %v1432 = vmul.f32 %v1392, 0.01
    %v1433 = vmul.f32 %v1393, 0.01
    %v1434 = vmul.f32 %v1394, 0.01
    %v1435 = vmul.f32 %v1395, 0.01
    %v1436 = vmul.f32 %v1396, 0.01
    %v1437 = vmul.f32 %v1397, 0.01
    %v1438 = vmul.f32 %v1398, 0.01
    %v1439 = vmul.f32 %v1399, 0.01
    %v1440 = vsel %vm1400, %v1380, %v1420
    %v1441 = vsel %vm1401, %v1381, %v1421
    %v1442 = vsel %vm1402, %v1382, %v1422
    %v1443 = vsel %vm1403, %v1383, %v1423
    %v1444 = vsel %vm1404, %v1384, %v1424
    %v1445 = vsel %vm1405, %v1385, %v1425
    %v1446 = vsel %vm1406, %v1386, %v1426
    %v1447 = vsel %vm1407, %v1387, %v1427
    %v1448 = vsel %vm1408, %v1388, %v1428
    %v1449 = vsel %vm1409, %v1389, %v1429
    %v1450 = vsel %vm1410, %v1390, %v1430
    %v1451 = vsel %vm1411, %v1391, %v1431
    %v1452 = vsel %vm1412, %v1392, %v1432
    %v1453 = vsel %vm1413, %v1393, %v1433
    %v1454 = vsel %vm1414, %v1394, %v1434
    %v1455 = vsel %vm1415, %v1395, %v1435
    %v1456 = vsel %vm1416, %v1396, %v1436
    %v1457 = vsel %vm1417, %v1397, %v1437
    %v1458 = vsel %vm1418, %v1398, %v1438
    %v1459 = vsel %vm1419, %v1399, %v1439
    %v1460 = vpack.c.bf16 %v1440, %v1440
    %v1461 = vpack.c.bf16 %v1441, %v1441
    %v1462 = vpack.c.bf16 %v1442, %v1442
    %v1463 = vpack.c.bf16 %v1443, %v1443
    %v1464 = vpack.c.bf16 %v1444, %v1444
    %v1465 = vpack.c.bf16 %v1445, %v1445
    %v1466 = vpack.c.bf16 %v1446, %v1446
    %v1467 = vpack.c.bf16 %v1447, %v1447
    %v1468 = vpack.c.bf16 %v1448, %v1448
    %v1469 = vpack.c.bf16 %v1449, %v1449
    %v1470 = vpack.c.bf16 %v1450, %v1450
    %v1471 = vpack.c.bf16 %v1451, %v1451
    %v1472 = vpack.c.bf16 %v1452, %v1452
    %v1473 = vpack.c.bf16 %v1453, %v1453
    %v1474 = vpack.c.bf16 %v1454, %v1454
    %v1475 = vpack.c.bf16 %v1455, %v1455
    %v1476 = vpack.c.bf16 %v1456, %v1456
    %v1477 = vpack.c.bf16 %v1457, %v1457
    %v1478 = vpack.c.bf16 %v1458, %v1458
    %v1479 = vpack.c.bf16 %v1459, %v1459
    %v1480 = vld [vmem:[#allocation3] sm:$0xf]
    %v1481 = vld [vmem:[#allocation3 + $0x4] sm:$0xf]
    %v1482 = vld [vmem:[#allocation3 + $0x8] sm:$0xf]
    %v1483 = vld [vmem:[#allocation3 + $0xc] sm:$0xf]
    %v1484 = vld [vmem:[#allocation3 + $0x10] sm:$0xf]
    %v1485 = vld [vmem:[#allocation3 + $0x14] sm:$0xf]
    %v1486 = vld [vmem:[#allocation3 + $0x18] sm:$0xf]
    %v1487 = vld [vmem:[#allocation3 + $0x1c] sm:$0xf]
    %v1488 = vld [vmem:[#allocation3 + $0x20] sm:$0xf]
    %v1489 = vld [vmem:[#allocation3 + $0x24] sm:$0xf]
    %v1490 = vld [vmem:[#allocation3 + $0x28] sm:$0xf]
    %v1491 = vld [vmem:[#allocation3 + $0x2c] sm:$0xf]
    %v1492 = vld [vmem:[#allocation3 + $0x30] sm:$0xf]
    %v1493 = vld [vmem:[#allocation3 + $0x34] sm:$0xf]
    %v1494 = vld [vmem:[#allocation3 + $0x38] sm:$0xf]
    %v1495 = vld [vmem:[#allocation3 + $0x3c] sm:$0xf]
    %v1496 = vld [vmem:[#allocation3 + $0x40] sm:$0xf]
    %v1497 = vld [vmem:[#allocation3 + $0x44] sm:$0xf]
    %v1498 = vld [vmem:[#allocation3 + $0x48] sm:$0xf]
    %v1499 = vld [vmem:[#allocation3 + $0x4c] sm:$0xf]
    %v1500 = vld [vmem:[#allocation3 + $0x50] sm:$0xf]
    %v1501 = vld [vmem:[#allocation3 + $0x54] sm:$0xf]
    %v1502 = vld [vmem:[#allocation3 + $0x58] sm:$0xf]
    %v1503 = vld [vmem:[#allocation3 + $0x5c] sm:$0xf]
    %v1504 = vld [vmem:[#allocation3 + $0x60] sm:$0xf]
    %v1505 = vld [vmem:[#allocation3 + $0x64] sm:$0xf]
    %v1506 = vld [vmem:[#allocation3 + $0x68] sm:$0xf]
    %v1507 = vld [vmem:[#allocation3 + $0x6c] sm:$0xf]
    %v1508 = vld [vmem:[#allocation3 + $0x70] sm:$0xf]
    %v1509 = vld [vmem:[#allocation3 + $0x74] sm:$0xf]
    %v1510 = vld [vmem:[#allocation3 + $0x78] sm:$0xf]
    %v1511 = vld [vmem:[#allocation3 + $0x7c] sm:$0xf]
    %s1512 = scalar_lea.vmem [#allocation3], 128
    %v1513 = vld [vmem:[%s1512] sm:$0xf]
    %v1514 = vld [vmem:[%s1512 + $0x4] sm:$0xf]
    %v1515 = vld [vmem:[%s1512 + $0x8] sm:$0xf]
    %v1516 = vld [vmem:[%s1512 + $0xc] sm:$0xf]
    %v1517 = vld [vmem:[%s1512 + $0x10] sm:$0xf]
    %v1518 = vld [vmem:[%s1512 + $0x14] sm:$0xf]
    %v1519 = vld [vmem:[%s1512 + $0x18] sm:$0xf]
    %v1520 = vld [vmem:[%s1512 + $0x1c] sm:$0xf]
    %v1521 = vld [vmem:[%s1512 + $0x20] sm:$0xf]
    %v1522 = vld [vmem:[%s1512 + $0x24] sm:$0xf]
    %v1523 = vld [vmem:[%s1512 + $0x28] sm:$0xf]
    %v1524 = vld [vmem:[%s1512 + $0x2c] sm:$0xf]
    %v1525 = vld [vmem:[%s1512 + $0x30] sm:$0xf]
    %v1526 = vld [vmem:[%s1512 + $0x34] sm:$0xf]
    %v1527 = vld [vmem:[%s1512 + $0x38] sm:$0xf]
    %v1528 = vld [vmem:[%s1512 + $0x3c] sm:$0xf]
    %v1529 = vld [vmem:[%s1512 + $0x40] sm:$0xf]
    %v1530 = vld [vmem:[%s1512 + $0x44] sm:$0xf]
    %v1531 = vld [vmem:[%s1512 + $0x48] sm:$0xf]
    %v1532 = vld [vmem:[%s1512 + $0x4c] sm:$0xf]
    %v1533 = vld [vmem:[%s1512 + $0x50] sm:$0xf]
    %v1534 = vld [vmem:[%s1512 + $0x54] sm:$0xf]
    %v1535 = vld [vmem:[%s1512 + $0x58] sm:$0xf]
    %v1536 = vld [vmem:[%s1512 + $0x5c] sm:$0xf]
    %v1537 = vld [vmem:[%s1512 + $0x60] sm:$0xf]
    %v1538 = vld [vmem:[%s1512 + $0x64] sm:$0xf]
    %v1539 = vld [vmem:[%s1512 + $0x68] sm:$0xf]
    %v1540 = vld [vmem:[%s1512 + $0x6c] sm:$0xf]
    %v1541 = vld [vmem:[%s1512 + $0x70] sm:$0xf]
    %v1542 = vld [vmem:[%s1512 + $0x74] sm:$0xf]
    %v1543 = vld [vmem:[%s1512 + $0x78] sm:$0xf]
    %v1544 = vld [vmem:[%s1512 + $0x7c] sm:$0xf]
    %v1577 = vunpack.c.l.b16 %v1513
    %v1578 = vunpack.c.l.b16 %v1514
    %v1579 = vunpack.c.l.b16 %v1515
    %v1580 = vunpack.c.l.b16 %v1516
    %v1581 = vunpack.c.l.b16 %v1517
    %v1582 = vunpack.c.l.b16 %v1518
    %v1583 = vunpack.c.l.b16 %v1519
    %v1584 = vunpack.c.l.b16 %v1520
    %v1585 = vunpack.c.l.b16 %v1521
    %v1586 = vunpack.c.l.b16 %v1522
    %v1587 = vunpack.c.l.b16 %v1523
    %v1588 = vunpack.c.l.b16 %v1524
    %v1589 = vunpack.c.l.b16 %v1525
    %v1590 = vunpack.c.l.b16 %v1526
    %v1591 = vunpack.c.l.b16 %v1527
    %v1592 = vunpack.c.l.b16 %v1528
    %v1593 = vunpack.c.l.b16 %v1529
    %v1594 = vunpack.c.l.b16 %v1530
    %v1595 = vunpack.c.l.b16 %v1531
    %v1596 = vunpack.c.l.b16 %v1532
    %v1597 = vunpack.c.l.b16 %v1533
    %v1598 = vunpack.c.l.b16 %v1534
    %v1599 = vunpack.c.l.b16 %v1535
    %v1600 = vunpack.c.l.b16 %v1536
    %v1601 = vunpack.c.l.b16 %v1537
    %v1602 = vunpack.c.l.b16 %v1538
    %v1603 = vunpack.c.l.b16 %v1539
    %v1604 = vunpack.c.l.b16 %v1540
    %v1605 = vunpack.c.l.b16 %v1541
    %v1606 = vunpack.c.l.b16 %v1542
    %v1607 = vunpack.c.l.b16 %v1543
    %v1608 = vunpack.c.l.b16 %v1544
    %v1609 = vpack.c.b16 %v1578, %v1577
    %v1610 = vpack.c.b16 %v1580, %v1579
    %v1611 = vpack.c.b16 %v1582, %v1581
    %v1612 = vpack.c.b16 %v1584, %v1583
    %v1613 = vpack.c.b16 %v1586, %v1585
    %v1614 = vpack.c.b16 %v1588, %v1587
    %v1615 = vpack.c.b16 %v1590, %v1589
    %v1616 = vpack.c.b16 %v1592, %v1591
    %v1617 = vpack.c.b16 %v1594, %v1593
    %v1618 = vpack.c.b16 %v1596, %v1595
    %v1619 = vpack.c.b16 %v1598, %v1597
    %v1620 = vpack.c.b16 %v1600, %v1599
    %v1621 = vpack.c.b16 %v1602, %v1601
    %v1622 = vpack.c.b16 %v1604, %v1603
    %v1623 = vpack.c.b16 %v1606, %v1605
    %v1624 = vpack.c.b16 %v1608, %v1607
    %1641 = vmatprep.subr.bf16.mxu0 0
    %1642 = vmatpush1.bf16.msra.mxu0 %v1609
    %1643 = vmatprep.subr.bf16.mxu0 0
    %1644 = vmatpush1.bf16.msra.mxu0 %v1610
    %1645 = vmatprep.subr.bf16.mxu0 0
    %1646 = vmatpush1.bf16.msra.mxu0 %v1611
    %1647 = vmatprep.subr.bf16.mxu0 0
    %1648 = vmatpush1.bf16.msra.mxu0 %v1612
    %1649 = vmatprep.subr.bf16.mxu0 0
    %1650 = vmatpush1.bf16.msra.mxu0 %v1613
    %1651 = vmatprep.subr.bf16.mxu0 0
    %1652 = vmatpush1.bf16.msra.mxu0 %v1614
    %1653 = vmatprep.subr.bf16.mxu0 0
    %1654 = vmatpush1.bf16.msra.mxu0 %v1615
    %1655 = vmatprep.subr.bf16.mxu0 0
    %1656 = vmatpush1.bf16.msra.mxu0 %v1616
    %1657 = vmatprep.subr.bf16.mxu0 0
    %1658 = vmatpush1.bf16.msra.mxu0 %v1617
    %1659 = vmatprep.subr.bf16.mxu0 0
    %1660 = vmatpush1.bf16.msra.mxu0 %v1618
    %1661 = vmatprep.subr.bf16.mxu0 0
    %1662 = vmatpush1.bf16.msra.mxu0 %v1619
    %1663 = vmatprep.subr.bf16.mxu0 0
    %1664 = vmatpush1.bf16.msra.mxu0 %v1620
    %1665 = vmatprep.subr.bf16.mxu0 0
    %1666 = vmatpush1.bf16.msra.mxu0 %v1621
    %1667 = vmatprep.subr.bf16.mxu0 0
    %1668 = vmatpush1.bf16.msra.mxu0 %v1622
    %1669 = vmatprep.subr.bf16.mxu0 0
    %1670 = vmatpush1.bf16.msra.mxu0 %v1623
    %1671 = vmatprep.subr.bf16.mxu0 0
    %1672 = vmatpush1.bf16.msra.mxu0 %v1624
    %1673 = vmatprep.mubr.bf16.mxu0 %v1463
    %1674 = vmatmul.mubr.bf16.gmra.mrb[0].mxu0 %v1462
    %v1675 = vpop.f32.mrb[0].mxu0
    %v1676 = vadd.f32 0.0, %v1675
    %v1677 = vpop.f32.mrb[0].mxu0
    %v1678 = vpop.f32.mrb[0].mxu0
    %v1679 = vpop.f32.mrb[0].mxu0
    %1680 = vdwg.mxu0
    %v1713 = vunpack.c.l.b16 %v1480
    %v1714 = vunpack.c.l.b16 %v1481
    %v1715 = vunpack.c.l.b16 %v1482
    %v1716 = vunpack.c.l.b16 %v1483
    %v1717 = vunpack.c.l.b16 %v1484
    %v1718 = vunpack.c.l.b16 %v1485
    %v1719 = vunpack.c.l.b16 %v1486
    %v1720 = vunpack.c.l.b16 %v1487
    %v1721 = vunpack.c.l.b16 %v1488
    %v1722 = vunpack.c.l.b16 %v1489
    %v1723 = vunpack.c.l.b16 %v1490
    %v1724 = vunpack.c.l.b16 %v1491
    %v1725 = vunpack.c.l.b16 %v1492
    %v1726 = vunpack.c.l.b16 %v1493
    %v1727 = vunpack.c.l.b16 %v1494
    %v1728 = vunpack.c.l.b16 %v1495
    %v1729 = vunpack.c.l.b16 %v1496
    %v1730 = vunpack.c.l.b16 %v1497
    %v1731 = vunpack.c.l.b16 %v1498
    %v1732 = vunpack.c.l.b16 %v1499
    %v1733 = vunpack.c.l.b16 %v1500
    %v1734 = vunpack.c.l.b16 %v1501
    %v1735 = vunpack.c.l.b16 %v1502
    %v1736 = vunpack.c.l.b16 %v1503
    %v1737 = vunpack.c.l.b16 %v1504
    %v1738 = vunpack.c.l.b16 %v1505
    %v1739 = vunpack.c.l.b16 %v1506
    %v1740 = vunpack.c.l.b16 %v1507
    %v1741 = vunpack.c.l.b16 %v1508
    %v1742 = vunpack.c.l.b16 %v1509
    %v1743 = vunpack.c.l.b16 %v1510
    %v1744 = vunpack.c.l.b16 %v1511
    %v1745 = vpack.c.b16 %v1714, %v1713
    %v1746 = vpack.c.b16 %v1716, %v1715
    %v1747 = vpack.c.b16 %v1718, %v1717
    %v1748 = vpack.c.b16 %v1720, %v1719
    %v1749 = vpack.c.b16 %v1722, %v1721
    %v1750 = vpack.c.b16 %v1724, %v1723
    %v1751 = vpack.c.b16 %v1726, %v1725
    %v1752 = vpack.c.b16 %v1728, %v1727
    %v1753 = vpack.c.b16 %v1730, %v1729
    %v1754 = vpack.c.b16 %v1732, %v1731
    %v1755 = vpack.c.b16 %v1734, %v1733
    %v1756 = vpack.c.b16 %v1736, %v1735
    %v1757 = vpack.c.b16 %v1738, %v1737
    %v1758 = vpack.c.b16 %v1740, %v1739
    %v1759 = vpack.c.b16 %v1742, %v1741
    %v1760 = vpack.c.b16 %v1744, %v1743
    %1777 = vmatprep.subr.bf16.mxu0 0
    %1778 = vmatpush1.bf16.msra.mxu0 %v1745
    %1779 = vmatprep.subr.bf16.mxu0 0
    %1780 = vmatpush1.bf16.msra.mxu0 %v1746
    %1781 = vmatprep.subr.bf16.mxu0 0
    %1782 = vmatpush1.bf16.msra.mxu0 %v1747
    %1783 = vmatprep.subr.bf16.mxu0 0
    %1784 = vmatpush1.bf16.msra.mxu0 %v1748
    %1785 = vmatprep.subr.bf16.mxu0 0
    %1786 = vmatpush1.bf16.msra.mxu0 %v1749
    %1787 = vmatprep.subr.bf16.mxu0 0
    %1788 = vmatpush1.bf16.msra.mxu0 %v1750
    %1789 = vmatprep.subr.bf16.mxu0 0
    %1790 = vmatpush1.bf16.msra.mxu0 %v1751
    %1791 = vmatprep.subr.bf16.mxu0 0
    %1792 = vmatpush1.bf16.msra.mxu0 %v1752
    %1793 = vmatprep.subr.bf16.mxu0 0
    %1794 = vmatpush1.bf16.msra.mxu0 %v1753
    %1795 = vmatprep.subr.bf16.mxu0 0
    %1796 = vmatpush1.bf16.msra.mxu0 %v1754
    %1797 = vmatprep.subr.bf16.mxu0 0
    %1798 = vmatpush1.bf16.msra.mxu0 %v1755
    %1799 = vmatprep.subr.bf16.mxu0 0
    %1800 = vmatpush1.bf16.msra.mxu0 %v1756
    %1801 = vmatprep.subr.bf16.mxu0 0
    %1802 = vmatpush1.bf16.msra.mxu0 %v1757
    %1803 = vmatprep.subr.bf16.mxu0 0
    %1804 = vmatpush1.bf16.msra.mxu0 %v1758
    %1805 = vmatprep.subr.bf16.mxu0 0
    %1806 = vmatpush1.bf16.msra.mxu0 %v1759
    %1807 = vmatprep.subr.bf16.mxu0 0
    %1808 = vmatpush1.bf16.msra.mxu0 %v1760
    %1809 = vmatprep.mubr.bf16.mxu0 %v1461
    %1810 = vmatmul.mubr.bf16.gmra.mrb[0].mxu0 %v1460
    %v1811 = vpop.f32.mrb[0].mxu0
    %v1812 = vadd.f32 %v1676, %v1811
    %v1813 = vpop.f32.mrb[0].mxu0
    %v1814 = vpop.f32.mrb[0].mxu0
    %v1815 = vpop.f32.mrb[0].mxu0
    %1816 = vdwg.mxu0
    %s1817 = scalar_lea.vmem [#allocation3], 256
    %v1818 = vld [vmem:[%s1817] sm:$0xf]
    %v1819 = vld [vmem:[%s1817 + $0x4] sm:$0xf]
    %v1820 = vld [vmem:[%s1817 + $0x8] sm:$0xf]
    %v1821 = vld [vmem:[%s1817 + $0xc] sm:$0xf]
    %v1822 = vld [vmem:[%s1817 + $0x10] sm:$0xf]
    %v1823 = vld [vmem:[%s1817 + $0x14] sm:$0xf]
    %v1824 = vld [vmem:[%s1817 + $0x18] sm:$0xf]
    %v1825 = vld [vmem:[%s1817 + $0x1c] sm:$0xf]
    %v1826 = vld [vmem:[%s1817 + $0x20] sm:$0xf]
    %v1827 = vld [vmem:[%s1817 + $0x24] sm:$0xf]
    %v1828 = vld [vmem:[%s1817 + $0x28] sm:$0xf]
    %v1829 = vld [vmem:[%s1817 + $0x2c] sm:$0xf]
    %v1830 = vld [vmem:[%s1817 + $0x30] sm:$0xf]
    %v1831 = vld [vmem:[%s1817 + $0x34] sm:$0xf]
    %v1832 = vld [vmem:[%s1817 + $0x38] sm:$0xf]
    %v1833 = vld [vmem:[%s1817 + $0x3c] sm:$0xf]
    %v1834 = vld [vmem:[%s1817 + $0x40] sm:$0xf]
    %v1835 = vld [vmem:[%s1817 + $0x44] sm:$0xf]
    %v1836 = vld [vmem:[%s1817 + $0x48] sm:$0xf]
    %v1837 = vld [vmem:[%s1817 + $0x4c] sm:$0xf]
    %v1838 = vld [vmem:[%s1817 + $0x50] sm:$0xf]
    %v1839 = vld [vmem:[%s1817 + $0x54] sm:$0xf]
    %v1840 = vld [vmem:[%s1817 + $0x58] sm:$0xf]
    %v1841 = vld [vmem:[%s1817 + $0x5c] sm:$0xf]
    %v1842 = vld [vmem:[%s1817 + $0x60] sm:$0xf]
    %v1843 = vld [vmem:[%s1817 + $0x64] sm:$0xf]
    %v1844 = vld [vmem:[%s1817 + $0x68] sm:$0xf]
    %v1845 = vld [vmem:[%s1817 + $0x6c] sm:$0xf]
    %v1846 = vld [vmem:[%s1817 + $0x70] sm:$0xf]
    %v1847 = vld [vmem:[%s1817 + $0x74] sm:$0xf]
    %v1848 = vld [vmem:[%s1817 + $0x78] sm:$0xf]
    %v1849 = vld [vmem:[%s1817 + $0x7c] sm:$0xf]
    %v1882 = vunpack.c.l.b16 %v1818
    %v1883 = vunpack.c.l.b16 %v1819
    %v1884 = vunpack.c.l.b16 %v1820
    %v1885 = vunpack.c.l.b16 %v1821
    %v1886 = vunpack.c.l.b16 %v1822
    %v1887 = vunpack.c.l.b16 %v1823
    %v1888 = vunpack.c.l.b16 %v1824
    %v1889 = vunpack.c.l.b16 %v1825
    %v1890 = vunpack.c.l.b16 %v1826
    %v1891 = vunpack.c.l.b16 %v1827
    %v1892 = vunpack.c.l.b16 %v1828
    %v1893 = vunpack.c.l.b16 %v1829
    %v1894 = vunpack.c.l.b16 %v1830
    %v1895 = vunpack.c.l.b16 %v1831
    %v1896 = vunpack.c.l.b16 %v1832
    %v1897 = vunpack.c.l.b16 %v1833
    %v1898 = vunpack.c.l.b16 %v1834
    %v1899 = vunpack.c.l.b16 %v1835
    %v1900 = vunpack.c.l.b16 %v1836
    %v1901 = vunpack.c.l.b16 %v1837
    %v1902 = vunpack.c.l.b16 %v1838
    %v1903 = vunpack.c.l.b16 %v1839
    %v1904 = vunpack.c.l.b16 %v1840
    %v1905 = vunpack.c.l.b16 %v1841
    %v1906 = vunpack.c.l.b16 %v1842
    %v1907 = vunpack.c.l.b16 %v1843
    %v1908 = vunpack.c.l.b16 %v1844
    %v1909 = vunpack.c.l.b16 %v1845
    %v1910 = vunpack.c.l.b16 %v1846
    %v1911 = vunpack.c.l.b16 %v1847
    %v1912 = vunpack.c.l.b16 %v1848
    %v1913 = vunpack.c.l.b16 %v1849
    %v1914 = vpack.c.b16 %v1883, %v1882
    %v1915 = vpack.c.b16 %v1885, %v1884
    %v1916 = vpack.c.b16 %v1887, %v1886
    %v1917 = vpack.c.b16 %v1889, %v1888
    %v1918 = vpack.c.b16 %v1891, %v1890
    %v1919 = vpack.c.b16 %v1893, %v1892
    %v1920 = vpack.c.b16 %v1895, %v1894
    %v1921 = vpack.c.b16 %v1897, %v1896
    %v1922 = vpack.c.b16 %v1899, %v1898
    %v1923 = vpack.c.b16 %v1901, %v1900
    %v1924 = vpack.c.b16 %v1903, %v1902
    %v1925 = vpack.c.b16 %v1905, %v1904
    %v1926 = vpack.c.b16 %v1907, %v1906
    %v1927 = vpack.c.b16 %v1909, %v1908
    %v1928 = vpack.c.b16 %v1911, %v1910
    %v1929 = vpack.c.b16 %v1913, %v1912
    %1946 = vmatprep.subr.bf16.mxu0 0
    %1947 = vmatpush1.bf16.msra.mxu0 %v1914
    %1948 = vmatprep.subr.bf16.mxu0 0
    %1949 = vmatpush1.bf16.msra.mxu0 %v1915
    %1950 = vmatprep.subr.bf16.mxu0 0
    %1951 = vmatpush1.bf16.msra.mxu0 %v1916
    %1952 = vmatprep.subr.bf16.mxu0 0
    %1953 = vmatpush1.bf16.msra.mxu0 %v1917
    %1954 = vmatprep.subr.bf16.mxu0 0
    %1955 = vmatpush1.bf16.msra.mxu0 %v1918
    %1956 = vmatprep.subr.bf16.mxu0 0
    %1957 = vmatpush1.bf16.msra.mxu0 %v1919
    %1958 = vmatprep.subr.bf16.mxu0 0
    %1959 = vmatpush1.bf16.msra.mxu0 %v1920
    %1960 = vmatprep.subr.bf16.mxu0 0
    %1961 = vmatpush1.bf16.msra.mxu0 %v1921
    %1962 = vmatprep.subr.bf16.mxu0 0
    %1963 = vmatpush1.bf16.msra.mxu0 %v1922
    %1964 = vmatprep.subr.bf16.mxu0 0
    %1965 = vmatpush1.bf16.msra.mxu0 %v1923
    %1966 = vmatprep.subr.bf16.mxu0 0
    %1967 = vmatpush1.bf16.msra.mxu0 %v1924
    %1968 = vmatprep.subr.bf16.mxu0 0
    %1969 = vmatpush1.bf16.msra.mxu0 %v1925
    %1970 = vmatprep.subr.bf16.mxu0 0
    %1971 = vmatpush1.bf16.msra.mxu0 %v1926
    %1972 = vmatprep.subr.bf16.mxu0 0
    %1973 = vmatpush1.bf16.msra.mxu0 %v1927
    %1974 = vmatprep.subr.bf16.mxu0 0
    %1975 = vmatpush1.bf16.msra.mxu0 %v1928
    %1976 = vmatprep.subr.bf16.mxu0 0
    %1977 = vmatpush1.bf16.msra.mxu0 %v1929
    %1978 = vmatprep.mubr.bf16.mxu0 %v1465
    %1979 = vmatmul.mubr.bf16.gmra.mrb[0].mxu0 %v1464
    %v1980 = vpop.f32.mrb[0].mxu0
    %v1981 = vadd.f32 0.0, %v1980
    %v1982 = vpop.f32.mrb[0].mxu0
    %v1983 = vpop.f32.mrb[0].mxu0
    %v1984 = vpop.f32.mrb[0].mxu0
    %1985 = vdwg.mxu0
    %v1986 = vadd.f32 %v1812, %v1981
    %s1987 = scalar_lea.vmem [#allocation3], 384
    %v1988 = vld [vmem:[%s1987] sm:$0xf]
    %v1989 = vld [vmem:[%s1987 + $0x4] sm:$0xf]
    %v1990 = vld [vmem:[%s1987 + $0x8] sm:$0xf]
    %v1991 = vld [vmem:[%s1987 + $0xc] sm:$0xf]
    %v1992 = vld [vmem:[%s1987 + $0x10] sm:$0xf]
    %v1993 = vld [vmem:[%s1987 + $0x14] sm:$0xf]
    %v1994 = vld [vmem:[%s1987 + $0x18] sm:$0xf]
    %v1995 = vld [vmem:[%s1987 + $0x1c] sm:$0xf]
    %v1996 = vld [vmem:[%s1987 + $0x20] sm:$0xf]
    %v1997 = vld [vmem:[%s1987 + $0x24] sm:$0xf]
    %v1998 = vld [vmem:[%s1987 + $0x28] sm:$0xf]
    %v1999 = vld [vmem:[%s1987 + $0x2c] sm:$0xf]
    %v2000 = vld [vmem:[%s1987 + $0x30] sm:$0xf]
    %v2001 = vld [vmem:[%s1987 + $0x34] sm:$0xf]
    %v2002 = vld [vmem:[%s1987 + $0x38] sm:$0xf]
    %v2003 = vld [vmem:[%s1987 + $0x3c] sm:$0xf]
    %v2004 = vld [vmem:[%s1987 + $0x40] sm:$0xf]
    %v2005 = vld [vmem:[%s1987 + $0x44] sm:$0xf]
    %v2006 = vld [vmem:[%s1987 + $0x48] sm:$0xf]
    %v2007 = vld [vmem:[%s1987 + $0x4c] sm:$0xf]
    %v2008 = vld [vmem:[%s1987 + $0x50] sm:$0xf]
    %v2009 = vld [vmem:[%s1987 + $0x54] sm:$0xf]
    %v2010 = vld [vmem:[%s1987 + $0x58] sm:$0xf]
    %v2011 = vld [vmem:[%s1987 + $0x5c] sm:$0xf]
    %v2012 = vld [vmem:[%s1987 + $0x60] sm:$0xf]
    %v2013 = vld [vmem:[%s1987 + $0x64] sm:$0xf]
    %v2014 = vld [vmem:[%s1987 + $0x68] sm:$0xf]
    %v2015 = vld [vmem:[%s1987 + $0x6c] sm:$0xf]
    %v2016 = vld [vmem:[%s1987 + $0x70] sm:$0xf]
    %v2017 = vld [vmem:[%s1987 + $0x74] sm:$0xf]
    %v2018 = vld [vmem:[%s1987 + $0x78] sm:$0xf]
    %v2019 = vld [vmem:[%s1987 + $0x7c] sm:$0xf]
    %v2052 = vunpack.c.l.b16 %v1988
    %v2053 = vunpack.c.l.b16 %v1989
    %v2054 = vunpack.c.l.b16 %v1990
    %v2055 = vunpack.c.l.b16 %v1991
    %v2056 = vunpack.c.l.b16 %v1992
    %v2057 = vunpack.c.l.b16 %v1993
    %v2058 = vunpack.c.l.b16 %v1994
    %v2059 = vunpack.c.l.b16 %v1995
    %v2060 = vunpack.c.l.b16 %v1996
    %v2061 = vunpack.c.l.b16 %v1997
    %v2062 = vunpack.c.l.b16 %v1998
    %v2063 = vunpack.c.l.b16 %v1999
    %v2064 = vunpack.c.l.b16 %v2000
    %v2065 = vunpack.c.l.b16 %v2001
    %v2066 = vunpack.c.l.b16 %v2002
    %v2067 = vunpack.c.l.b16 %v2003
    %v2068 = vunpack.c.l.b16 %v2004
    %v2069 = vunpack.c.l.b16 %v2005
    %v2070 = vunpack.c.l.b16 %v2006
    %v2071 = vunpack.c.l.b16 %v2007
    %v2072 = vunpack.c.l.b16 %v2008
    %v2073 = vunpack.c.l.b16 %v2009
    %v2074 = vunpack.c.l.b16 %v2010
    %v2075 = vunpack.c.l.b16 %v2011
    %v2076 = vunpack.c.l.b16 %v2012
    %v2077 = vunpack.c.l.b16 %v2013
    %v2078 = vunpack.c.l.b16 %v2014
    %v2079 = vunpack.c.l.b16 %v2015
    %v2080 = vunpack.c.l.b16 %v2016
    %v2081 = vunpack.c.l.b16 %v2017
    %v2082 = vunpack.c.l.b16 %v2018
    %v2083 = vunpack.c.l.b16 %v2019
    %v2084 = vpack.c.b16 %v2053, %v2052
    %v2085 = vpack.c.b16 %v2055, %v2054
    %v2086 = vpack.c.b16 %v2057, %v2056
    %v2087 = vpack.c.b16 %v2059, %v2058
    %v2088 = vpack.c.b16 %v2061, %v2060
    %v2089 = vpack.c.b16 %v2063, %v2062
    %v2090 = vpack.c.b16 %v2065, %v2064
    %v2091 = vpack.c.b16 %v2067, %v2066
    %v2092 = vpack.c.b16 %v2069, %v2068
    %v2093 = vpack.c.b16 %v2071, %v2070
    %v2094 = vpack.c.b16 %v2073, %v2072
    %v2095 = vpack.c.b16 %v2075, %v2074
    %v2096 = vpack.c.b16 %v2077, %v2076
    %v2097 = vpack.c.b16 %v2079, %v2078
    %v2098 = vpack.c.b16 %v2081, %v2080
    %v2099 = vpack.c.b16 %v2083, %v2082
    %2116 = vmatprep.subr.bf16.mxu0 0
    %2117 = vmatpush1.bf16.msra.mxu0 %v2084
    %2118 = vmatprep.subr.bf16.mxu0 0
    %2119 = vmatpush1.bf16.msra.mxu0 %v2085
    %2120 = vmatprep.subr.bf16.mxu0 0
    %2121 = vmatpush1.bf16.msra.mxu0 %v2086
    %2122 = vmatprep.subr.bf16.mxu0 0
    %2123 = vmatpush1.bf16.msra.mxu0 %v2087
    %2124 = vmatprep.subr.bf16.mxu0 0
    %2125 = vmatpush1.bf16.msra.mxu0 %v2088
    %2126 = vmatprep.subr.bf16.mxu0 0
    %2127 = vmatpush1.bf16.msra.mxu0 %v2089
    %2128 = vmatprep.subr.bf16.mxu0 0
    %2129 = vmatpush1.bf16.msra.mxu0 %v2090
    %2130 = vmatprep.subr.bf16.mxu0 0
    %2131 = vmatpush1.bf16.msra.mxu0 %v2091
    %2132 = vmatprep.subr.bf16.mxu0 0
    %2133 = vmatpush1.bf16.msra.mxu0 %v2092
    %2134 = vmatprep.subr.bf16.mxu0 0
    %2135 = vmatpush1.bf16.msra.mxu0 %v2093
    %2136 = vmatprep.subr.bf16.mxu0 0
    %2137 = vmatpush1.bf16.msra.mxu0 %v2094
    %2138 = vmatprep.subr.bf16.mxu0 0
    %2139 = vmatpush1.bf16.msra.mxu0 %v2095
    %2140 = vmatprep.subr.bf16.mxu0 0
    %2141 = vmatpush1.bf16.msra.mxu0 %v2096
    %2142 = vmatprep.subr.bf16.mxu0 0
    %2143 = vmatpush1.bf16.msra.mxu0 %v2097
    %2144 = vmatprep.subr.bf16.mxu0 0
    %2145 = vmatpush1.bf16.msra.mxu0 %v2098
    %2146 = vmatprep.subr.bf16.mxu0 0
    %2147 = vmatpush1.bf16.msra.mxu0 %v2099
    %2148 = vmatprep.mubr.bf16.mxu0 %v1467
    %2149 = vmatmul.mubr.bf16.gmra.mrb[0].mxu0 %v1466
    %v2150 = vpop.f32.mrb[0].mxu0
    %v2151 = vadd.f32 0.0, %v2150
    %v2152 = vpop.f32.mrb[0].mxu0
    %v2153 = vpop.f32.mrb[0].mxu0
    %v2154 = vpop.f32.mrb[0].mxu0
    %2155 = vdwg.mxu0
    %v2156 = vadd.f32 %v1986, %v2151
    %s2157 = scalar_lea.vmem [#allocation3], 512
    %v2158 = vld [vmem:[%s2157] sm:$0xf]
    %v2159 = vld [vmem:[%s2157 + $0x4] sm:$0xf]
    %v2160 = vld [vmem:[%s2157 + $0x8] sm:$0xf]
    %v2161 = vld [vmem:[%s2157 + $0xc] sm:$0xf]
    %v2162 = vld [vmem:[%s2157 + $0x10] sm:$0xf]
    %v2163 = vld [vmem:[%s2157 + $0x14] sm:$0xf]
    %v2164 = vld [vmem:[%s2157 + $0x18] sm:$0xf]
    %v2165 = vld [vmem:[%s2157 + $0x1c] sm:$0xf]
    %v2166 = vld [vmem:[%s2157 + $0x20] sm:$0xf]
    %v2167 = vld [vmem:[%s2157 + $0x24] sm:$0xf]
    %v2168 = vld [vmem:[%s2157 + $0x28] sm:$0xf]
    %v2169 = vld [vmem:[%s2157 + $0x2c] sm:$0xf]
    %v2170 = vld [vmem:[%s2157 + $0x30] sm:$0xf]
    %v2171 = vld [vmem:[%s2157 + $0x34] sm:$0xf]
    %v2172 = vld [vmem:[%s2157 + $0x38] sm:$0xf]
    %v2173 = vld [vmem:[%s2157 + $0x3c] sm:$0xf]
    %v2174 = vld [vmem:[%s2157 + $0x40] sm:$0xf]
    %v2175 = vld [vmem:[%s2157 + $0x44] sm:$0xf]
    %v2176 = vld [vmem:[%s2157 + $0x48] sm:$0xf]
    %v2177 = vld [vmem:[%s2157 + $0x4c] sm:$0xf]
    %v2178 = vld [vmem:[%s2157 + $0x50] sm:$0xf]
    %v2179 = vld [vmem:[%s2157 + $0x54] sm:$0xf]
    %v2180 = vld [vmem:[%s2157 + $0x58] sm:$0xf]
    %v2181 = vld [vmem:[%s2157 + $0x5c] sm:$0xf]
    %v2182 = vld [vmem:[%s2157 + $0x60] sm:$0xf]
    %v2183 = vld [vmem:[%s2157 + $0x64] sm:$0xf]
    %v2184 = vld [vmem:[%s2157 + $0x68] sm:$0xf]
    %v2185 = vld [vmem:[%s2157 + $0x6c] sm:$0xf]
    %v2186 = vld [vmem:[%s2157 + $0x70] sm:$0xf]
    %v2187 = vld [vmem:[%s2157 + $0x74] sm:$0xf]
    %v2188 = vld [vmem:[%s2157 + $0x78] sm:$0xf]
    %v2189 = vld [vmem:[%s2157 + $0x7c] sm:$0xf]
    %v2222 = vunpack.c.l.b16 %v2158
    %v2223 = vunpack.c.l.b16 %v2159
    %v2224 = vunpack.c.l.b16 %v2160
    %v2225 = vunpack.c.l.b16 %v2161
    %v2226 = vunpack.c.l.b16 %v2162
    %v2227 = vunpack.c.l.b16 %v2163
    %v2228 = vunpack.c.l.b16 %v2164
    %v2229 = vunpack.c.l.b16 %v2165
    %v2230 = vunpack.c.l.b16 %v2166
    %v2231 = vunpack.c.l.b16 %v2167
    %v2232 = vunpack.c.l.b16 %v2168
    %v2233 = vunpack.c.l.b16 %v2169
    %v2234 = vunpack.c.l.b16 %v2170
    %v2235 = vunpack.c.l.b16 %v2171
    %v2236 = vunpack.c.l.b16 %v2172
    %v2237 = vunpack.c.l.b16 %v2173
    %v2238 = vunpack.c.l.b16 %v2174
    %v2239 = vunpack.c.l.b16 %v2175
    %v2240 = vunpack.c.l.b16 %v2176
    %v2241 = vunpack.c.l.b16 %v2177
    %v2242 = vunpack.c.l.b16 %v2178
    %v2243 = vunpack.c.l.b16 %v2179
    %v2244 = vunpack.c.l.b16 %v2180
    %v2245 = vunpack.c.l.b16 %v2181
    %v2246 = vunpack.c.l.b16 %v2182
    %v2247 = vunpack.c.l.b16 %v2183
    %v2248 = vunpack.c.l.b16 %v2184
    %v2249 = vunpack.c.l.b16 %v2185
    %v2250 = vunpack.c.l.b16 %v2186
    %v2251 = vunpack.c.l.b16 %v2187
    %v2252 = vunpack.c.l.b16 %v2188
    %v2253 = vunpack.c.l.b16 %v2189
    %v2254 = vpack.c.b16 %v2223, %v2222
    %v2255 = vpack.c.b16 %v2225, %v2224
    %v2256 = vpack.c.b16 %v2227, %v2226
    %v2257 = vpack.c.b16 %v2229, %v2228
    %v2258 = vpack.c.b16 %v2231, %v2230
    %v2259 = vpack.c.b16 %v2233, %v2232
    %v2260 = vpack.c.b16 %v2235, %v2234
    %v2261 = vpack.c.b16 %v2237, %v2236
    %v2262 = vpack.c.b16 %v2239, %v2238
    %v2263 = vpack.c.b16 %v2241, %v2240
    %v2264 = vpack.c.b16 %v2243, %v2242
    %v2265 = vpack.c.b16 %v2245, %v2244
    %v2266 = vpack.c.b16 %v2247, %v2246
    %v2267 = vpack.c.b16 %v2249, %v2248
    %v2268 = vpack.c.b16 %v2251, %v2250
    %v2269 = vpack.c.b16 %v2253, %v2252
    %2286 = vmatprep.subr.bf16.mxu0 0
    %2287 = vmatpush1.bf16.msra.mxu0 %v2254
    %2288 = vmatprep.subr.bf16.mxu0 0
    %2289 = vmatpush1.bf16.msra.mxu0 %v2255
    %2290 = vmatprep.subr.bf16.mxu0 0
    %2291 = vmatpush1.bf16.msra.mxu0 %v2256
    %2292 = vmatprep.subr.bf16.mxu0 0
    %2293 = vmatpush1.bf16.msra.mxu0 %v2257
    %2294 = vmatprep.subr.bf16.mxu0 0
    %2295 = vmatpush1.bf16.msra.mxu0 %v2258
    %2296 = vmatprep.subr.bf16.mxu0 0
    %2297 = vmatpush1.bf16.msra.mxu0 %v2259
    %2298 = vmatprep.subr.bf16.mxu0 0
    %2299 = vmatpush1.bf16.msra.mxu0 %v2260
    %2300 = vmatprep.subr.bf16.mxu0 0
    %2301 = vmatpush1.bf16.msra.mxu0 %v2261
    %2302 = vmatprep.subr.bf16.mxu0 0
    %2303 = vmatpush1.bf16.msra.mxu0 %v2262
    %2304 = vmatprep.subr.bf16.mxu0 0
    %2305 = vmatpush1.bf16.msra.mxu0 %v2263
    %2306 = vmatprep.subr.bf16.mxu0 0
    %2307 = vmatpush1.bf16.msra.mxu0 %v2264
    %2308 = vmatprep.subr.bf16.mxu0 0
    %2309 = vmatpush1.bf16.msra.mxu0 %v2265
    %2310 = vmatprep.subr.bf16.mxu0 0
    %2311 = vmatpush1.bf16.msra.mxu0 %v2266
    %2312 = vmatprep.subr.bf16.mxu0 0
    %2313 = vmatpush1.bf16.msra.mxu0 %v2267
    %2314 = vmatprep.subr.bf16.mxu0 0
    %2315 = vmatpush1.bf16.msra.mxu0 %v2268
    %2316 = vmatprep.subr.bf16.mxu0 0
    %2317 = vmatpush1.bf16.msra.mxu0 %v2269
    %2318 = vmatprep.mubr.bf16.mxu0 %v1469
    %2319 = vmatmul.mubr.bf16.gmra.mrb[0].mxu0 %v1468
    %v2320 = vpop.f32.mrb[0].mxu0
    %v2321 = vadd.f32 0.0, %v2320
    %v2322 = vpop.f32.mrb[0].mxu0
    %v2323 = vpop.f32.mrb[0].mxu0
    %v2324 = vpop.f32.mrb[0].mxu0
    %2325 = vdwg.mxu0
    %v2326 = vadd.f32 %v2156, %v2321
    %s2327 = scalar_lea.vmem [#allocation3], 640
    %v2328 = vld [vmem:[%s2327] sm:$0xf]
    %v2329 = vld [vmem:[%s2327 + $0x4] sm:$0xf]
    %v2330 = vld [vmem:[%s2327 + $0x8] sm:$0xf]
    %v2331 = vld [vmem:[%s2327 + $0xc] sm:$0xf]
    %v2332 = vld [vmem:[%s2327 + $0x10] sm:$0xf]
    %v2333 = vld [vmem:[%s2327 + $0x14] sm:$0xf]
    %v2334 = vld [vmem:[%s2327 + $0x18] sm:$0xf]
    %v2335 = vld [vmem:[%s2327 + $0x1c] sm:$0xf]
    %v2336 = vld [vmem:[%s2327 + $0x20] sm:$0xf]
    %v2337 = vld [vmem:[%s2327 + $0x24] sm:$0xf]
    %v2338 = vld [vmem:[%s2327 + $0x28] sm:$0xf]
    %v2339 = vld [vmem:[%s2327 + $0x2c] sm:$0xf]
    %v2340 = vld [vmem:[%s2327 + $0x30] sm:$0xf]
    %v2341 = vld [vmem:[%s2327 + $0x34] sm:$0xf]
    %v2342 = vld [vmem:[%s2327 + $0x38] sm:$0xf]
    %v2343 = vld [vmem:[%s2327 + $0x3c] sm:$0xf]
    %v2344 = vld [vmem:[%s2327 + $0x40] sm:$0xf]
    %v2345 = vld [vmem:[%s2327 + $0x44] sm:$0xf]
    %v2346 = vld [vmem:[%s2327 + $0x48] sm:$0xf]
    %v2347 = vld [vmem:[%s2327 + $0x4c] sm:$0xf]
    %v2348 = vld [vmem:[%s2327 + $0x50] sm:$0xf]
    %v2349 = vld [vmem:[%s2327 + $0x54] sm:$0xf]
    %v2350 = vld [vmem:[%s2327 + $0x58] sm:$0xf]
    %v2351 = vld [vmem:[%s2327 + $0x5c] sm:$0xf]
    %v2352 = vld [vmem:[%s2327 + $0x60] sm:$0xf]
    %v2353 = vld [vmem:[%s2327 + $0x64] sm:$0xf]
    %v2354 = vld [vmem:[%s2327 + $0x68] sm:$0xf]
    %v2355 = vld [vmem:[%s2327 + $0x6c] sm:$0xf]
    %v2356 = vld [vmem:[%s2327 + $0x70] sm:$0xf]
    %v2357 = vld [vmem:[%s2327 + $0x74] sm:$0xf]
    %v2358 = vld [vmem:[%s2327 + $0x78] sm:$0xf]
    %v2359 = vld [vmem:[%s2327 + $0x7c] sm:$0xf]
    %v2392 = vunpack.c.l.b16 %v2328
    %v2393 = vunpack.c.l.b16 %v2329
    %v2394 = vunpack.c.l.b16 %v2330
    %v2395 = vunpack.c.l.b16 %v2331
    %v2396 = vunpack.c.l.b16 %v2332
    %v2397 = vunpack.c.l.b16 %v2333
    %v2398 = vunpack.c.l.b16 %v2334
    %v2399 = vunpack.c.l.b16 %v2335
    %v2400 = vunpack.c.l.b16 %v2336
    %v2401 = vunpack.c.l.b16 %v2337
    %v2402 = vunpack.c.l.b16 %v2338
    %v2403 = vunpack.c.l.b16 %v2339
    %v2404 = vunpack.c.l.b16 %v2340
    %v2405 = vunpack.c.l.b16 %v2341
    %v2406 = vunpack.c.l.b16 %v2342
    %v2407 = vunpack.c.l.b16 %v2343
    %v2408 = vunpack.c.l.b16 %v2344
    %v2409 = vunpack.c.l.b16 %v2345
    %v2410 = vunpack.c.l.b16 %v2346
    %v2411 = vunpack.c.l.b16 %v2347
    %v2412 = vunpack.c.l.b16 %v2348
    %v2413 = vunpack.c.l.b16 %v2349
    %v2414 = vunpack.c.l.b16 %v2350
    %v2415 = vunpack.c.l.b16 %v2351
    %v2416 = vunpack.c.l.b16 %v2352
    %v2417 = vunpack.c.l.b16 %v2353
    %v2418 = vunpack.c.l.b16 %v2354
    %v2419 = vunpack.c.l.b16 %v2355
    %v2420 = vunpack.c.l.b16 %v2356
    %v2421 = vunpack.c.l.b16 %v2357
    %v2422 = vunpack.c.l.b16 %v2358
    %v2423 = vunpack.c.l.b16 %v2359
    %v2424 = vpack.c.b16 %v2393, %v2392
    %v2425 = vpack.c.b16 %v2395, %v2394
    %v2426 = vpack.c.b16 %v2397, %v2396
    %v2427 = vpack.c.b16 %v2399, %v2398
    %v2428 = vpack.c.b16 %v2401, %v2400
    %v2429 = vpack.c.b16 %v2403, %v2402
    %v2430 = vpack.c.b16 %v2405, %v2404
    %v2431 = vpack.c.b16 %v2407, %v2406
    %v2432 = vpack.c.b16 %v2409, %v2408
    %v2433 = vpack.c.b16 %v2411, %v2410
    %v2434 = vpack.c.b16 %v2413, %v2412
    %v2435 = vpack.c.b16 %v2415, %v2414
    %v2436 = vpack.c.b16 %v2417, %v2416
    %v2437 = vpack.c.b16 %v2419, %v2418
    %v2438 = vpack.c.b16 %v2421, %v2420
    %v2439 = vpack.c.b16 %v2423, %v2422
    %2456 = vmatprep.subr.bf16.mxu0 0
    %2457 = vmatpush1.bf16.msra.mxu0 %v2424
    %2458 = vmatprep.subr.bf16.mxu0 0
    %2459 = vmatpush1.bf16.msra.mxu0 %v2425
    %2460 = vmatprep.subr.bf16.mxu0 0
    %2461 = vmatpush1.bf16.msra.mxu0 %v2426
    %2462 = vmatprep.subr.bf16.mxu0 0
    %2463 = vmatpush1.bf16.msra.mxu0 %v2427
    %2464 = vmatprep.subr.bf16.mxu0 0
    %2465 = vmatpush1.bf16.msra.mxu0 %v2428
    %2466 = vmatprep.subr.bf16.mxu0 0
    %2467 = vmatpush1.bf16.msra.mxu0 %v2429
    %2468 = vmatprep.subr.bf16.mxu0 0
    %2469 = vmatpush1.bf16.msra.mxu0 %v2430
    %2470 = vmatprep.subr.bf16.mxu0 0
    %2471 = vmatpush1.bf16.msra.mxu0 %v2431
    %2472 = vmatprep.subr.bf16.mxu0 0
    %2473 = vmatpush1.bf16.msra.mxu0 %v2432
    %2474 = vmatprep.subr.bf16.mxu0 0
    %2475 = vmatpush1.bf16.msra.mxu0 %v2433
    %2476 = vmatprep.subr.bf16.mxu0 0
    %2477 = vmatpush1.bf16.msra.mxu0 %v2434
    %2478 = vmatprep.subr.bf16.mxu0 0
    %2479 = vmatpush1.bf16.msra.mxu0 %v2435
    %2480 = vmatprep.subr.bf16.mxu0 0
    %2481 = vmatpush1.bf16.msra.mxu0 %v2436
    %2482 = vmatprep.subr.bf16.mxu0 0
    %2483 = vmatpush1.bf16.msra.mxu0 %v2437
    %2484 = vmatprep.subr.bf16.mxu0 0
    %2485 = vmatpush1.bf16.msra.mxu0 %v2438
    %2486 = vmatprep.subr.bf16.mxu0 0
    %2487 = vmatpush1.bf16.msra.mxu0 %v2439
    %2488 = vmatprep.mubr.bf16.mxu0 %v1471
    %2489 = vmatmul.mubr.bf16.gmra.mrb[0].mxu0 %v1470
    %v2490 = vpop.f32.mrb[0].mxu0
    %v2491 = vadd.f32 0.0, %v2490
    %v2492 = vpop.f32.mrb[0].mxu0
    %v2493 = vpop.f32.mrb[0].mxu0
    %v2494 = vpop.f32.mrb[0].mxu0
    %2495 = vdwg.mxu0
    %v2496 = vadd.f32 %v2326, %v2491
    %s2497 = scalar_lea.vmem [#allocation3], 768
    %v2498 = vld [vmem:[%s2497] sm:$0xf]
    %v2499 = vld [vmem:[%s2497 + $0x4] sm:$0xf]
    %v2500 = vld [vmem:[%s2497 + $0x8] sm:$0xf]
    %v2501 = vld [vmem:[%s2497 + $0xc] sm:$0xf]
    %v2502 = vld [vmem:[%s2497 + $0x10] sm:$0xf]
    %v2503 = vld [vmem:[%s2497 + $0x14] sm:$0xf]
    %v2504 = vld [vmem:[%s2497 + $0x18] sm:$0xf]
    %v2505 = vld [vmem:[%s2497 + $0x1c] sm:$0xf]
    %v2506 = vld [vmem:[%s2497 + $0x20] sm:$0xf]
    %v2507 = vld [vmem:[%s2497 + $0x24] sm:$0xf]
    %v2508 = vld [vmem:[%s2497 + $0x28] sm:$0xf]
    %v2509 = vld [vmem:[%s2497 + $0x2c] sm:$0xf]
    %v2510 = vld [vmem:[%s2497 + $0x30] sm:$0xf]
    %v2511 = vld [vmem:[%s2497 + $0x34] sm:$0xf]
    %v2512 = vld [vmem:[%s2497 + $0x38] sm:$0xf]
    %v2513 = vld [vmem:[%s2497 + $0x3c] sm:$0xf]
    %v2514 = vld [vmem:[%s2497 + $0x40] sm:$0xf]
    %v2515 = vld [vmem:[%s2497 + $0x44] sm:$0xf]
    %v2516 = vld [vmem:[%s2497 + $0x48] sm:$0xf]
    %v2517 = vld [vmem:[%s2497 + $0x4c] sm:$0xf]
    %v2518 = vld [vmem:[%s2497 + $0x50] sm:$0xf]
    %v2519 = vld [vmem:[%s2497 + $0x54] sm:$0xf]
    %v2520 = vld [vmem:[%s2497 + $0x58] sm:$0xf]
    %v2521 = vld [vmem:[%s2497 + $0x5c] sm:$0xf]
    %v2522 = vld [vmem:[%s2497 + $0x60] sm:$0xf]
    %v2523 = vld [vmem:[%s2497 + $0x64] sm:$0xf]
    %v2524 = vld [vmem:[%s2497 + $0x68] sm:$0xf]
    %v2525 = vld [vmem:[%s2497 + $0x6c] sm:$0xf]
    %v2526 = vld [vmem:[%s2497 + $0x70] sm:$0xf]
    %v2527 = vld [vmem:[%s2497 + $0x74] sm:$0xf]
    %v2528 = vld [vmem:[%s2497 + $0x78] sm:$0xf]
    %v2529 = vld [vmem:[%s2497 + $0x7c] sm:$0xf]
    %v2562 = vunpack.c.l.b16 %v2498
    %v2563 = vunpack.c.l.b16 %v2499
    %v2564 = vunpack.c.l.b16 %v2500
    %v2565 = vunpack.c.l.b16 %v2501
    %v2566 = vunpack.c.l.b16 %v2502
    %v2567 = vunpack.c.l.b16 %v2503
    %v2568 = vunpack.c.l.b16 %v2504
    %v2569 = vunpack.c.l.b16 %v2505
    %v2570 = vunpack.c.l.b16 %v2506
    %v2571 = vunpack.c.l.b16 %v2507
    %v2572 = vunpack.c.l.b16 %v2508
    %v2573 = vunpack.c.l.b16 %v2509
    %v2574 = vunpack.c.l.b16 %v2510
    %v2575 = vunpack.c.l.b16 %v2511
    %v2576 = vunpack.c.l.b16 %v2512
    %v2577 = vunpack.c.l.b16 %v2513
    %v2578 = vunpack.c.l.b16 %v2514
    %v2579 = vunpack.c.l.b16 %v2515
    %v2580 = vunpack.c.l.b16 %v2516
    %v2581 = vunpack.c.l.b16 %v2517
    %v2582 = vunpack.c.l.b16 %v2518
    %v2583 = vunpack.c.l.b16 %v2519
    %v2584 = vunpack.c.l.b16 %v2520
    %v2585 = vunpack.c.l.b16 %v2521
    %v2586 = vunpack.c.l.b16 %v2522
    %v2587 = vunpack.c.l.b16 %v2523
    %v2588 = vunpack.c.l.b16 %v2524
    %v2589 = vunpack.c.l.b16 %v2525
    %v2590 = vunpack.c.l.b16 %v2526
    %v2591 = vunpack.c.l.b16 %v2527
    %v2592 = vunpack.c.l.b16 %v2528
    %v2593 = vunpack.c.l.b16 %v2529
    %v2594 = vpack.c.b16 %v2563, %v2562
    %v2595 = vpack.c.b16 %v2565, %v2564
    %v2596 = vpack.c.b16 %v2567, %v2566
    %v2597 = vpack.c.b16 %v2569, %v2568
    %v2598 = vpack.c.b16 %v2571, %v2570
    %v2599 = vpack.c.b16 %v2573, %v2572
    %v2600 = vpack.c.b16 %v2575, %v2574
    %v2601 = vpack.c.b16 %v2577, %v2576
    %v2602 = vpack.c.b16 %v2579, %v2578
    %v2603 = vpack.c.b16 %v2581, %v2580
    %v2604 = vpack.c.b16 %v2583, %v2582
    %v2605 = vpack.c.b16 %v2585, %v2584
    %v2606 = vpack.c.b16 %v2587, %v2586
    %v2607 = vpack.c.b16 %v2589, %v2588
    %v2608 = vpack.c.b16 %v2591, %v2590
    %v2609 = vpack.c.b16 %v2593, %v2592
    %2626 = vmatprep.subr.bf16.mxu0 0
    %2627 = vmatpush1.bf16.msra.mxu0 %v2594
    %2628 = vmatprep.subr.bf16.mxu0 0
    %2629 = vmatpush1.bf16.msra.mxu0 %v2595
    %2630 = vmatprep.subr.bf16.mxu0 0
    %2631 = vmatpush1.bf16.msra.mxu0 %v2596
    %2632 = vmatprep.subr.bf16.mxu0 0
    %2633 = vmatpush1.bf16.msra.mxu0 %v2597
    %2634 = vmatprep.subr.bf16.mxu0 0
    %2635 = vmatpush1.bf16.msra.mxu0 %v2598
    %2636 = vmatprep.subr.bf16.mxu0 0
    %2637 = vmatpush1.bf16.msra.mxu0 %v2599
    %2638 = vmatprep.subr.bf16.mxu0 0
    %2639 = vmatpush1.bf16.msra.mxu0 %v2600
    %2640 = vmatprep.subr.bf16.mxu0 0
    %2641 = vmatpush1.bf16.msra.mxu0 %v2601
    %2642 = vmatprep.subr.bf16.mxu0 0
    %2643 = vmatpush1.bf16.msra.mxu0 %v2602
    %2644 = vmatprep.subr.bf16.mxu0 0
    %2645 = vmatpush1.bf16.msra.mxu0 %v2603
    %2646 = vmatprep.subr.bf16.mxu0 0
    %2647 = vmatpush1.bf16.msra.mxu0 %v2604
    %2648 = vmatprep.subr.bf16.mxu0 0
    %2649 = vmatpush1.bf16.msra.mxu0 %v2605
    %2650 = vmatprep.subr.bf16.mxu0 0
    %2651 = vmatpush1.bf16.msra.mxu0 %v2606
    %2652 = vmatprep.subr.bf16.mxu0 0
    %2653 = vmatpush1.bf16.msra.mxu0 %v2607
    %2654 = vmatprep.subr.bf16.mxu0 0
    %2655 = vmatpush1.bf16.msra.mxu0 %v2608
    %2656 = vmatprep.subr.bf16.mxu0 0
    %2657 = vmatpush1.bf16.msra.mxu0 %v2609
    %2658 = vmatprep.mubr.bf16.mxu0 %v1473
    %2659 = vmatmul.mubr.bf16.gmra.mrb[0].mxu0 %v1472
    %v2660 = vpop.f32.mrb[0].mxu0
    %v2661 = vadd.f32 0.0, %v2660
    %v2662 = vpop.f32.mrb[0].mxu0
    %v2663 = vpop.f32.mrb[0].mxu0
    %v2664 = vpop.f32.mrb[0].mxu0
    %2665 = vdwg.mxu0
    %v2666 = vadd.f32 %v2496, %v2661
    %s2667 = scalar_lea.vmem [#allocation3], 896
    %v2668 = vld [vmem:[%s2667] sm:$0xf]
    %v2669 = vld [vmem:[%s2667 + $0x4] sm:$0xf]
    %v2670 = vld [vmem:[%s2667 + $0x8] sm:$0xf]
    %v2671 = vld [vmem:[%s2667 + $0xc] sm:$0xf]
    %v2672 = vld [vmem:[%s2667 + $0x10] sm:$0xf]
    %v2673 = vld [vmem:[%s2667 + $0x14] sm:$0xf]
    %v2674 = vld [vmem:[%s2667 + $0x18] sm:$0xf]
    %v2675 = vld [vmem:[%s2667 + $0x1c] sm:$0xf]
    %v2676 = vld [vmem:[%s2667 + $0x20] sm:$0xf]
    %v2677 = vld [vmem:[%s2667 + $0x24] sm:$0xf]
    %v2678 = vld [vmem:[%s2667 + $0x28] sm:$0xf]
    %v2679 = vld [vmem:[%s2667 + $0x2c] sm:$0xf]
    %v2680 = vld [vmem:[%s2667 + $0x30] sm:$0xf]
    %v2681 = vld [vmem:[%s2667 + $0x34] sm:$0xf]
    %v2682 = vld [vmem:[%s2667 + $0x38] sm:$0xf]
    %v2683 = vld [vmem:[%s2667 + $0x3c] sm:$0xf]
    %v2684 = vld [vmem:[%s2667 + $0x40] sm:$0xf]
    %v2685 = vld [vmem:[%s2667 + $0x44] sm:$0xf]
    %v2686 = vld [vmem:[%s2667 + $0x48] sm:$0xf]
    %v2687 = vld [vmem:[%s2667 + $0x4c] sm:$0xf]
    %v2688 = vld [vmem:[%s2667 + $0x50] sm:$0xf]
    %v2689 = vld [vmem:[%s2667 + $0x54] sm:$0xf]
    %v2690 = vld [vmem:[%s2667 + $0x58] sm:$0xf]
    %v2691 = vld [vmem:[%s2667 + $0x5c] sm:$0xf]
    %v2692 = vld [vmem:[%s2667 + $0x60] sm:$0xf]
    %v2693 = vld [vmem:[%s2667 + $0x64] sm:$0xf]
    %v2694 = vld [vmem:[%s2667 + $0x68] sm:$0xf]
    %v2695 = vld [vmem:[%s2667 + $0x6c] sm:$0xf]
    %v2696 = vld [vmem:[%s2667 + $0x70] sm:$0xf]
    %v2697 = vld [vmem:[%s2667 + $0x74] sm:$0xf]
    %v2698 = vld [vmem:[%s2667 + $0x78] sm:$0xf]
    %v2699 = vld [vmem:[%s2667 + $0x7c] sm:$0xf]
    %v2732 = vunpack.c.l.b16 %v2668
    %v2733 = vunpack.c.l.b16 %v2669
    %v2734 = vunpack.c.l.b16 %v2670
    %v2735 = vunpack.c.l.b16 %v2671
    %v2736 = vunpack.c.l.b16 %v2672
    %v2737 = vunpack.c.l.b16 %v2673
    %v2738 = vunpack.c.l.b16 %v2674
    %v2739 = vunpack.c.l.b16 %v2675
    %v2740 = vunpack.c.l.b16 %v2676
    %v2741 = vunpack.c.l.b16 %v2677
    %v2742 = vunpack.c.l.b16 %v2678
    %v2743 = vunpack.c.l.b16 %v2679
    %v2744 = vunpack.c.l.b16 %v2680
    %v2745 = vunpack.c.l.b16 %v2681
    %v2746 = vunpack.c.l.b16 %v2682
    %v2747 = vunpack.c.l.b16 %v2683
    %v2748 = vunpack.c.l.b16 %v2684
    %v2749 = vunpack.c.l.b16 %v2685
    %v2750 = vunpack.c.l.b16 %v2686
    %v2751 = vunpack.c.l.b16 %v2687
    %v2752 = vunpack.c.l.b16 %v2688
    %v2753 = vunpack.c.l.b16 %v2689
    %v2754 = vunpack.c.l.b16 %v2690
    %v2755 = vunpack.c.l.b16 %v2691
    %v2756 = vunpack.c.l.b16 %v2692
    %v2757 = vunpack.c.l.b16 %v2693
    %v2758 = vunpack.c.l.b16 %v2694
    %v2759 = vunpack.c.l.b16 %v2695
    %v2760 = vunpack.c.l.b16 %v2696
    %v2761 = vunpack.c.l.b16 %v2697
    %v2762 = vunpack.c.l.b16 %v2698
    %v2763 = vunpack.c.l.b16 %v2699
    %v2764 = vpack.c.b16 %v2733, %v2732
    %v2765 = vpack.c.b16 %v2735, %v2734
    %v2766 = vpack.c.b16 %v2737, %v2736
    %v2767 = vpack.c.b16 %v2739, %v2738
    %v2768 = vpack.c.b16 %v2741, %v2740
    %v2769 = vpack.c.b16 %v2743, %v2742
    %v2770 = vpack.c.b16 %v2745, %v2744
    %v2771 = vpack.c.b16 %v2747, %v2746
    %v2772 = vpack.c.b16 %v2749, %v2748
    %v2773 = vpack.c.b16 %v2751, %v2750
    %v2774 = vpack.c.b16 %v2753, %v2752
    %v2775 = vpack.c.b16 %v2755, %v2754
    %v2776 = vpack.c.b16 %v2757, %v2756
    %v2777 = vpack.c.b16 %v2759, %v2758
    %v2778 = vpack.c.b16 %v2761, %v2760
    %v2779 = vpack.c.b16 %v2763, %v2762
    %2796 = vmatprep.subr.bf16.mxu0 0
    %2797 = vmatpush1.bf16.msra.mxu0 %v2764
    %2798 = vmatprep.subr.bf16.mxu0 0
    %2799 = vmatpush1.bf16.msra.mxu0 %v2765
    %2800 = vmatprep.subr.bf16.mxu0 0
    %2801 = vmatpush1.bf16.msra.mxu0 %v2766
    %2802 = vmatprep.subr.bf16.mxu0 0
    %2803 = vmatpush1.bf16.msra.mxu0 %v2767
    %2804 = vmatprep.subr.bf16.mxu0 0
    %2805 = vmatpush1.bf16.msra.mxu0 %v2768
    %2806 = vmatprep.subr.bf16.mxu0 0
    %2807 = vmatpush1.bf16.msra.mxu0 %v2769
    %2808 = vmatprep.subr.bf16.mxu0 0
    %2809 = vmatpush1.bf16.msra.mxu0 %v2770
    %2810 = vmatprep.subr.bf16.mxu0 0
    %2811 = vmatpush1.bf16.msra.mxu0 %v2771
    %2812 = vmatprep.subr.bf16.mxu0 0
    %2813 = vmatpush1.bf16.msra.mxu0 %v2772
    %2814 = vmatprep.subr.bf16.mxu0 0
    %2815 = vmatpush1.bf16.msra.mxu0 %v2773
    %2816 = vmatprep.subr.bf16.mxu0 0
    %2817 = vmatpush1.bf16.msra.mxu0 %v2774
    %2818 = vmatprep.subr.bf16.mxu0 0
    %2819 = vmatpush1.bf16.msra.mxu0 %v2775
    %2820 = vmatprep.subr.bf16.mxu0 0
    %2821 = vmatpush1.bf16.msra.mxu0 %v2776
    %2822 = vmatprep.subr.bf16.mxu0 0
    %2823 = vmatpush1.bf16.msra.mxu0 %v2777
    %2824 = vmatprep.subr.bf16.mxu0 0
    %2825 = vmatpush1.bf16.msra.mxu0 %v2778
    %2826 = vmatprep.subr.bf16.mxu0 0
    %2827 = vmatpush1.bf16.msra.mxu0 %v2779
    %2828 = vmatprep.mubr.bf16.mxu0 %v1475
    %2829 = vmatmul.mubr.bf16.gmra.mrb[0].mxu0 %v1474
    %v2830 = vpop.f32.mrb[0].mxu0
    %v2831 = vadd.f32 0.0, %v2830
    %v2832 = vpop.f32.mrb[0].mxu0
    %v2833 = vpop.f32.mrb[0].mxu0
    %v2834 = vpop.f32.mrb[0].mxu0
    %2835 = vdwg.mxu0
    %v2836 = vadd.f32 %v2666, %v2831
    %s2837 = scalar_lea.vmem [#allocation3], 1024
    %v2838 = vld [vmem:[%s2837] sm:$0xf]
    %v2839 = vld [vmem:[%s2837 + $0x4] sm:$0xf]
    %v2840 = vld [vmem:[%s2837 + $0x8] sm:$0xf]
    %v2841 = vld [vmem:[%s2837 + $0xc] sm:$0xf]
    %v2842 = vld [vmem:[%s2837 + $0x10] sm:$0xf]
    %v2843 = vld [vmem:[%s2837 + $0x14] sm:$0xf]
    %v2844 = vld [vmem:[%s2837 + $0x18] sm:$0xf]
    %v2845 = vld [vmem:[%s2837 + $0x1c] sm:$0xf]
    %v2846 = vld [vmem:[%s2837 + $0x20] sm:$0xf]
    %v2847 = vld [vmem:[%s2837 + $0x24] sm:$0xf]
    %v2848 = vld [vmem:[%s2837 + $0x28] sm:$0xf]
    %v2849 = vld [vmem:[%s2837 + $0x2c] sm:$0xf]
    %v2850 = vld [vmem:[%s2837 + $0x30] sm:$0xf]
    %v2851 = vld [vmem:[%s2837 + $0x34] sm:$0xf]
    %v2852 = vld [vmem:[%s2837 + $0x38] sm:$0xf]
    %v2853 = vld [vmem:[%s2837 + $0x3c] sm:$0xf]
    %v2854 = vld [vmem:[%s2837 + $0x40] sm:$0xf]
    %v2855 = vld [vmem:[%s2837 + $0x44] sm:$0xf]
    %v2856 = vld [vmem:[%s2837 + $0x48] sm:$0xf]
    %v2857 = vld [vmem:[%s2837 + $0x4c] sm:$0xf]
    %v2858 = vld [vmem:[%s2837 + $0x50] sm:$0xf]
    %v2859 = vld [vmem:[%s2837 + $0x54] sm:$0xf]
    %v2860 = vld [vmem:[%s2837 + $0x58] sm:$0xf]
    %v2861 = vld [vmem:[%s2837 + $0x5c] sm:$0xf]
    %v2862 = vld [vmem:[%s2837 + $0x60] sm:$0xf]
    %v2863 = vld [vmem:[%s2837 + $0x64] sm:$0xf]
    %v2864 = vld [vmem:[%s2837 + $0x68] sm:$0xf]
    %v2865 = vld [vmem:[%s2837 + $0x6c] sm:$0xf]
    %v2866 = vld [vmem:[%s2837 + $0x70] sm:$0xf]
    %v2867 = vld [vmem:[%s2837 + $0x74] sm:$0xf]
    %v2868 = vld [vmem:[%s2837 + $0x78] sm:$0xf]
    %v2869 = vld [vmem:[%s2837 + $0x7c] sm:$0xf]
    %v2902 = vunpack.c.l.b16 %v2838
    %v2903 = vunpack.c.l.b16 %v2839
    %v2904 = vunpack.c.l.b16 %v2840
    %v2905 = vunpack.c.l.b16 %v2841
    %v2906 = vunpack.c.l.b16 %v2842
    %v2907 = vunpack.c.l.b16 %v2843
    %v2908 = vunpack.c.l.b16 %v2844
    %v2909 = vunpack.c.l.b16 %v2845
    %v2910 = vunpack.c.l.b16 %v2846
    %v2911 = vunpack.c.l.b16 %v2847
    %v2912 = vunpack.c.l.b16 %v2848
    %v2913 = vunpack.c.l.b16 %v2849
    %v2914 = vunpack.c.l.b16 %v2850
    %v2915 = vunpack.c.l.b16 %v2851
    %v2916 = vunpack.c.l.b16 %v2852
    %v2917 = vunpack.c.l.b16 %v2853
    %v2918 = vunpack.c.l.b16 %v2854
    %v2919 = vunpack.c.l.b16 %v2855
    %v2920 = vunpack.c.l.b16 %v2856
    %v2921 = vunpack.c.l.b16 %v2857
    %v2922 = vunpack.c.l.b16 %v2858
    %v2923 = vunpack.c.l.b16 %v2859
    %v2924 = vunpack.c.l.b16 %v2860
    %v2925 = vunpack.c.l.b16 %v2861
    %v2926 = vunpack.c.l.b16 %v2862
    %v2927 = vunpack.c.l.b16 %v2863
    %v2928 = vunpack.c.l.b16 %v2864
    %v2929 = vunpack.c.l.b16 %v2865
    %v2930 = vunpack.c.l.b16 %v2866
    %v2931 = vunpack.c.l.b16 %v2867
    %v2932 = vunpack.c.l.b16 %v2868
    %v2933 = vunpack.c.l.b16 %v2869
    %v2934 = vpack.c.b16 %v2903, %v2902
    %v2935 = vpack.c.b16 %v2905, %v2904
    %v2936 = vpack.c.b16 %v2907, %v2906
    %v2937 = vpack.c.b16 %v2909, %v2908
    %v2938 = vpack.c.b16 %v2911, %v2910
    %v2939 = vpack.c.b16 %v2913, %v2912
    %v2940 = vpack.c.b16 %v2915, %v2914
    %v2941 = vpack.c.b16 %v2917, %v2916
    %v2942 = vpack.c.b16 %v2919, %v2918
    %v2943 = vpack.c.b16 %v2921, %v2920
    %v2944 = vpack.c.b16 %v2923, %v2922
    %v2945 = vpack.c.b16 %v2925, %v2924
    %v2946 = vpack.c.b16 %v2927, %v2926
    %v2947 = vpack.c.b16 %v2929, %v2928
    %v2948 = vpack.c.b16 %v2931, %v2930
    %v2949 = vpack.c.b16 %v2933, %v2932
    %2966 = vmatprep.subr.bf16.mxu0 0
    %2967 = vmatpush1.bf16.msra.mxu0 %v2934
    %2968 = vmatprep.subr.bf16.mxu0 0
    %2969 = vmatpush1.bf16.msra.mxu0 %v2935
    %2970 = vmatprep.subr.bf16.mxu0 0
    %2971 = vmatpush1.bf16.msra.mxu0 %v2936
    %2972 = vmatprep.subr.bf16.mxu0 0
    %2973 = vmatpush1.bf16.msra.mxu0 %v2937
    %2974 = vmatprep.subr.bf16.mxu0 0
    %2975 = vmatpush1.bf16.msra.mxu0 %v2938
    %2976 = vmatprep.subr.bf16.mxu0 0
    %2977 = vmatpush1.bf16.msra.mxu0 %v2939
    %2978 = vmatprep.subr.bf16.mxu0 0
    %2979 = vmatpush1.bf16.msra.mxu0 %v2940
    %2980 = vmatprep.subr.bf16.mxu0 0
    %2981 = vmatpush1.bf16.msra.mxu0 %v2941
    %2982 = vmatprep.subr.bf16.mxu0 0
    %2983 = vmatpush1.bf16.msra.mxu0 %v2942
    %2984 = vmatprep.subr.bf16.mxu0 0
    %2985 = vmatpush1.bf16.msra.mxu0 %v2943
    %2986 = vmatprep.subr.bf16.mxu0 0
    %2987 = vmatpush1.bf16.msra.mxu0 %v2944
    %2988 = vmatprep.subr.bf16.mxu0 0
    %2989 = vmatpush1.bf16.msra.mxu0 %v2945
    %2990 = vmatprep.subr.bf16.mxu0 0
    %2991 = vmatpush1.bf16.msra.mxu0 %v2946
    %2992 = vmatprep.subr.bf16.mxu0 0
    %2993 = vmatpush1.bf16.msra.mxu0 %v2947
    %2994 = vmatprep.subr.bf16.mxu0 0
    %2995 = vmatpush1.bf16.msra.mxu0 %v2948
    %2996 = vmatprep.subr.bf16.mxu0 0
    %2997 = vmatpush1.bf16.msra.mxu0 %v2949
    %2998 = vmatprep.mubr.bf16.mxu0 %v1477
    %2999 = vmatmul.mubr.bf16.gmra.mrb[0].mxu0 %v1476
    %v3000 = vpop.f32.mrb[0].mxu0
    %v3001 = vadd.f32 0.0, %v3000
    %v3002 = vpop.f32.mrb[0].mxu0
    %v3003 = vpop.f32.mrb[0].mxu0
    %v3004 = vpop.f32.mrb[0].mxu0
    %3005 = vdwg.mxu0
    %v3006 = vadd.f32 %v2836, %v3001
    %s3007 = scalar_lea.vmem [#allocation3], 1152
    %v3008 = vld [vmem:[%s3007] sm:$0xf]
    %v3009 = vld [vmem:[%s3007 + $0x4] sm:$0xf]
    %v3010 = vld [vmem:[%s3007 + $0x8] sm:$0xf]
    %v3011 = vld [vmem:[%s3007 + $0xc] sm:$0xf]
    %v3012 = vld [vmem:[%s3007 + $0x10] sm:$0xf]
    %v3013 = vld [vmem:[%s3007 + $0x14] sm:$0xf]
    %v3014 = vld [vmem:[%s3007 + $0x18] sm:$0xf]
    %v3015 = vld [vmem:[%s3007 + $0x1c] sm:$0xf]
    %v3016 = vld [vmem:[%s3007 + $0x20] sm:$0xf]
    %v3017 = vld [vmem:[%s3007 + $0x24] sm:$0xf]
    %v3018 = vld [vmem:[%s3007 + $0x28] sm:$0xf]
    %v3019 = vld [vmem:[%s3007 + $0x2c] sm:$0xf]
    %v3020 = vld [vmem:[%s3007 + $0x30] sm:$0xf]
    %v3021 = vld [vmem:[%s3007 + $0x34] sm:$0xf]
    %v3022 = vld [vmem:[%s3007 + $0x38] sm:$0xf]
    %v3023 = vld [vmem:[%s3007 + $0x3c] sm:$0xf]
    %v3024 = vld [vmem:[%s3007 + $0x40] sm:$0xf]
    %v3025 = vld [vmem:[%s3007 + $0x44] sm:$0xf]
    %v3026 = vld [vmem:[%s3007 + $0x48] sm:$0xf]
    %v3027 = vld [vmem:[%s3007 + $0x4c] sm:$0xf]
    %v3028 = vld [vmem:[%s3007 + $0x50] sm:$0xf]
    %v3029 = vld [vmem:[%s3007 + $0x54] sm:$0xf]
    %v3030 = vld [vmem:[%s3007 + $0x58] sm:$0xf]
    %v3031 = vld [vmem:[%s3007 + $0x5c] sm:$0xf]
    %v3032 = vld [vmem:[%s3007 + $0x60] sm:$0xf]
    %v3033 = vld [vmem:[%s3007 + $0x64] sm:$0xf]
    %v3034 = vld [vmem:[%s3007 + $0x68] sm:$0xf]
    %v3035 = vld [vmem:[%s3007 + $0x6c] sm:$0xf]
    %v3036 = vld [vmem:[%s3007 + $0x70] sm:$0xf]
    %v3037 = vld [vmem:[%s3007 + $0x74] sm:$0xf]
    %v3038 = vld [vmem:[%s3007 + $0x78] sm:$0xf]
    %v3039 = vld [vmem:[%s3007 + $0x7c] sm:$0xf]
    %v3072 = vunpack.c.l.b16 %v3008
    %v3073 = vunpack.c.l.b16 %v3009
    %v3074 = vunpack.c.l.b16 %v3010
    %v3075 = vunpack.c.l.b16 %v3011
    %v3076 = vunpack.c.l.b16 %v3012
    %v3077 = vunpack.c.l.b16 %v3013
    %v3078 = vunpack.c.l.b16 %v3014
    %v3079 = vunpack.c.l.b16 %v3015
    %v3080 = vunpack.c.l.b16 %v3016
    %v3081 = vunpack.c.l.b16 %v3017
    %v3082 = vunpack.c.l.b16 %v3018
    %v3083 = vunpack.c.l.b16 %v3019
    %v3084 = vunpack.c.l.b16 %v3020
    %v3085 = vunpack.c.l.b16 %v3021
    %v3086 = vunpack.c.l.b16 %v3022
    %v3087 = vunpack.c.l.b16 %v3023
    %v3088 = vunpack.c.l.b16 %v3024
    %v3089 = vunpack.c.l.b16 %v3025
    %v3090 = vunpack.c.l.b16 %v3026
    %v3091 = vunpack.c.l.b16 %v3027
    %v3092 = vunpack.c.l.b16 %v3028
    %v3093 = vunpack.c.l.b16 %v3029
    %v3094 = vunpack.c.l.b16 %v3030
    %v3095 = vunpack.c.l.b16 %v3031
    %v3096 = vunpack.c.l.b16 %v3032
    %v3097 = vunpack.c.l.b16 %v3033
    %v3098 = vunpack.c.l.b16 %v3034
    %v3099 = vunpack.c.l.b16 %v3035
    %v3100 = vunpack.c.l.b16 %v3036
    %v3101 = vunpack.c.l.b16 %v3037
    %v3102 = vunpack.c.l.b16 %v3038
    %v3103 = vunpack.c.l.b16 %v3039
    %v3104 = vpack.c.b16 %v3073, %v3072
    %v3105 = vpack.c.b16 %v3075, %v3074
    %v3106 = vpack.c.b16 %v3077, %v3076
    %v3107 = vpack.c.b16 %v3079, %v3078
    %v3108 = vpack.c.b16 %v3081, %v3080
    %v3109 = vpack.c.b16 %v3083, %v3082
    %v3110 = vpack.c.b16 %v3085, %v3084
    %v3111 = vpack.c.b16 %v3087, %v3086
    %v3112 = vpack.c.b16 %v3089, %v3088
    %v3113 = vpack.c.b16 %v3091, %v3090
    %v3114 = vpack.c.b16 %v3093, %v3092
    %v3115 = vpack.c.b16 %v3095, %v3094
    %v3116 = vpack.c.b16 %v3097, %v3096
    %v3117 = vpack.c.b16 %v3099, %v3098
    %v3118 = vpack.c.b16 %v3101, %v3100
    %v3119 = vpack.c.b16 %v3103, %v3102
    %3136 = vmatprep.subr.bf16.mxu0 0
    %3137 = vmatpush1.bf16.msra.mxu0 %v3104
    %3138 = vmatprep.subr.bf16.mxu0 0
    %3139 = vmatpush1.bf16.msra.mxu0 %v3105
    %3140 = vmatprep.subr.bf16.mxu0 0
    %3141 = vmatpush1.bf16.msra.mxu0 %v3106
    %3142 = vmatprep.subr.bf16.mxu0 0
    %3143 = vmatpush1.bf16.msra.mxu0 %v3107
    %3144 = vmatprep.subr.bf16.mxu0 0
    %3145 = vmatpush1.bf16.msra.mxu0 %v3108
    %3146 = vmatprep.subr.bf16.mxu0 0
    %3147 = vmatpush1.bf16.msra.mxu0 %v3109
    %3148 = vmatprep.subr.bf16.mxu0 0
    %3149 = vmatpush1.bf16.msra.mxu0 %v3110
    %3150 = vmatprep.subr.bf16.mxu0 0
    %3151 = vmatpush1.bf16.msra.mxu0 %v3111
    %3152 = vmatprep.subr.bf16.mxu0 0
    %3153 = vmatpush1.bf16.msra.mxu0 %v3112
    %3154 = vmatprep.subr.bf16.mxu0 0
    %3155 = vmatpush1.bf16.msra.mxu0 %v3113
    %3156 = vmatprep.subr.bf16.mxu0 0
    %3157 = vmatpush1.bf16.msra.mxu0 %v3114
    %3158 = vmatprep.subr.bf16.mxu0 0
    %3159 = vmatpush1.bf16.msra.mxu0 %v3115
    %3160 = vmatprep.subr.bf16.mxu0 0
    %3161 = vmatpush1.bf16.msra.mxu0 %v3116
    %3162 = vmatprep.subr.bf16.mxu0 0
    %3163 = vmatpush1.bf16.msra.mxu0 %v3117
    %3164 = vmatprep.subr.bf16.mxu0 0
    %3165 = vmatpush1.bf16.msra.mxu0 %v3118
    %3166 = vmatprep.subr.bf16.mxu0 0
    %3167 = vmatpush1.bf16.msra.mxu0 %v3119
    %3168 = vmatprep.mubr.bf16.mxu0 %v1479
    %3169 = vmatmul.mubr.bf16.gmra.mrb[0].mxu0 %v1478
    %v3170 = vpop.f32.mrb[0].mxu0
    %v3171 = vadd.f32 0.0, %v3170
    %v3172 = vpop.f32.mrb[0].mxu0
    %v3173 = vpop.f32.mrb[0].mxu0
    %v3174 = vpop.f32.mrb[0].mxu0
    %3175 = vdwg.mxu0
    %v3176 = vadd.f32 %v3006, %v3171
    %v3177 = vld [vmem:[%s6] sm:$0x1]
    %v3179 = vlaneseq
    %v3180 = vshrl.u32 %v3179, 7
    %v3181 = vsub.s32 0, %v3180
    %v3182 = vrot.slane %v3177, %v3181
    %v3184 = vadd.f32 %v3176, %v3182
    %vm3185 = vcmp.gt.f32.partialorder %v3184, 0.0
    %v3186 = vmul.f32 %v3184, 0.01
    %v3187 = vsel %vm3185, %v3184, %v3186
    %v3188 = vld [vmem:[%s7] sm:$0x1]
    %v3190 = vlaneseq
    %v3191 = vshrl.u32 %v3190, 7
    %v3192 = vsub.s32 0, %v3191
    %v3193 = vrot.slane %v3188, %v3192
    %v3195 = vmul.f32 %v3187, %v3193
    %3196 = vadd.xlane.f32.xlu0 %v3195
    %v3197 = vpop.xlane.xlu0 %3196
    %v3198 = vld [vmem:[#allocation2] sm:$0x1]
    %v3200 = vlaneseq
    %v3201 = vshrl.u32 %v3200, 7
    %v3202 = vsub.s32 0, %v3201
    %v3203 = vrot.slane %v3198, %v3202
    %v3205 = vadd.f32 %v3197, %v3203
    %v3206 = vxor.u32 %v3205, 2147483648
    %v3207 = vmul.f32 %v3206, 1.442695
    %v3208 = vpow.pop %v3207
    %v3209 = vadd.f32 %v3208, 1.0
    %v3210 = vrcp.pop %v3209
    %v3211 = vmul.f32 1.0, %v3210
    %vm3212 = vcmask 7168
    %3213 = vst.msk [vmem:[%s9] sm:$0xff] %vm3212, %v3211
    // Predicated region
    $region42: #{tpu_custom_call.1} parent=1 // pred_check
      _
    $region43: #{tpu_custom_call.1} parent=1 // pred_check_branch
      %3215 = sbr.rel (0) target = $region45
    $region44: #{tpu_custom_call.1} parent=1 // pred_region
      _
    $region45: #{tpu_custom_call.1} parent=1 // pred_fallthru
      _
    // Predicated region
    $region46: #{tpu_custom_call.1} parent=1 // pred_check
      _
    $region47: #{tpu_custom_call.1} parent=1 // pred_check_branch
      %3217 = sbr.rel (0) target = $region49
    $region48: #{tpu_custom_call.1} parent=1 // pred_region
      _
    $region49: #{tpu_custom_call.1} parent=1 // pred_fallthru
      _
    %3218 = vsyncpa [#allocation4], 1

</llo_original>
